<compile_context>
chip_gen: v7x
topology: tpu7x:2x2x1
jax: 0.10.0
libtpu: 0.0.40
codegen_flags: <defaults>
</compile_context>

<pallas_src>
import functools
import math

import jax
import jax.numpy as jnp
from jax.experimental import pallas as pl
from jax.experimental.pallas import tpu as pltpu


# --------------------------------------------------------------------------
# In-kernel math helpers (pure jnp; safe to lower under Mosaic)
# --------------------------------------------------------------------------
def _erf_approx(x):
    # Abramowitz & Stegun 7.1.26 rational approximation of erf (~1.5e-7 abs err).
    a1, a2, a3, a4, a5 = 0.254829592, -0.284496736, 1.421413741, -1.453152027, 1.061405429
    p = 0.3275911
    ax = jnp.abs(x)
    t = 1.0 / (1.0 + p * ax)
    poly = ((((a5 * t + a4) * t + a3) * t + a2) * t + a1) * t
    y = 1.0 - poly * jnp.exp(-ax * ax)
    return jnp.where(x >= 0, y, -y)


def _gelu_exact(x):
    # exact (erf) GELU, matching torch.nn.GELU() default
    return 0.5 * x * (1.0 + _erf_approx(x * 0.7071067811865476))


def _layernorm(x, gamma, beta, eps=1e-5):
    mu = jnp.mean(x, axis=-1, keepdims=True)
    xc = x - mu
    var = jnp.mean(xc * xc, axis=-1, keepdims=True)
    return xc * jax.lax.rsqrt(var + eps) * gamma + beta


# --------------------------------------------------------------------------
# Fused, layer-streaming kernel.  grid = (B // B_blk, num_blocks).
#
# Blocks seen by one invocation (R = B_blk * N rows):
#   x_ref   : [R, T]  f32                     (constant over l -> stays resident)
#   we_ref  : [T, D]   be_ref : [1, D]
#   wq/wk/wv: [D, P]   bq/bk/bv: [1, P]       (layer l, streamed)
#   wo_ref  : [P, D]   bo_ref  : [1, D]       (layer l, streamed)
#   g1/bt1, g2/bt2     : [1, D]               (layer l, streamed)
#   w1_ref  : [D, 4D]  bf1_ref : [1, 4D]      (layer l, streamed)
#   w2_ref  : [4D, D]  bf2_ref : [1, D]       (layer l, streamed)
#   gn/bn   : [1, D]
#   wp1_ref : [D, 4D]  bp1_ref : [1, 4D]
#   wp2_ref : [4D, Sp] bp2_ref : [1, Sp]      (Sp = S padded to 128 lanes)
#   out_ref : [R, Sp]
# Scratch (persist across the l axis):
#   mean_s, std_s : [R, 1] f32   h_s : [R, D] f32   ctx_s : [R, P] f32
# --------------------------------------------------------------------------
def itransformer_kernel(
        x_ref,
        we_ref, be_ref,
        wq_ref, bq_ref, wk_ref, bk_ref, wv_ref, bv_ref, wo_ref, bo_ref,
        g1_ref, bt1_ref, w1_ref, bf1_ref, w2_ref, bf2_ref, g2_ref, bt2_ref,
        gn_ref, bn_ref, wp1_ref, bp1_ref, wp2_ref, bp2_ref,
        out_ref,
        mean_s, std_s, h_s, ctx_s,
        *, nb_head, rows_per_batch):
    f32 = jnp.float32
    cdt = we_ref.dtype                       # matmul operand ("compute") dtype
    l = pl.program_id(1)
    num_layers = pl.num_programs(1)

    N = rows_per_batch
    R = h_s.shape[0]
    B_blk = R // N
    P = wq_ref.shape[-1]
    E = P // nb_head
    scale = 1.0 / math.sqrt(E)

    # ---- first layer step: instance norm over time + inverted embedding ---
    @pl.when(l == 0)
    def _embed():
        x = x_ref[...]                                        # [R, T] f32
        mean = jnp.mean(x, axis=-1, keepdims=True)            # [R, 1]
        xc = x - mean
        var = jnp.mean(xc * xc, axis=-1, keepdims=True)       # biased variance
        mean_s[...] = mean
        std_s[...] = jnp.sqrt(var + 1e-5)
        xn = xc * jax.lax.rsqrt(var + 1e-5)                   # multiply, not divide
        h_s[...] = jnp.dot(xn.astype(cdt), we_ref[...],
                           preferred_element_type=f32) + be_ref[...]   # [R, D]

    # ---- one transformer block (this layer's weights streamed in) --------
    h = h_s[...]                                              # [R, D] f32
    hx = h.astype(cdt)

    # full-width QKV projections (well-filled MXU rows / output lanes)
    q = (jnp.dot(hx, wq_ref[...], preferred_element_type=f32) + bq_ref[...]).astype(cdt)
    k = (jnp.dot(hx, wk_ref[...], preferred_element_type=f32) + bk_ref[...]).astype(cdt)
    v = (jnp.dot(hx, wv_ref[...], preferred_element_type=f32) + bv_ref[...]).astype(cdt)

    # attention per batch row / per head; contexts go to ctx_s at static offsets
    for b in range(B_blk):
        r0 = b * N
        qb = q[r0:r0 + N]
        kb = k[r0:r0 + N]
        vb = v[r0:r0 + N]
        for hd in range(nb_head):
            c0 = hd * E
            qh = qb[:, c0:c0 + E]
            kh = kb[:, c0:c0 + E]
            vh = vb[:, c0:c0 + E]
            # scores[i, j] = sum_e q[i, e] * k[j, e]
            s = jax.lax.dot_general(qh, kh, (((1,), (1,)), ((), ())),
                                    preferred_element_type=f32) * scale   # [N, N]
            s = s - jnp.max(s, axis=-1, keepdims=True)
            p = jnp.exp(s)
            a = p * pl.reciprocal(jnp.sum(p, axis=-1, keepdims=True), approx=True)
            ctx_s[r0:r0 + N, c0:c0 + E] = jnp.dot(
                a.astype(cdt), vh, preferred_element_type=f32)            # [N, E]

    # single full-width output projection [R, P] @ [P, D]
    att = jnp.dot(ctx_s[...].astype(cdt), wo_ref[...],
                  preferred_element_type=f32) + bo_ref[...]               # [R, D]

    y = _layernorm(h + att, g1_ref[...], bt1_ref[...])                    # [R, D]

    # FeedForward: Conv1d(D,4D,k=1) -> GELU -> Conv1d(4D,D,k=1)
    ff = jnp.dot(y.astype(cdt), w1_ref[...],
                 preferred_element_type=f32) + bf1_ref[...]               # [R, 4D]
    ff = _gelu_exact(ff)
    ff = jnp.dot(ff.astype(cdt), w2_ref[...],
                 preferred_element_type=f32) + bf2_ref[...]               # [R, D]

    h_new = _layernorm(y + ff, g2_ref[...], bt2_ref[...])
    h_s[...] = h_new

    # ---- last layer step: final LayerNorm + projection head + de-norm ----
    @pl.when(l == num_layers - 1)
    def _project():
        hn = _layernorm(h_new, gn_ref[...], bn_ref[...])
        p1 = jnp.dot(hn.astype(cdt), wp1_ref[...],
                     preferred_element_type=f32) + bp1_ref[...]           # [R, 4D]
        p1 = _gelu_exact(p1)
        yo = jnp.dot(p1.astype(cdt), wp2_ref[...],
                     preferred_element_type=f32) + bp2_ref[...]           # [R, Sp]
        out_ref[...] = yo * std_s[...] + mean_s[...]          # de-norm per variate


# --------------------------------------------------------------------------
# Plain-JAX weight packing: stack per-block weights on a leading L axis and
# zero-pad the prediction head to a lane-aligned width S_pad.
# --------------------------------------------------------------------------
def pack_params(params, s_pad, compute_dtype=jnp.float32):
    wdt = compute_dtype
    blocks = params['blocks']

    def stack(key, dtype):
        return jnp.stack([blk[key] for blk in blocks], axis=0).astype(dtype)

    S = params['wp2'].shape[1]
    wp2 = jnp.pad(params['wp2'], ((0, 0), (0, s_pad - S))).astype(wdt)
    bp2 = jnp.pad(params['bp2'], ((0, 0), (0, s_pad - S)))

    return (
        params['we'].astype(wdt), params['be'],
        stack('wq', wdt), stack('bq', jnp.float32),
        stack('wk', wdt), stack('bk', jnp.float32),
        stack('wv', wdt), stack('bv', jnp.float32),
        stack('wo', wdt), stack('bo', jnp.float32),
        stack('g1', jnp.float32), stack('beta1', jnp.float32),
        stack('w1', wdt), stack('b1', jnp.float32),
        stack('w2', wdt), stack('b2', jnp.float32),
        stack('g2', jnp.float32), stack('beta2', jnp.float32),
        params['gn'], params['bn'],
        params['wp1'].astype(wdt), params['bp1'],
        wp2, bp2,
    )


def _round_up(n, m):
    return ((n + m - 1) // m) * m


def _pick_batch_block(B, N, target_rows=256):
    """Largest divisor of B whose row count B_blk*N stays <= target_rows and is
    either a multiple of 8 (sublane tile) or covers the whole batch."""
    candidates = [bb for bb in range(1, B + 1)
                  if B % bb == 0 and bb * N <= target_rows]
    if not candidates:
        return 1
    aligned = [bb for bb in candidates if (bb * N) % 8 == 0 or bb == B]
    return max(aligned) if aligned else max(candidates)


def _vmem_limit_bytes(T, D, P, s_pad, R, w_itemsize):
    dff = 4 * D
    layer_w = (3 * D * P + P * D + D * dff + dff * D) * w_itemsize \
        + (3 * P + 2 * D + dff + 4 * D) * 4
    const_w = (T * D + D * dff + dff * s_pad) * w_itemsize \
        + (4 * D + dff + s_pad) * 4
    io_blk = R * (T + s_pad) * 4
    scratch = R * (2 + D + P) * 4
    work = 8 * R * max(dff, P, D) * 4
    total = 2 * (layer_w + io_blk + const_w) + scratch + work + (4 << 20)
    # clamp: at least the common default scoped limit, never above v7x physical
    return int(min(max(total, 32 << 20), 64 << 20))


# --------------------------------------------------------------------------
# Full forward: one fused pallas_call, grid over (batch blocks, layers).
#   x: [B, T, N]  ->  [B, S, N]
# --------------------------------------------------------------------------
def itransformer_forward(params, x, nb_head=8, compute_dtype=jnp.float32,
                         batch_block=None):
    B, T, N = x.shape
    D = params['we'].shape[1]
    P = params['blocks'][0]['wq'].shape[1]
    S = params['wp2'].shape[1]
    num_blocks = len(params['blocks'])
    s_pad = _round_up(S, 128)

    if batch_block is None:
        batch_block = _pick_batch_block(B, N)
    assert B % batch_block == 0
    R = batch_block * N                         # rows per grid step

    packed = pack_params(params, s_pad, compute_dtype)
    x_rows = jnp.transpose(x, (0, 2, 1)).reshape(B * N, T)    # [B*N, T]

    kernel = functools.partial(itransformer_kernel,
                               nb_head=nb_head, rows_per_batch=N)

    def const_spec(a):
        return pl.BlockSpec(a.shape, lambda b, l, nd=a.ndim: (0,) * nd)

    def layer_spec(a):
        return pl.BlockSpec((None,) + a.shape[1:],
                            lambda b, l, nd=a.ndim: (l,) + (0,) * (nd - 1))

    # packed layout: [we, be] + 16 layer-stacked arrays + [gn, bn, wp1, bp1, wp2, bp2]
    in_specs = [pl.BlockSpec((R, T), lambda b, l: (b, 0))]
    for idx, a in enumerate(packed):
        if 2 <= idx < 2 + 16:
            in_specs.append(layer_spec(a))
        else:
            in_specs.append(const_spec(a))

    vmem_limit = _vmem_limit_bytes(T, D, P, s_pad, R,
                                   jnp.dtype(compute_dtype).itemsize)

    y_rows = pl.pallas_call(
        kernel,
        out_shape=jax.ShapeDtypeStruct((B * N, s_pad), jnp.float32),
        grid=(B // batch_block, num_blocks),
        in_specs=in_specs,
        out_specs=pl.BlockSpec((R, s_pad), lambda b, l: (b, 0)),
        scratch_shapes=[pltpu.VMEM((R, 1), jnp.float32),    # mean
                        pltpu.VMEM((R, 1), jnp.float32),    # std
                        pltpu.VMEM((R, D), jnp.float32),    # hidden state
                        pltpu.VMEM((R, P), jnp.float32)],   # attention context
        compiler_params=pltpu.CompilerParams(
            dimension_semantics=("parallel", "arbitrary"),
            vmem_limit_bytes=vmem_limit),
    )(x_rows, *packed)

    y = y_rows[:, :S].reshape(B, N, S)                        # drop lane padding
    return jnp.transpose(y, (0, 2, 1))                        # [B, S, N]


# --------------------------------------------------------------------------
# Deterministic parameter init (PyTorch nn.Linear / nn.Conv1d style uniform).
# Weights stored pre-transposed as [in, out]; biases / LN params as [1, out].
# --------------------------------------------------------------------------
def init_params(key, N, T, D, S, proj_dim, num_blocks):
    def linear(k, fin, fout):
        kw, kb = jax.random.split(k)
        bound = 1.0 / math.sqrt(fin)
        w = jax.random.uniform(kw, (fin, fout), jnp.float32, -bound, bound)
        b = jax.random.uniform(kb, (1, fout), jnp.float32, -bound, bound)
        return w, b

    keys = jax.random.split(key, 3 + num_blocks)
    we, be = linear(keys[0], T, D)
    blocks = []
    for i in range(num_blocks):
        bkeys = jax.random.split(keys[1 + i], 6)
        wq, bq = linear(bkeys[0], D, proj_dim)
        wk, bk = linear(bkeys[1], D, proj_dim)
        wv, bv = linear(bkeys[2], D, proj_dim)
        wo, bo = linear(bkeys[3], proj_dim, D)
        w1, b1 = linear(bkeys[4], D, 4 * D)     # Conv1d(D, 4D, k=1)
        w2, b2 = linear(bkeys[5], 4 * D, D)     # Conv1d(4D, D, k=1)
        blocks.append(dict(
            wq=wq, bq=bq, wk=wk, bk=bk, wv=wv, bv=bv, wo=wo, bo=bo,
            g1=jnp.ones((1, D), jnp.float32), beta1=jnp.zeros((1, D), jnp.float32),
            w1=w1, b1=b1, w2=w2, b2=b2,
            g2=jnp.ones((1, D), jnp.float32), beta2=jnp.zeros((1, D), jnp.float32)))
    wp1, bp1 = linear(keys[1 + num_blocks], D, 4 * D)
    wp2, bp2 = linear(keys[2 + num_blocks], 4 * D, S)
    return dict(we=we, be=be, blocks=blocks,
                gn=jnp.ones((1, D), jnp.float32), bn=jnp.zeros((1, D), jnp.float32),
                wp1=wp1, bp1=bp1, wp2=wp2, bp2=bp2)


# --------------------------------------------------------------------------
# Pure-JAX reference (same math as the PyTorch module; dropout = identity).
# --------------------------------------------------------------------------
def reference_forward(params, x, nb_head=8):
    means = jnp.mean(x, axis=1, keepdims=True)                # [B,1,N]
    xc = x - means
    var = jnp.mean(xc * xc, axis=1, keepdims=True)
    std = jnp.sqrt(var + 1e-5)
    xn = xc / std
    h = jnp.einsum('btn,td->bnd', xn, params['we']) + params['be']
    B, Nn, D = h.shape
    for blk in params['blocks']:
        q = h @ blk['wq'] + blk['bq']
        k = h @ blk['wk'] + blk['bk']
        v = h @ blk['wv'] + blk['bv']
        P = q.shape[-1]
        E = P // nb_head
        qh = q.reshape(B, Nn, nb_head, E)
        kh = k.reshape(B, Nn, nb_head, E)
        vh = v.reshape(B, Nn, nb_head, E)
        scale = 1.0 / math.sqrt(E)
        scores = jnp.einsum('blhe,bshe->bhls', qh, kh)
        A = jax.nn.softmax(scale * scores, axis=-1)
        V = jnp.einsum('bhls,bshd->blhd', A, vh).reshape(B, Nn, P)
        att = V @ blk['wo'] + blk['bo']
        y = _layernorm(h + att, blk['g1'], blk['beta1'])
        f = jax.nn.gelu(y @ blk['w1'] + blk['b1'], approximate=False) @ blk['w2'] + blk['b2']
        h = _layernorm(y + f, blk['g2'], blk['beta2'])
    hn = _layernorm(h, params['gn'], params['bn'])
    y = jax.nn.gelu(hn @ params['wp1'] + params['bp1'], approximate=False) @ params['wp2'] + params['bp2']
    y = jnp.transpose(y, (0, 2, 1))                           # [B, S, N]
    return y * std + means


if __name__ == "__main__":
    # TODO(synk): dropout layers are evaluated as identity (inference mode);
    # the get_attention=True branch and non-default typeTrmBlock variants are
    # not implemented.
    B, N, T, D, S, proj_dim, num_blocks, nb_head = 2, 4, 8, 32, 8, 32, 2, 8
    key = jax.random.PRNGKey(0)
    kx, kp, kx2 = jax.random.split(key, 3)
    x = jax.random.normal(kx, (B, T, N), jnp.float32)
    params = init_params(kp, N, T, D, S, proj_dim, num_blocks)

    y_ref = reference_forward(params, x, nb_head=nb_head)

    # f32 matmul-operand path
    y = jax.block_until_ready(itransformer_forward(params, x, nb_head=nb_head))
    assert y.shape == (B, S, N), y.shape
    err = float(jnp.max(jnp.abs(y - y_ref)))
    assert err < 2e-2, f"f32 path max abs err {err}"

    # bf16 matmul-operand path (f32 accumulation) -- looser tolerance
    y_bf16 = jax.block_until_ready(
        itransformer_forward(params, x, nb_head=nb_head, compute_dtype=jnp.bfloat16))
    err_bf16 = float(jnp.max(jnp.abs(y_bf16 - y_ref)))
    assert err_bf16 < 2.5e-1, f"bf16 path max abs err {err_bf16}"

    # multi-step batch grid axis (exercises the per-batch-block writeback path)
    B2 = 4
    x2 = jax.random.normal(kx2, (B2, T, N), jnp.float32)
    y2_ref = reference_forward(params, x2, nb_head=nb_head)
    y2 = jax.block_until_ready(
        itransformer_forward(params, x2, nb_head=nb_head, batch_block=2))
    err2 = float(jnp.max(jnp.abs(y2 - y2_ref)))
    assert y2.shape == (B2, S, N), y2.shape
    assert err2 < 2e-2, f"multi-block f32 path max abs err {err2}"

    print("KERNEL_OK")
</pallas_src>

<mosaic_0001>
module attributes {stable_mosaic.version = 11 : i64} {
  func.func @itransformer_kernel(%arg0: i32, %arg1: i32, %arg2: memref<8x8xf32, #tpu.memory_space<vmem>>, %arg3: memref<8x32xf32, #tpu.memory_space<vmem>>, %arg4: memref<1x32xf32, #tpu.memory_space<vmem>>, %arg5: memref<1x32x32xf32, #tpu.memory_space<vmem>>, %arg6: memref<1x1x32xf32, #tpu.memory_space<vmem>>, %arg7: memref<1x32x32xf32, #tpu.memory_space<vmem>>, %arg8: memref<1x1x32xf32, #tpu.memory_space<vmem>>, %arg9: memref<1x32x32xf32, #tpu.memory_space<vmem>>, %arg10: memref<1x1x32xf32, #tpu.memory_space<vmem>>, %arg11: memref<1x32x32xf32, #tpu.memory_space<vmem>>, %arg12: memref<1x1x32xf32, #tpu.memory_space<vmem>>, %arg13: memref<1x1x32xf32, #tpu.memory_space<vmem>>, %arg14: memref<1x1x32xf32, #tpu.memory_space<vmem>>, %arg15: memref<1x32x128xf32, #tpu.memory_space<vmem>>, %arg16: memref<1x1x128xf32, #tpu.memory_space<vmem>>, %arg17: memref<1x128x32xf32, #tpu.memory_space<vmem>>, %arg18: memref<1x1x32xf32, #tpu.memory_space<vmem>>, %arg19: memref<1x1x32xf32, #tpu.memory_space<vmem>>, %arg20: memref<1x1x32xf32, #tpu.memory_space<vmem>>, %arg21: memref<1x32xf32, #tpu.memory_space<vmem>>, %arg22: memref<1x32xf32, #tpu.memory_space<vmem>>, %arg23: memref<32x128xf32, #tpu.memory_space<vmem>>, %arg24: memref<1x128xf32, #tpu.memory_space<vmem>>, %arg25: memref<128x128xf32, #tpu.memory_space<vmem>>, %arg26: memref<1x128xf32, #tpu.memory_space<vmem>>, %arg27: memref<8x128xf32, #tpu.memory_space<vmem>>, %arg28: memref<8x1xf32, #tpu.memory_space<vmem>>, %arg29: memref<8x1xf32, #tpu.memory_space<vmem>>, %arg30: memref<8x32xf32, #tpu.memory_space<vmem>>, %arg31: memref<8x32xf32, #tpu.memory_space<vmem>>) attributes {dimension_semantics = [#tpu.dimension_semantics<parallel>, #tpu.dimension_semantics<arbitrary>], iteration_bounds = array<i64: 1, 2>, scalar_prefetch = 0 : i64, scratch_operands = 4 : i64, tpu.core_type = #tpu.core_type<tc>, window_params = [{transform_indices = @transform_0, window_bounds = array<i64: 8, 8>}, {pipeline_mode = #tpu.pipeline_mode<synchronous>, transform_indices = @transform_1, window_bounds = array<i64: 8, 32>}, {pipeline_mode = #tpu.pipeline_mode<synchronous>, transform_indices = @transform_2, window_bounds = array<i64: 1, 32>}, {transform_indices = @transform_3, window_bounds = array<i64: 1, 32, 32>}, {transform_indices = @transform_4, window_bounds = array<i64: 1, 1, 32>}, {transform_indices = @transform_5, window_bounds = array<i64: 1, 32, 32>}, {transform_indices = @transform_6, window_bounds = array<i64: 1, 1, 32>}, {transform_indices = @transform_7, window_bounds = array<i64: 1, 32, 32>}, {transform_indices = @transform_8, window_bounds = array<i64: 1, 1, 32>}, {transform_indices = @transform_9, window_bounds = array<i64: 1, 32, 32>}, {transform_indices = @transform_10, window_bounds = array<i64: 1, 1, 32>}, {transform_indices = @transform_11, window_bounds = array<i64: 1, 1, 32>}, {transform_indices = @transform_12, window_bounds = array<i64: 1, 1, 32>}, {transform_indices = @transform_13, window_bounds = array<i64: 1, 32, 128>}, {transform_indices = @transform_14, window_bounds = array<i64: 1, 1, 128>}, {transform_indices = @transform_15, window_bounds = array<i64: 1, 128, 32>}, {transform_indices = @transform_16, window_bounds = array<i64: 1, 1, 32>}, {transform_indices = @transform_17, window_bounds = array<i64: 1, 1, 32>}, {transform_indices = @transform_18, window_bounds = array<i64: 1, 1, 32>}, {pipeline_mode = #tpu.pipeline_mode<synchronous>, transform_indices = @transform_19, window_bounds = array<i64: 1, 32>}, {pipeline_mode = #tpu.pipeline_mode<synchronous>, transform_indices = @transform_20, window_bounds = array<i64: 1, 32>}, {pipeline_mode = #tpu.pipeline_mode<synchronous>, transform_indices = @transform_21, window_bounds = array<i64: 32, 128>}, {pipeline_mode = #tpu.pipeline_mode<synchronous>, transform_indices = @transform_22, window_bounds = array<i64: 1, 128>}, {pipeline_mode = #tpu.pipeline_mode<synchronous>, transform_indices = @transform_23, window_bounds = array<i64: 128, 128>}, {pipeline_mode = #tpu.pipeline_mode<synchronous>, transform_indices = @transform_24, window_bounds = array<i64: 1, 128>}, {transform_indices = @transform_25, window_bounds = array<i64: 8, 128>}]} {
    %c0_i32 = arith.constant 0 : i32
    %0 = arith.cmpi eq, %arg1, %c0_i32 : i32
    %1 = arith.extui %0 : i1 to i32
    %c0_i32_0 = arith.constant 0 : i32
    %2 = arith.cmpi ne, %1, %c0_i32_0 : i32
    scf.if %2 {
      %c0_190 = arith.constant 0 : index
      %c0_191 = arith.constant 0 : index
      %435 = vector.load %arg2[%c0_190, %c0_191] : memref<8x8xf32, #tpu.memory_space<vmem>>, vector<8x8xf32>
      %cst_192 = arith.constant dense<0.000000e+00> : vector<8xf32>
      %436 = vector.multi_reduction <add>, %435, %cst_192 [1] : vector<8x8xf32> to vector<8xf32>
      %437 = vector.shape_cast %436 : vector<8xf32> to vector<8x1xf32>
      %cst_193 = arith.constant 8.000000e+00 : f32
      %438 = vector.broadcast %cst_193 : f32 to vector<8x1xf32>
      %439 = arith.divf %437, %438 : vector<8x1xf32>
      %440 = vector.broadcast %439 : vector<8x1xf32> to vector<8x8xf32>
      %441 = arith.subf %435, %440 : vector<8x8xf32>
      %442 = arith.mulf %441, %441 : vector<8x8xf32>
      %cst_194 = arith.constant dense<0.000000e+00> : vector<8xf32>
      %443 = vector.multi_reduction <add>, %442, %cst_194 [1] : vector<8x8xf32> to vector<8xf32>
      %444 = vector.shape_cast %443 : vector<8xf32> to vector<8x1xf32>
      %cst_195 = arith.constant 8.000000e+00 : f32
      %445 = vector.broadcast %cst_195 : f32 to vector<8x1xf32>
      %446 = arith.divf %444, %445 : vector<8x1xf32>
      %c0_196 = arith.constant 0 : index
      %c0_197 = arith.constant 0 : index
      %447 = vector.load %arg28[%c0_196, %c0_197] : memref<8x1xf32, #tpu.memory_space<vmem>>, vector<8x1xf32>
      tpu.vector_store %arg28[%c0_196, %c0_197], %439 {strides = array<i32>} : memref<8x1xf32, #tpu.memory_space<vmem>>, vector<8x1xf32>,
      %cst_198 = arith.constant 9.99999974E-6 : f32
      %448 = vector.broadcast %cst_198 : f32 to vector<8x1xf32>
      %449 = arith.addf %446, %448 : vector<8x1xf32>
      %450 = math.sqrt %449 : vector<8x1xf32>
      %c0_199 = arith.constant 0 : index
      %c0_200 = arith.constant 0 : index
      %451 = vector.load %arg29[%c0_199, %c0_200] : memref<8x1xf32, #tpu.memory_space<vmem>>, vector<8x1xf32>
      tpu.vector_store %arg29[%c0_199, %c0_200], %450 {strides = array<i32>} : memref<8x1xf32, #tpu.memory_space<vmem>>, vector<8x1xf32>,
      %cst_201 = arith.constant 9.99999974E-6 : f32
      %452 = vector.broadcast %cst_201 : f32 to vector<8x1xf32>
      %453 = arith.addf %446, %452 : vector<8x1xf32>
      %454 = math.rsqrt %453 : vector<8x1xf32>
      %455 = vector.broadcast %454 : vector<8x1xf32> to vector<8x8xf32>
      %456 = arith.mulf %441, %455 : vector<8x8xf32>
      %c0_202 = arith.constant 0 : index
      %c0_203 = arith.constant 0 : index
      %457 = vector.load %arg3[%c0_202, %c0_203] : memref<8x32xf32, #tpu.memory_space<vmem>>, vector<8x32xf32>
      %cst_204 = arith.constant dense<0.000000e+00> : vector<8x32xf32>
      %458 = tpu.matmul %456, %457, %cst_204 {dimension_numbers = #tpu.dot_dimension_numbers<[1], [0], [0], [1], [0, 0, 1, 1], [], []>} : vector<8x8xf32>, vector<8x32xf32>, vector<8x32xf32> -> vector<8x32xf32>
      %c0_205 = arith.constant 0 : index
      %c0_206 = arith.constant 0 : index
      %459 = vector.load %arg4[%c0_205, %c0_206] : memref<1x32xf32, #tpu.memory_space<vmem>>, vector<1x32xf32>
      %460 = vector.broadcast %459 : vector<1x32xf32> to vector<8x32xf32>
      %461 = arith.addf %458, %460 : vector<8x32xf32>
      %c0_207 = arith.constant 0 : index
      %c0_208 = arith.constant 0 : index
      %462 = vector.load %arg30[%c0_207, %c0_208] : memref<8x32xf32, #tpu.memory_space<vmem>>, vector<8x32xf32>
      tpu.vector_store %arg30[%c0_207, %c0_208], %461 {strides = array<i32>} : memref<8x32xf32, #tpu.memory_space<vmem>>, vector<8x32xf32>,
    } else {
    }
    %c0 = arith.constant 0 : index
    %c0_1 = arith.constant 0 : index
    %3 = vector.load %arg30[%c0, %c0_1] : memref<8x32xf32, #tpu.memory_space<vmem>>, vector<8x32xf32>
    %c0_2 = arith.constant 0 : index
    %c0_3 = arith.constant 0 : index
    %c0_4 = arith.constant 0 : index
    %4 = vector.load %arg5[%c0_2, %c0_3, %c0_4] : memref<1x32x32xf32, #tpu.memory_space<vmem>>, vector<1x32x32xf32>
    %5 = vector.shape_cast %4 : vector<1x32x32xf32> to vector<32x32xf32>
    %cst = arith.constant dense<0.000000e+00> : vector<8x32xf32>
    %6 = tpu.matmul %3, %5, %cst {dimension_numbers = #tpu.dot_dimension_numbers<[1], [0], [0], [1], [0, 0, 1, 1], [], []>} : vector<8x32xf32>, vector<32x32xf32>, vector<8x32xf32> -> vector<8x32xf32>
    %c0_5 = arith.constant 0 : index
    %c0_6 = arith.constant 0 : index
    %c0_7 = arith.constant 0 : index
    %7 = vector.load %arg6[%c0_5, %c0_6, %c0_7] : memref<1x1x32xf32, #tpu.memory_space<vmem>>, vector<1x1x32xf32>
    %8 = vector.shape_cast %7 : vector<1x1x32xf32> to vector<1x32xf32>
    %9 = vector.broadcast %8 : vector<1x32xf32> to vector<8x32xf32>
    %10 = arith.addf %6, %9 : vector<8x32xf32>
    %c0_8 = arith.constant 0 : index
    %c0_9 = arith.constant 0 : index
    %c0_10 = arith.constant 0 : index
    %11 = vector.load %arg7[%c0_8, %c0_9, %c0_10] : memref<1x32x32xf32, #tpu.memory_space<vmem>>, vector<1x32x32xf32>
    %12 = vector.shape_cast %11 : vector<1x32x32xf32> to vector<32x32xf32>
    %cst_11 = arith.constant dense<0.000000e+00> : vector<8x32xf32>
    %13 = tpu.matmul %3, %12, %cst_11 {dimension_numbers = #tpu.dot_dimension_numbers<[1], [0], [0], [1], [0, 0, 1, 1], [], []>} : vector<8x32xf32>, vector<32x32xf32>, vector<8x32xf32> -> vector<8x32xf32>
    %c0_12 = arith.constant 0 : index
    %c0_13 = arith.constant 0 : index
    %c0_14 = arith.constant 0 : index
    %14 = vector.load %arg8[%c0_12, %c0_13, %c0_14] : memref<1x1x32xf32, #tpu.memory_space<vmem>>, vector<1x1x32xf32>
    %15 = vector.shape_cast %14 : vector<1x1x32xf32> to vector<1x32xf32>
    %16 = vector.broadcast %15 : vector<1x32xf32> to vector<8x32xf32>
    %17 = arith.addf %13, %16 : vector<8x32xf32>
    %c0_15 = arith.constant 0 : index
    %c0_16 = arith.constant 0 : index
    %c0_17 = arith.constant 0 : index
    %18 = vector.load %arg9[%c0_15, %c0_16, %c0_17] : memref<1x32x32xf32, #tpu.memory_space<vmem>>, vector<1x32x32xf32>
    %19 = vector.shape_cast %18 : vector<1x32x32xf32> to vector<32x32xf32>
    %cst_18 = arith.constant dense<0.000000e+00> : vector<8x32xf32>
    %20 = tpu.matmul %3, %19, %cst_18 {dimension_numbers = #tpu.dot_dimension_numbers<[1], [0], [0], [1], [0, 0, 1, 1], [], []>} : vector<8x32xf32>, vector<32x32xf32>, vector<8x32xf32> -> vector<8x32xf32>
    %c0_19 = arith.constant 0 : index
    %c0_20 = arith.constant 0 : index
    %c0_21 = arith.constant 0 : index
    %21 = vector.load %arg10[%c0_19, %c0_20, %c0_21] : memref<1x1x32xf32, #tpu.memory_space<vmem>>, vector<1x1x32xf32>
    %22 = vector.shape_cast %21 : vector<1x1x32xf32> to vector<1x32xf32>
    %23 = vector.broadcast %22 : vector<1x32xf32> to vector<8x32xf32>
    %24 = arith.addf %20, %23 : vector<8x32xf32>
    %25 = vector.extract_strided_slice %10 {offsets = [0, 0], sizes = [4, 32], strides = [1, 1]} : vector<8x32xf32> to vector<4x32xf32>
    %26 = vector.extract_strided_slice %17 {offsets = [0, 0], sizes = [4, 32], strides = [1, 1]} : vector<8x32xf32> to vector<4x32xf32>
    %27 = vector.extract_strided_slice %24 {offsets = [0, 0], sizes = [4, 32], strides = [1, 1]} : vector<8x32xf32> to vector<4x32xf32>
    %28 = vector.extract_strided_slice %25 {offsets = [0, 0], sizes = [4, 4], strides = [1, 1]} : vector<4x32xf32> to vector<4x4xf32>
    %29 = vector.extract_strided_slice %26 {offsets = [0, 0], sizes = [4, 4], strides = [1, 1]} : vector<4x32xf32> to vector<4x4xf32>
    %30 = vector.extract_strided_slice %27 {offsets = [0, 0], sizes = [4, 4], strides = [1, 1]} : vector<4x32xf32> to vector<4x4xf32>
    %cst_22 = arith.constant dense<0.000000e+00> : vector<4x4xf32>
    %31 = tpu.matmul %28, %29, %cst_22 {dimension_numbers = #tpu.dot_dimension_numbers<[1], [1], [0], [0], [0, 0, 1, 0], [], []>} : vector<4x4xf32>, vector<4x4xf32>, vector<4x4xf32> -> vector<4x4xf32>
    %cst_23 = arith.constant 5.000000e-01 : f32
    %32 = vector.broadcast %cst_23 : f32 to vector<4x4xf32>
    %33 = arith.mulf %31, %32 : vector<4x4xf32>
    %cst_24 = arith.constant dense<0xFF800000> : vector<4xf32>
    %34 = vector.multi_reduction <maximumf>, %33, %cst_24 [1] : vector<4x4xf32> to vector<4xf32>
    %35 = vector.shape_cast %34 : vector<4xf32> to vector<4x1xf32>
    %36 = vector.broadcast %35 : vector<4x1xf32> to vector<4x4xf32>
    %37 = arith.subf %33, %36 : vector<4x4xf32>
    %38 = math.exp %37 : vector<4x4xf32>
    %cst_25 = arith.constant dense<0.000000e+00> : vector<4xf32>
    %39 = vector.multi_reduction <add>, %38, %cst_25 [1] : vector<4x4xf32> to vector<4xf32>
    %40 = vector.shape_cast %39 : vector<4xf32> to vector<4x1xf32>
    %41 = tpu.reciprocal %40 {approx = true} : vector<4x1xf32> -> vector<4x1xf32>
    %42 = vector.broadcast %41 : vector<4x1xf32> to vector<4x4xf32>
    %43 = arith.mulf %38, %42 : vector<4x4xf32>
    %cst_26 = arith.constant dense<0.000000e+00> : vector<4x4xf32>
    %44 = tpu.matmul %43, %30, %cst_26 {dimension_numbers = #tpu.dot_dimension_numbers<[1], [0], [0], [1], [0, 0, 1, 1], [], []>} : vector<4x4xf32>, vector<4x4xf32>, vector<4x4xf32> -> vector<4x4xf32>
    %c0_27 = arith.constant 0 : index
    %c0_28 = arith.constant 0 : index
    %45 = vector.load %arg31[%c0_27, %c0_28] : memref<8x32xf32, #tpu.memory_space<vmem>>, vector<4x4xf32>
    tpu.vector_store %arg31[%c0_27, %c0_28], %44 {strides = array<i32>} : memref<8x32xf32, #tpu.memory_space<vmem>>, vector<4x4xf32>,
    %46 = vector.extract_strided_slice %25 {offsets = [0, 4], sizes = [4, 4], strides = [1, 1]} : vector<4x32xf32> to vector<4x4xf32>
    %47 = vector.extract_strided_slice %26 {offsets = [0, 4], sizes = [4, 4], strides = [1, 1]} : vector<4x32xf32> to vector<4x4xf32>
    %48 = vector.extract_strided_slice %27 {offsets = [0, 4], sizes = [4, 4], strides = [1, 1]} : vector<4x32xf32> to vector<4x4xf32>
    %cst_29 = arith.constant dense<0.000000e+00> : vector<4x4xf32>
    %49 = tpu.matmul %46, %47, %cst_29 {dimension_numbers = #tpu.dot_dimension_numbers<[1], [1], [0], [0], [0, 0, 1, 0], [], []>} : vector<4x4xf32>, vector<4x4xf32>, vector<4x4xf32> -> vector<4x4xf32>
    %cst_30 = arith.constant 5.000000e-01 : f32
    %50 = vector.broadcast %cst_30 : f32 to vector<4x4xf32>
    %51 = arith.mulf %49, %50 : vector<4x4xf32>
    %cst_31 = arith.constant dense<0xFF800000> : vector<4xf32>
    %52 = vector.multi_reduction <maximumf>, %51, %cst_31 [1] : vector<4x4xf32> to vector<4xf32>
    %53 = vector.shape_cast %52 : vector<4xf32> to vector<4x1xf32>
    %54 = vector.broadcast %53 : vector<4x1xf32> to vector<4x4xf32>
    %55 = arith.subf %51, %54 : vector<4x4xf32>
    %56 = math.exp %55 : vector<4x4xf32>
    %cst_32 = arith.constant dense<0.000000e+00> : vector<4xf32>
    %57 = vector.multi_reduction <add>, %56, %cst_32 [1] : vector<4x4xf32> to vector<4xf32>
    %58 = vector.shape_cast %57 : vector<4xf32> to vector<4x1xf32>
    %59 = tpu.reciprocal %58 {approx = true} : vector<4x1xf32> -> vector<4x1xf32>
    %60 = vector.broadcast %59 : vector<4x1xf32> to vector<4x4xf32>
    %61 = arith.mulf %56, %60 : vector<4x4xf32>
    %cst_33 = arith.constant dense<0.000000e+00> : vector<4x4xf32>
    %62 = tpu.matmul %61, %48, %cst_33 {dimension_numbers = #tpu.dot_dimension_numbers<[1], [0], [0], [1], [0, 0, 1, 1], [], []>} : vector<4x4xf32>, vector<4x4xf32>, vector<4x4xf32> -> vector<4x4xf32>
    %c0_34 = arith.constant 0 : index
    %c4 = arith.constant 4 : index
    %63 = vector.load %arg31[%c0_34, %c4] : memref<8x32xf32, #tpu.memory_space<vmem>>, vector<4x4xf32>
    tpu.vector_store %arg31[%c0_34, %c4], %62 {strides = array<i32>} : memref<8x32xf32, #tpu.memory_space<vmem>>, vector<4x4xf32>,
    %64 = vector.extract_strided_slice %25 {offsets = [0, 8], sizes = [4, 4], strides = [1, 1]} : vector<4x32xf32> to vector<4x4xf32>
    %65 = vector.extract_strided_slice %26 {offsets = [0, 8], sizes = [4, 4], strides = [1, 1]} : vector<4x32xf32> to vector<4x4xf32>
    %66 = vector.extract_strided_slice %27 {offsets = [0, 8], sizes = [4, 4], strides = [1, 1]} : vector<4x32xf32> to vector<4x4xf32>
    %cst_35 = arith.constant dense<0.000000e+00> : vector<4x4xf32>
    %67 = tpu.matmul %64, %65, %cst_35 {dimension_numbers = #tpu.dot_dimension_numbers<[1], [1], [0], [0], [0, 0, 1, 0], [], []>} : vector<4x4xf32>, vector<4x4xf32>, vector<4x4xf32> -> vector<4x4xf32>
    %cst_36 = arith.constant 5.000000e-01 : f32
    %68 = vector.broadcast %cst_36 : f32 to vector<4x4xf32>
    %69 = arith.mulf %67, %68 : vector<4x4xf32>
    %cst_37 = arith.constant dense<0xFF800000> : vector<4xf32>
    %70 = vector.multi_reduction <maximumf>, %69, %cst_37 [1] : vector<4x4xf32> to vector<4xf32>
    %71 = vector.shape_cast %70 : vector<4xf32> to vector<4x1xf32>
    %72 = vector.broadcast %71 : vector<4x1xf32> to vector<4x4xf32>
    %73 = arith.subf %69, %72 : vector<4x4xf32>
    %74 = math.exp %73 : vector<4x4xf32>
    %cst_38 = arith.constant dense<0.000000e+00> : vector<4xf32>
    %75 = vector.multi_reduction <add>, %74, %cst_38 [1] : vector<4x4xf32> to vector<4xf32>
    %76 = vector.shape_cast %75 : vector<4xf32> to vector<4x1xf32>
    %77 = tpu.reciprocal %76 {approx = true} : vector<4x1xf32> -> vector<4x1xf32>
    %78 = vector.broadcast %77 : vector<4x1xf32> to vector<4x4xf32>
    %79 = arith.mulf %74, %78 : vector<4x4xf32>
    %cst_39 = arith.constant dense<0.000000e+00> : vector<4x4xf32>
    %80 = tpu.matmul %79, %66, %cst_39 {dimension_numbers = #tpu.dot_dimension_numbers<[1], [0], [0], [1], [0, 0, 1, 1], [], []>} : vector<4x4xf32>, vector<4x4xf32>, vector<4x4xf32> -> vector<4x4xf32>
    %c0_40 = arith.constant 0 : index
    %c8 = arith.constant 8 : index
    %81 = vector.load %arg31[%c0_40, %c8] : memref<8x32xf32, #tpu.memory_space<vmem>>, vector<4x4xf32>
    tpu.vector_store %arg31[%c0_40, %c8], %80 {strides = array<i32>} : memref<8x32xf32, #tpu.memory_space<vmem>>, vector<4x4xf32>,
    %82 = vector.extract_strided_slice %25 {offsets = [0, 12], sizes = [4, 4], strides = [1, 1]} : vector<4x32xf32> to vector<4x4xf32>
    %83 = vector.extract_strided_slice %26 {offsets = [0, 12], sizes = [4, 4], strides = [1, 1]} : vector<4x32xf32> to vector<4x4xf32>
    %84 = vector.extract_strided_slice %27 {offsets = [0, 12], sizes = [4, 4], strides = [1, 1]} : vector<4x32xf32> to vector<4x4xf32>
    %cst_41 = arith.constant dense<0.000000e+00> : vector<4x4xf32>
    %85 = tpu.matmul %82, %83, %cst_41 {dimension_numbers = #tpu.dot_dimension_numbers<[1], [1], [0], [0], [0, 0, 1, 0], [], []>} : vector<4x4xf32>, vector<4x4xf32>, vector<4x4xf32> -> vector<4x4xf32>
    %cst_42 = arith.constant 5.000000e-01 : f32
    %86 = vector.broadcast %cst_42 : f32 to vector<4x4xf32>
    %87 = arith.mulf %85, %86 : vector<4x4xf32>
    %cst_43 = arith.constant dense<0xFF800000> : vector<4xf32>
    %88 = vector.multi_reduction <maximumf>, %87, %cst_43 [1] : vector<4x4xf32> to vector<4xf32>
    %89 = vector.shape_cast %88 : vector<4xf32> to vector<4x1xf32>
    %90 = vector.broadcast %89 : vector<4x1xf32> to vector<4x4xf32>
    %91 = arith.subf %87, %90 : vector<4x4xf32>
    %92 = math.exp %91 : vector<4x4xf32>
    %cst_44 = arith.constant dense<0.000000e+00> : vector<4xf32>
    %93 = vector.multi_reduction <add>, %92, %cst_44 [1] : vector<4x4xf32> to vector<4xf32>
    %94 = vector.shape_cast %93 : vector<4xf32> to vector<4x1xf32>
    %95 = tpu.reciprocal %94 {approx = true} : vector<4x1xf32> -> vector<4x1xf32>
    %96 = vector.broadcast %95 : vector<4x1xf32> to vector<4x4xf32>
    %97 = arith.mulf %92, %96 : vector<4x4xf32>
    %cst_45 = arith.constant dense<0.000000e+00> : vector<4x4xf32>
    %98 = tpu.matmul %97, %84, %cst_45 {dimension_numbers = #tpu.dot_dimension_numbers<[1], [0], [0], [1], [0, 0, 1, 1], [], []>} : vector<4x4xf32>, vector<4x4xf32>, vector<4x4xf32> -> vector<4x4xf32>
    %c0_46 = arith.constant 0 : index
    %c12 = arith.constant 12 : index
    %99 = vector.load %arg31[%c0_46, %c12] : memref<8x32xf32, #tpu.memory_space<vmem>>, vector<4x4xf32>
    tpu.vector_store %arg31[%c0_46, %c12], %98 {strides = array<i32>} : memref<8x32xf32, #tpu.memory_space<vmem>>, vector<4x4xf32>,
    %100 = vector.extract_strided_slice %25 {offsets = [0, 16], sizes = [4, 4], strides = [1, 1]} : vector<4x32xf32> to vector<4x4xf32>
    %101 = vector.extract_strided_slice %26 {offsets = [0, 16], sizes = [4, 4], strides = [1, 1]} : vector<4x32xf32> to vector<4x4xf32>
    %102 = vector.extract_strided_slice %27 {offsets = [0, 16], sizes = [4, 4], strides = [1, 1]} : vector<4x32xf32> to vector<4x4xf32>
    %cst_47 = arith.constant dense<0.000000e+00> : vector<4x4xf32>
    %103 = tpu.matmul %100, %101, %cst_47 {dimension_numbers = #tpu.dot_dimension_numbers<[1], [1], [0], [0], [0, 0, 1, 0], [], []>} : vector<4x4xf32>, vector<4x4xf32>, vector<4x4xf32> -> vector<4x4xf32>
    %cst_48 = arith.constant 5.000000e-01 : f32
    %104 = vector.broadcast %cst_48 : f32 to vector<4x4xf32>
    %105 = arith.mulf %103, %104 : vector<4x4xf32>
    %cst_49 = arith.constant dense<0xFF800000> : vector<4xf32>
    %106 = vector.multi_reduction <maximumf>, %105, %cst_49 [1] : vector<4x4xf32> to vector<4xf32>
    %107 = vector.shape_cast %106 : vector<4xf32> to vector<4x1xf32>
    %108 = vector.broadcast %107 : vector<4x1xf32> to vector<4x4xf32>
    %109 = arith.subf %105, %108 : vector<4x4xf32>
    %110 = math.exp %109 : vector<4x4xf32>
    %cst_50 = arith.constant dense<0.000000e+00> : vector<4xf32>
    %111 = vector.multi_reduction <add>, %110, %cst_50 [1] : vector<4x4xf32> to vector<4xf32>
    %112 = vector.shape_cast %111 : vector<4xf32> to vector<4x1xf32>
    %113 = tpu.reciprocal %112 {approx = true} : vector<4x1xf32> -> vector<4x1xf32>
    %114 = vector.broadcast %113 : vector<4x1xf32> to vector<4x4xf32>
    %115 = arith.mulf %110, %114 : vector<4x4xf32>
    %cst_51 = arith.constant dense<0.000000e+00> : vector<4x4xf32>
    %116 = tpu.matmul %115, %102, %cst_51 {dimension_numbers = #tpu.dot_dimension_numbers<[1], [0], [0], [1], [0, 0, 1, 1], [], []>} : vector<4x4xf32>, vector<4x4xf32>, vector<4x4xf32> -> vector<4x4xf32>
    %c0_52 = arith.constant 0 : index
    %c16 = arith.constant 16 : index
    %117 = vector.load %arg31[%c0_52, %c16] : memref<8x32xf32, #tpu.memory_space<vmem>>, vector<4x4xf32>
    tpu.vector_store %arg31[%c0_52, %c16], %116 {strides = array<i32>} : memref<8x32xf32, #tpu.memory_space<vmem>>, vector<4x4xf32>,
    %118 = vector.extract_strided_slice %25 {offsets = [0, 20], sizes = [4, 4], strides = [1, 1]} : vector<4x32xf32> to vector<4x4xf32>
    %119 = vector.extract_strided_slice %26 {offsets = [0, 20], sizes = [4, 4], strides = [1, 1]} : vector<4x32xf32> to vector<4x4xf32>
    %120 = vector.extract_strided_slice %27 {offsets = [0, 20], sizes = [4, 4], strides = [1, 1]} : vector<4x32xf32> to vector<4x4xf32>
    %cst_53 = arith.constant dense<0.000000e+00> : vector<4x4xf32>
    %121 = tpu.matmul %118, %119, %cst_53 {dimension_numbers = #tpu.dot_dimension_numbers<[1], [1], [0], [0], [0, 0, 1, 0], [], []>} : vector<4x4xf32>, vector<4x4xf32>, vector<4x4xf32> -> vector<4x4xf32>
    %cst_54 = arith.constant 5.000000e-01 : f32
    %122 = vector.broadcast %cst_54 : f32 to vector<4x4xf32>
    %123 = arith.mulf %121, %122 : vector<4x4xf32>
    %cst_55 = arith.constant dense<0xFF800000> : vector<4xf32>
    %124 = vector.multi_reduction <maximumf>, %123, %cst_55 [1] : vector<4x4xf32> to vector<4xf32>
    %125 = vector.shape_cast %124 : vector<4xf32> to vector<4x1xf32>
    %126 = vector.broadcast %125 : vector<4x1xf32> to vector<4x4xf32>
    %127 = arith.subf %123, %126 : vector<4x4xf32>
    %128 = math.exp %127 : vector<4x4xf32>
    %cst_56 = arith.constant dense<0.000000e+00> : vector<4xf32>
    %129 = vector.multi_reduction <add>, %128, %cst_56 [1] : vector<4x4xf32> to vector<4xf32>
    %130 = vector.shape_cast %129 : vector<4xf32> to vector<4x1xf32>
    %131 = tpu.reciprocal %130 {approx = true} : vector<4x1xf32> -> vector<4x1xf32>
    %132 = vector.broadcast %131 : vector<4x1xf32> to vector<4x4xf32>
    %133 = arith.mulf %128, %132 : vector<4x4xf32>
    %cst_57 = arith.constant dense<0.000000e+00> : vector<4x4xf32>
    %134 = tpu.matmul %133, %120, %cst_57 {dimension_numbers = #tpu.dot_dimension_numbers<[1], [0], [0], [1], [0, 0, 1, 1], [], []>} : vector<4x4xf32>, vector<4x4xf32>, vector<4x4xf32> -> vector<4x4xf32>
    %c0_58 = arith.constant 0 : index
    %c20 = arith.constant 20 : index
    %135 = vector.load %arg31[%c0_58, %c20] : memref<8x32xf32, #tpu.memory_space<vmem>>, vector<4x4xf32>
    tpu.vector_store %arg31[%c0_58, %c20], %134 {strides = array<i32>} : memref<8x32xf32, #tpu.memory_space<vmem>>, vector<4x4xf32>,
    %136 = vector.extract_strided_slice %25 {offsets = [0, 24], sizes = [4, 4], strides = [1, 1]} : vector<4x32xf32> to vector<4x4xf32>
    %137 = vector.extract_strided_slice %26 {offsets = [0, 24], sizes = [4, 4], strides = [1, 1]} : vector<4x32xf32> to vector<4x4xf32>
    %138 = vector.extract_strided_slice %27 {offsets = [0, 24], sizes = [4, 4], strides = [1, 1]} : vector<4x32xf32> to vector<4x4xf32>
    %cst_59 = arith.constant dense<0.000000e+00> : vector<4x4xf32>
    %139 = tpu.matmul %136, %137, %cst_59 {dimension_numbers = #tpu.dot_dimension_numbers<[1], [1], [0], [0], [0, 0, 1, 0], [], []>} : vector<4x4xf32>, vector<4x4xf32>, vector<4x4xf32> -> vector<4x4xf32>
    %cst_60 = arith.constant 5.000000e-01 : f32
    %140 = vector.broadcast %cst_60 : f32 to vector<4x4xf32>
    %141 = arith.mulf %139, %140 : vector<4x4xf32>
    %cst_61 = arith.constant dense<0xFF800000> : vector<4xf32>
    %142 = vector.multi_reduction <maximumf>, %141, %cst_61 [1] : vector<4x4xf32> to vector<4xf32>
    %143 = vector.shape_cast %142 : vector<4xf32> to vector<4x1xf32>
    %144 = vector.broadcast %143 : vector<4x1xf32> to vector<4x4xf32>
    %145 = arith.subf %141, %144 : vector<4x4xf32>
    %146 = math.exp %145 : vector<4x4xf32>
    %cst_62 = arith.constant dense<0.000000e+00> : vector<4xf32>
    %147 = vector.multi_reduction <add>, %146, %cst_62 [1] : vector<4x4xf32> to vector<4xf32>
    %148 = vector.shape_cast %147 : vector<4xf32> to vector<4x1xf32>
    %149 = tpu.reciprocal %148 {approx = true} : vector<4x1xf32> -> vector<4x1xf32>
    %150 = vector.broadcast %149 : vector<4x1xf32> to vector<4x4xf32>
    %151 = arith.mulf %146, %150 : vector<4x4xf32>
    %cst_63 = arith.constant dense<0.000000e+00> : vector<4x4xf32>
    %152 = tpu.matmul %151, %138, %cst_63 {dimension_numbers = #tpu.dot_dimension_numbers<[1], [0], [0], [1], [0, 0, 1, 1], [], []>} : vector<4x4xf32>, vector<4x4xf32>, vector<4x4xf32> -> vector<4x4xf32>
    %c0_64 = arith.constant 0 : index
    %c24 = arith.constant 24 : index
    %153 = vector.load %arg31[%c0_64, %c24] : memref<8x32xf32, #tpu.memory_space<vmem>>, vector<4x4xf32>
    tpu.vector_store %arg31[%c0_64, %c24], %152 {strides = array<i32>} : memref<8x32xf32, #tpu.memory_space<vmem>>, vector<4x4xf32>,
    %154 = vector.extract_strided_slice %25 {offsets = [0, 28], sizes = [4, 4], strides = [1, 1]} : vector<4x32xf32> to vector<4x4xf32>
    %155 = vector.extract_strided_slice %26 {offsets = [0, 28], sizes = [4, 4], strides = [1, 1]} : vector<4x32xf32> to vector<4x4xf32>
    %156 = vector.extract_strided_slice %27 {offsets = [0, 28], sizes = [4, 4], strides = [1, 1]} : vector<4x32xf32> to vector<4x4xf32>
    %cst_65 = arith.constant dense<0.000000e+00> : vector<4x4xf32>
    %157 = tpu.matmul %154, %155, %cst_65 {dimension_numbers = #tpu.dot_dimension_numbers<[1], [1], [0], [0], [0, 0, 1, 0], [], []>} : vector<4x4xf32>, vector<4x4xf32>, vector<4x4xf32> -> vector<4x4xf32>
    %cst_66 = arith.constant 5.000000e-01 : f32
    %158 = vector.broadcast %cst_66 : f32 to vector<4x4xf32>
    %159 = arith.mulf %157, %158 : vector<4x4xf32>
    %cst_67 = arith.constant dense<0xFF800000> : vector<4xf32>
    %160 = vector.multi_reduction <maximumf>, %159, %cst_67 [1] : vector<4x4xf32> to vector<4xf32>
    %161 = vector.shape_cast %160 : vector<4xf32> to vector<4x1xf32>
    %162 = vector.broadcast %161 : vector<4x1xf32> to vector<4x4xf32>
    %163 = arith.subf %159, %162 : vector<4x4xf32>
    %164 = math.exp %163 : vector<4x4xf32>
    %cst_68 = arith.constant dense<0.000000e+00> : vector<4xf32>
    %165 = vector.multi_reduction <add>, %164, %cst_68 [1] : vector<4x4xf32> to vector<4xf32>
    %166 = vector.shape_cast %165 : vector<4xf32> to vector<4x1xf32>
    %167 = tpu.reciprocal %166 {approx = true} : vector<4x1xf32> -> vector<4x1xf32>
    %168 = vector.broadcast %167 : vector<4x1xf32> to vector<4x4xf32>
    %169 = arith.mulf %164, %168 : vector<4x4xf32>
    %cst_69 = arith.constant dense<0.000000e+00> : vector<4x4xf32>
    %170 = tpu.matmul %169, %156, %cst_69 {dimension_numbers = #tpu.dot_dimension_numbers<[1], [0], [0], [1], [0, 0, 1, 1], [], []>} : vector<4x4xf32>, vector<4x4xf32>, vector<4x4xf32> -> vector<4x4xf32>
    %c0_70 = arith.constant 0 : index
    %c28 = arith.constant 28 : index
    %171 = vector.load %arg31[%c0_70, %c28] : memref<8x32xf32, #tpu.memory_space<vmem>>, vector<4x4xf32>
    tpu.vector_store %arg31[%c0_70, %c28], %170 {strides = array<i32>} : memref<8x32xf32, #tpu.memory_space<vmem>>, vector<4x4xf32>,
    %172 = vector.extract_strided_slice %10 {offsets = [4, 0], sizes = [4, 32], strides = [1, 1]} : vector<8x32xf32> to vector<4x32xf32>
    %173 = vector.extract_strided_slice %17 {offsets = [4, 0], sizes = [4, 32], strides = [1, 1]} : vector<8x32xf32> to vector<4x32xf32>
    %174 = vector.extract_strided_slice %24 {offsets = [4, 0], sizes = [4, 32], strides = [1, 1]} : vector<8x32xf32> to vector<4x32xf32>
    %175 = vector.extract_strided_slice %172 {offsets = [0, 0], sizes = [4, 4], strides = [1, 1]} : vector<4x32xf32> to vector<4x4xf32>
    %176 = vector.extract_strided_slice %173 {offsets = [0, 0], sizes = [4, 4], strides = [1, 1]} : vector<4x32xf32> to vector<4x4xf32>
    %177 = vector.extract_strided_slice %174 {offsets = [0, 0], sizes = [4, 4], strides = [1, 1]} : vector<4x32xf32> to vector<4x4xf32>
    %cst_71 = arith.constant dense<0.000000e+00> : vector<4x4xf32>
    %178 = tpu.matmul %175, %176, %cst_71 {dimension_numbers = #tpu.dot_dimension_numbers<[1], [1], [0], [0], [0, 0, 1, 0], [], []>} : vector<4x4xf32>, vector<4x4xf32>, vector<4x4xf32> -> vector<4x4xf32>
    %cst_72 = arith.constant 5.000000e-01 : f32
    %179 = vector.broadcast %cst_72 : f32 to vector<4x4xf32>
    %180 = arith.mulf %178, %179 : vector<4x4xf32>
    %cst_73 = arith.constant dense<0xFF800000> : vector<4xf32>
    %181 = vector.multi_reduction <maximumf>, %180, %cst_73 [1] : vector<4x4xf32> to vector<4xf32>
    %182 = vector.shape_cast %181 : vector<4xf32> to vector<4x1xf32>
    %183 = vector.broadcast %182 : vector<4x1xf32> to vector<4x4xf32>
    %184 = arith.subf %180, %183 : vector<4x4xf32>
    %185 = math.exp %184 : vector<4x4xf32>
    %cst_74 = arith.constant dense<0.000000e+00> : vector<4xf32>
    %186 = vector.multi_reduction <add>, %185, %cst_74 [1] : vector<4x4xf32> to vector<4xf32>
    %187 = vector.shape_cast %186 : vector<4xf32> to vector<4x1xf32>
    %188 = tpu.reciprocal %187 {approx = true} : vector<4x1xf32> -> vector<4x1xf32>
    %189 = vector.broadcast %188 : vector<4x1xf32> to vector<4x4xf32>
    %190 = arith.mulf %185, %189 : vector<4x4xf32>
    %cst_75 = arith.constant dense<0.000000e+00> : vector<4x4xf32>
    %191 = tpu.matmul %190, %177, %cst_75 {dimension_numbers = #tpu.dot_dimension_numbers<[1], [0], [0], [1], [0, 0, 1, 1], [], []>} : vector<4x4xf32>, vector<4x4xf32>, vector<4x4xf32> -> vector<4x4xf32>
    %c4_76 = arith.constant 4 : index
    %c0_77 = arith.constant 0 : index
    %192 = vector.load %arg31[%c4_76, %c0_77] : memref<8x32xf32, #tpu.memory_space<vmem>>, vector<4x4xf32>
    tpu.vector_store %arg31[%c4_76, %c0_77], %191 {strides = array<i32>} : memref<8x32xf32, #tpu.memory_space<vmem>>, vector<4x4xf32>,
    %193 = vector.extract_strided_slice %172 {offsets = [0, 4], sizes = [4, 4], strides = [1, 1]} : vector<4x32xf32> to vector<4x4xf32>
    %194 = vector.extract_strided_slice %173 {offsets = [0, 4], sizes = [4, 4], strides = [1, 1]} : vector<4x32xf32> to vector<4x4xf32>
    %195 = vector.extract_strided_slice %174 {offsets = [0, 4], sizes = [4, 4], strides = [1, 1]} : vector<4x32xf32> to vector<4x4xf32>
    %cst_78 = arith.constant dense<0.000000e+00> : vector<4x4xf32>
    %196 = tpu.matmul %193, %194, %cst_78 {dimension_numbers = #tpu.dot_dimension_numbers<[1], [1], [0], [0], [0, 0, 1, 0], [], []>} : vector<4x4xf32>, vector<4x4xf32>, vector<4x4xf32> -> vector<4x4xf32>
    %cst_79 = arith.constant 5.000000e-01 : f32
    %197 = vector.broadcast %cst_79 : f32 to vector<4x4xf32>
    %198 = arith.mulf %196, %197 : vector<4x4xf32>
    %cst_80 = arith.constant dense<0xFF800000> : vector<4xf32>
    %199 = vector.multi_reduction <maximumf>, %198, %cst_80 [1] : vector<4x4xf32> to vector<4xf32>
    %200 = vector.shape_cast %199 : vector<4xf32> to vector<4x1xf32>
    %201 = vector.broadcast %200 : vector<4x1xf32> to vector<4x4xf32>
    %202 = arith.subf %198, %201 : vector<4x4xf32>
    %203 = math.exp %202 : vector<4x4xf32>
    %cst_81 = arith.constant dense<0.000000e+00> : vector<4xf32>
    %204 = vector.multi_reduction <add>, %203, %cst_81 [1] : vector<4x4xf32> to vector<4xf32>
    %205 = vector.shape_cast %204 : vector<4xf32> to vector<4x1xf32>
    %206 = tpu.reciprocal %205 {approx = true} : vector<4x1xf32> -> vector<4x1xf32>
    %207 = vector.broadcast %206 : vector<4x1xf32> to vector<4x4xf32>
    %208 = arith.mulf %203, %207 : vector<4x4xf32>
    %cst_82 = arith.constant dense<0.000000e+00> : vector<4x4xf32>
    %209 = tpu.matmul %208, %195, %cst_82 {dimension_numbers = #tpu.dot_dimension_numbers<[1], [0], [0], [1], [0, 0, 1, 1], [], []>} : vector<4x4xf32>, vector<4x4xf32>, vector<4x4xf32> -> vector<4x4xf32>
    %c4_83 = arith.constant 4 : index
    %c4_84 = arith.constant 4 : index
    %210 = vector.load %arg31[%c4_83, %c4_84] : memref<8x32xf32, #tpu.memory_space<vmem>>, vector<4x4xf32>
    tpu.vector_store %arg31[%c4_83, %c4_84], %209 {strides = array<i32>} : memref<8x32xf32, #tpu.memory_space<vmem>>, vector<4x4xf32>,
    %211 = vector.extract_strided_slice %172 {offsets = [0, 8], sizes = [4, 4], strides = [1, 1]} : vector<4x32xf32> to vector<4x4xf32>
    %212 = vector.extract_strided_slice %173 {offsets = [0, 8], sizes = [4, 4], strides = [1, 1]} : vector<4x32xf32> to vector<4x4xf32>
    %213 = vector.extract_strided_slice %174 {offsets = [0, 8], sizes = [4, 4], strides = [1, 1]} : vector<4x32xf32> to vector<4x4xf32>
    %cst_85 = arith.constant dense<0.000000e+00> : vector<4x4xf32>
    %214 = tpu.matmul %211, %212, %cst_85 {dimension_numbers = #tpu.dot_dimension_numbers<[1], [1], [0], [0], [0, 0, 1, 0], [], []>} : vector<4x4xf32>, vector<4x4xf32>, vector<4x4xf32> -> vector<4x4xf32>
    %cst_86 = arith.constant 5.000000e-01 : f32
    %215 = vector.broadcast %cst_86 : f32 to vector<4x4xf32>
    %216 = arith.mulf %214, %215 : vector<4x4xf32>
    %cst_87 = arith.constant dense<0xFF800000> : vector<4xf32>
    %217 = vector.multi_reduction <maximumf>, %216, %cst_87 [1] : vector<4x4xf32> to vector<4xf32>
    %218 = vector.shape_cast %217 : vector<4xf32> to vector<4x1xf32>
    %219 = vector.broadcast %218 : vector<4x1xf32> to vector<4x4xf32>
    %220 = arith.subf %216, %219 : vector<4x4xf32>
    %221 = math.exp %220 : vector<4x4xf32>
    %cst_88 = arith.constant dense<0.000000e+00> : vector<4xf32>
    %222 = vector.multi_reduction <add>, %221, %cst_88 [1] : vector<4x4xf32> to vector<4xf32>
    %223 = vector.shape_cast %222 : vector<4xf32> to vector<4x1xf32>
    %224 = tpu.reciprocal %223 {approx = true} : vector<4x1xf32> -> vector<4x1xf32>
    %225 = vector.broadcast %224 : vector<4x1xf32> to vector<4x4xf32>
    %226 = arith.mulf %221, %225 : vector<4x4xf32>
    %cst_89 = arith.constant dense<0.000000e+00> : vector<4x4xf32>
    %227 = tpu.matmul %226, %213, %cst_89 {dimension_numbers = #tpu.dot_dimension_numbers<[1], [0], [0], [1], [0, 0, 1, 1], [], []>} : vector<4x4xf32>, vector<4x4xf32>, vector<4x4xf32> -> vector<4x4xf32>
    %c4_90 = arith.constant 4 : index
    %c8_91 = arith.constant 8 : index
    %228 = vector.load %arg31[%c4_90, %c8_91] : memref<8x32xf32, #tpu.memory_space<vmem>>, vector<4x4xf32>
    tpu.vector_store %arg31[%c4_90, %c8_91], %227 {strides = array<i32>} : memref<8x32xf32, #tpu.memory_space<vmem>>, vector<4x4xf32>,
    %229 = vector.extract_strided_slice %172 {offsets = [0, 12], sizes = [4, 4], strides = [1, 1]} : vector<4x32xf32> to vector<4x4xf32>
    %230 = vector.extract_strided_slice %173 {offsets = [0, 12], sizes = [4, 4], strides = [1, 1]} : vector<4x32xf32> to vector<4x4xf32>
    %231 = vector.extract_strided_slice %174 {offsets = [0, 12], sizes = [4, 4], strides = [1, 1]} : vector<4x32xf32> to vector<4x4xf32>
    %cst_92 = arith.constant dense<0.000000e+00> : vector<4x4xf32>
    %232 = tpu.matmul %229, %230, %cst_92 {dimension_numbers = #tpu.dot_dimension_numbers<[1], [1], [0], [0], [0, 0, 1, 0], [], []>} : vector<4x4xf32>, vector<4x4xf32>, vector<4x4xf32> -> vector<4x4xf32>
    %cst_93 = arith.constant 5.000000e-01 : f32
    %233 = vector.broadcast %cst_93 : f32 to vector<4x4xf32>
    %234 = arith.mulf %232, %233 : vector<4x4xf32>
    %cst_94 = arith.constant dense<0xFF800000> : vector<4xf32>
    %235 = vector.multi_reduction <maximumf>, %234, %cst_94 [1] : vector<4x4xf32> to vector<4xf32>
    %236 = vector.shape_cast %235 : vector<4xf32> to vector<4x1xf32>
    %237 = vector.broadcast %236 : vector<4x1xf32> to vector<4x4xf32>
    %238 = arith.subf %234, %237 : vector<4x4xf32>
    %239 = math.exp %238 : vector<4x4xf32>
    %cst_95 = arith.constant dense<0.000000e+00> : vector<4xf32>
    %240 = vector.multi_reduction <add>, %239, %cst_95 [1] : vector<4x4xf32> to vector<4xf32>
    %241 = vector.shape_cast %240 : vector<4xf32> to vector<4x1xf32>
    %242 = tpu.reciprocal %241 {approx = true} : vector<4x1xf32> -> vector<4x1xf32>
    %243 = vector.broadcast %242 : vector<4x1xf32> to vector<4x4xf32>
    %244 = arith.mulf %239, %243 : vector<4x4xf32>
    %cst_96 = arith.constant dense<0.000000e+00> : vector<4x4xf32>
    %245 = tpu.matmul %244, %231, %cst_96 {dimension_numbers = #tpu.dot_dimension_numbers<[1], [0], [0], [1], [0, 0, 1, 1], [], []>} : vector<4x4xf32>, vector<4x4xf32>, vector<4x4xf32> -> vector<4x4xf32>
    %c4_97 = arith.constant 4 : index
    %c12_98 = arith.constant 12 : index
    %246 = vector.load %arg31[%c4_97, %c12_98] : memref<8x32xf32, #tpu.memory_space<vmem>>, vector<4x4xf32>
    tpu.vector_store %arg31[%c4_97, %c12_98], %245 {strides = array<i32>} : memref<8x32xf32, #tpu.memory_space<vmem>>, vector<4x4xf32>,
    %247 = vector.extract_strided_slice %172 {offsets = [0, 16], sizes = [4, 4], strides = [1, 1]} : vector<4x32xf32> to vector<4x4xf32>
    %248 = vector.extract_strided_slice %173 {offsets = [0, 16], sizes = [4, 4], strides = [1, 1]} : vector<4x32xf32> to vector<4x4xf32>
    %249 = vector.extract_strided_slice %174 {offsets = [0, 16], sizes = [4, 4], strides = [1, 1]} : vector<4x32xf32> to vector<4x4xf32>
    %cst_99 = arith.constant dense<0.000000e+00> : vector<4x4xf32>
    %250 = tpu.matmul %247, %248, %cst_99 {dimension_numbers = #tpu.dot_dimension_numbers<[1], [1], [0], [0], [0, 0, 1, 0], [], []>} : vector<4x4xf32>, vector<4x4xf32>, vector<4x4xf32> -> vector<4x4xf32>
    %cst_100 = arith.constant 5.000000e-01 : f32
    %251 = vector.broadcast %cst_100 : f32 to vector<4x4xf32>
    %252 = arith.mulf %250, %251 : vector<4x4xf32>
    %cst_101 = arith.constant dense<0xFF800000> : vector<4xf32>
    %253 = vector.multi_reduction <maximumf>, %252, %cst_101 [1] : vector<4x4xf32> to vector<4xf32>
    %254 = vector.shape_cast %253 : vector<4xf32> to vector<4x1xf32>
    %255 = vector.broadcast %254 : vector<4x1xf32> to vector<4x4xf32>
    %256 = arith.subf %252, %255 : vector<4x4xf32>
    %257 = math.exp %256 : vector<4x4xf32>
    %cst_102 = arith.constant dense<0.000000e+00> : vector<4xf32>
    %258 = vector.multi_reduction <add>, %257, %cst_102 [1] : vector<4x4xf32> to vector<4xf32>
    %259 = vector.shape_cast %258 : vector<4xf32> to vector<4x1xf32>
    %260 = tpu.reciprocal %259 {approx = true} : vector<4x1xf32> -> vector<4x1xf32>
    %261 = vector.broadcast %260 : vector<4x1xf32> to vector<4x4xf32>
    %262 = arith.mulf %257, %261 : vector<4x4xf32>
    %cst_103 = arith.constant dense<0.000000e+00> : vector<4x4xf32>
    %263 = tpu.matmul %262, %249, %cst_103 {dimension_numbers = #tpu.dot_dimension_numbers<[1], [0], [0], [1], [0, 0, 1, 1], [], []>} : vector<4x4xf32>, vector<4x4xf32>, vector<4x4xf32> -> vector<4x4xf32>
    %c4_104 = arith.constant 4 : index
    %c16_105 = arith.constant 16 : index
    %264 = vector.load %arg31[%c4_104, %c16_105] : memref<8x32xf32, #tpu.memory_space<vmem>>, vector<4x4xf32>
    tpu.vector_store %arg31[%c4_104, %c16_105], %263 {strides = array<i32>} : memref<8x32xf32, #tpu.memory_space<vmem>>, vector<4x4xf32>,
    %265 = vector.extract_strided_slice %172 {offsets = [0, 20], sizes = [4, 4], strides = [1, 1]} : vector<4x32xf32> to vector<4x4xf32>
    %266 = vector.extract_strided_slice %173 {offsets = [0, 20], sizes = [4, 4], strides = [1, 1]} : vector<4x32xf32> to vector<4x4xf32>
    %267 = vector.extract_strided_slice %174 {offsets = [0, 20], sizes = [4, 4], strides = [1, 1]} : vector<4x32xf32> to vector<4x4xf32>
    %cst_106 = arith.constant dense<0.000000e+00> : vector<4x4xf32>
    %268 = tpu.matmul %265, %266, %cst_106 {dimension_numbers = #tpu.dot_dimension_numbers<[1], [1], [0], [0], [0, 0, 1, 0], [], []>} : vector<4x4xf32>, vector<4x4xf32>, vector<4x4xf32> -> vector<4x4xf32>
    %cst_107 = arith.constant 5.000000e-01 : f32
    %269 = vector.broadcast %cst_107 : f32 to vector<4x4xf32>
    %270 = arith.mulf %268, %269 : vector<4x4xf32>
    %cst_108 = arith.constant dense<0xFF800000> : vector<4xf32>
    %271 = vector.multi_reduction <maximumf>, %270, %cst_108 [1] : vector<4x4xf32> to vector<4xf32>
    %272 = vector.shape_cast %271 : vector<4xf32> to vector<4x1xf32>
    %273 = vector.broadcast %272 : vector<4x1xf32> to vector<4x4xf32>
    %274 = arith.subf %270, %273 : vector<4x4xf32>
    %275 = math.exp %274 : vector<4x4xf32>
    %cst_109 = arith.constant dense<0.000000e+00> : vector<4xf32>
    %276 = vector.multi_reduction <add>, %275, %cst_109 [1] : vector<4x4xf32> to vector<4xf32>
    %277 = vector.shape_cast %276 : vector<4xf32> to vector<4x1xf32>
    %278 = tpu.reciprocal %277 {approx = true} : vector<4x1xf32> -> vector<4x1xf32>
    %279 = vector.broadcast %278 : vector<4x1xf32> to vector<4x4xf32>
    %280 = arith.mulf %275, %279 : vector<4x4xf32>
    %cst_110 = arith.constant dense<0.000000e+00> : vector<4x4xf32>
    %281 = tpu.matmul %280, %267, %cst_110 {dimension_numbers = #tpu.dot_dimension_numbers<[1], [0], [0], [1], [0, 0, 1, 1], [], []>} : vector<4x4xf32>, vector<4x4xf32>, vector<4x4xf32> -> vector<4x4xf32>
    %c4_111 = arith.constant 4 : index
    %c20_112 = arith.constant 20 : index
    %282 = vector.load %arg31[%c4_111, %c20_112] : memref<8x32xf32, #tpu.memory_space<vmem>>, vector<4x4xf32>
    tpu.vector_store %arg31[%c4_111, %c20_112], %281 {strides = array<i32>} : memref<8x32xf32, #tpu.memory_space<vmem>>, vector<4x4xf32>,
    %283 = vector.extract_strided_slice %172 {offsets = [0, 24], sizes = [4, 4], strides = [1, 1]} : vector<4x32xf32> to vector<4x4xf32>
    %284 = vector.extract_strided_slice %173 {offsets = [0, 24], sizes = [4, 4], strides = [1, 1]} : vector<4x32xf32> to vector<4x4xf32>
    %285 = vector.extract_strided_slice %174 {offsets = [0, 24], sizes = [4, 4], strides = [1, 1]} : vector<4x32xf32> to vector<4x4xf32>
    %cst_113 = arith.constant dense<0.000000e+00> : vector<4x4xf32>
    %286 = tpu.matmul %283, %284, %cst_113 {dimension_numbers = #tpu.dot_dimension_numbers<[1], [1], [0], [0], [0, 0, 1, 0], [], []>} : vector<4x4xf32>, vector<4x4xf32>, vector<4x4xf32> -> vector<4x4xf32>
    %cst_114 = arith.constant 5.000000e-01 : f32
    %287 = vector.broadcast %cst_114 : f32 to vector<4x4xf32>
    %288 = arith.mulf %286, %287 : vector<4x4xf32>
    %cst_115 = arith.constant dense<0xFF800000> : vector<4xf32>
    %289 = vector.multi_reduction <maximumf>, %288, %cst_115 [1] : vector<4x4xf32> to vector<4xf32>
    %290 = vector.shape_cast %289 : vector<4xf32> to vector<4x1xf32>
    %291 = vector.broadcast %290 : vector<4x1xf32> to vector<4x4xf32>
    %292 = arith.subf %288, %291 : vector<4x4xf32>
    %293 = math.exp %292 : vector<4x4xf32>
    %cst_116 = arith.constant dense<0.000000e+00> : vector<4xf32>
    %294 = vector.multi_reduction <add>, %293, %cst_116 [1] : vector<4x4xf32> to vector<4xf32>
    %295 = vector.shape_cast %294 : vector<4xf32> to vector<4x1xf32>
    %296 = tpu.reciprocal %295 {approx = true} : vector<4x1xf32> -> vector<4x1xf32>
    %297 = vector.broadcast %296 : vector<4x1xf32> to vector<4x4xf32>
    %298 = arith.mulf %293, %297 : vector<4x4xf32>
    %cst_117 = arith.constant dense<0.000000e+00> : vector<4x4xf32>
    %299 = tpu.matmul %298, %285, %cst_117 {dimension_numbers = #tpu.dot_dimension_numbers<[1], [0], [0], [1], [0, 0, 1, 1], [], []>} : vector<4x4xf32>, vector<4x4xf32>, vector<4x4xf32> -> vector<4x4xf32>
    %c4_118 = arith.constant 4 : index
    %c24_119 = arith.constant 24 : index
    %300 = vector.load %arg31[%c4_118, %c24_119] : memref<8x32xf32, #tpu.memory_space<vmem>>, vector<4x4xf32>
    tpu.vector_store %arg31[%c4_118, %c24_119], %299 {strides = array<i32>} : memref<8x32xf32, #tpu.memory_space<vmem>>, vector<4x4xf32>,
    %301 = vector.extract_strided_slice %172 {offsets = [0, 28], sizes = [4, 4], strides = [1, 1]} : vector<4x32xf32> to vector<4x4xf32>
    %302 = vector.extract_strided_slice %173 {offsets = [0, 28], sizes = [4, 4], strides = [1, 1]} : vector<4x32xf32> to vector<4x4xf32>
    %303 = vector.extract_strided_slice %174 {offsets = [0, 28], sizes = [4, 4], strides = [1, 1]} : vector<4x32xf32> to vector<4x4xf32>
    %cst_120 = arith.constant dense<0.000000e+00> : vector<4x4xf32>
    %304 = tpu.matmul %301, %302, %cst_120 {dimension_numbers = #tpu.dot_dimension_numbers<[1], [1], [0], [0], [0, 0, 1, 0], [], []>} : vector<4x4xf32>, vector<4x4xf32>, vector<4x4xf32> -> vector<4x4xf32>
    %cst_121 = arith.constant 5.000000e-01 : f32
    %305 = vector.broadcast %cst_121 : f32 to vector<4x4xf32>
    %306 = arith.mulf %304, %305 : vector<4x4xf32>
    %cst_122 = arith.constant dense<0xFF800000> : vector<4xf32>
    %307 = vector.multi_reduction <maximumf>, %306, %cst_122 [1] : vector<4x4xf32> to vector<4xf32>
    %308 = vector.shape_cast %307 : vector<4xf32> to vector<4x1xf32>
    %309 = vector.broadcast %308 : vector<4x1xf32> to vector<4x4xf32>
    %310 = arith.subf %306, %309 : vector<4x4xf32>
    %311 = math.exp %310 : vector<4x4xf32>
    %cst_123 = arith.constant dense<0.000000e+00> : vector<4xf32>
    %312 = vector.multi_reduction <add>, %311, %cst_123 [1] : vector<4x4xf32> to vector<4xf32>
    %313 = vector.shape_cast %312 : vector<4xf32> to vector<4x1xf32>
    %314 = tpu.reciprocal %313 {approx = true} : vector<4x1xf32> -> vector<4x1xf32>
    %315 = vector.broadcast %314 : vector<4x1xf32> to vector<4x4xf32>
    %316 = arith.mulf %311, %315 : vector<4x4xf32>
    %cst_124 = arith.constant dense<0.000000e+00> : vector<4x4xf32>
    %317 = tpu.matmul %316, %303, %cst_124 {dimension_numbers = #tpu.dot_dimension_numbers<[1], [0], [0], [1], [0, 0, 1, 1], [], []>} : vector<4x4xf32>, vector<4x4xf32>, vector<4x4xf32> -> vector<4x4xf32>
    %c4_125 = arith.constant 4 : index
    %c28_126 = arith.constant 28 : index
    %318 = vector.load %arg31[%c4_125, %c28_126] : memref<8x32xf32, #tpu.memory_space<vmem>>, vector<4x4xf32>
    tpu.vector_store %arg31[%c4_125, %c28_126], %317 {strides = array<i32>} : memref<8x32xf32, #tpu.memory_space<vmem>>, vector<4x4xf32>,
    %c0_127 = arith.constant 0 : index
    %c0_128 = arith.constant 0 : index
    %319 = vector.load %arg31[%c0_127, %c0_128] : memref<8x32xf32, #tpu.memory_space<vmem>>, vector<8x32xf32>
    %c0_129 = arith.constant 0 : index
    %c0_130 = arith.constant 0 : index
    %c0_131 = arith.constant 0 : index
    %320 = vector.load %arg11[%c0_129, %c0_130, %c0_131] : memref<1x32x32xf32, #tpu.memory_space<vmem>>, vector<1x32x32xf32>
    %321 = vector.shape_cast %320 : vector<1x32x32xf32> to vector<32x32xf32>
    %cst_132 = arith.constant dense<0.000000e+00> : vector<8x32xf32>
    %322 = tpu.matmul %319, %321, %cst_132 {dimension_numbers = #tpu.dot_dimension_numbers<[1], [0], [0], [1], [0, 0, 1, 1], [], []>} : vector<8x32xf32>, vector<32x32xf32>, vector<8x32xf32> -> vector<8x32xf32>
    %c0_133 = arith.constant 0 : index
    %c0_134 = arith.constant 0 : index
    %c0_135 = arith.constant 0 : index
    %323 = vector.load %arg12[%c0_133, %c0_134, %c0_135] : memref<1x1x32xf32, #tpu.memory_space<vmem>>, vector<1x1x32xf32>
    %324 = vector.shape_cast %323 : vector<1x1x32xf32> to vector<1x32xf32>
    %325 = vector.broadcast %324 : vector<1x32xf32> to vector<8x32xf32>
    %326 = arith.addf %322, %325 : vector<8x32xf32>
    %327 = arith.addf %3, %326 : vector<8x32xf32>
    %c0_136 = arith.constant 0 : index
    %c0_137 = arith.constant 0 : index
    %c0_138 = arith.constant 0 : index
    %328 = vector.load %arg13[%c0_136, %c0_137, %c0_138] : memref<1x1x32xf32, #tpu.memory_space<vmem>>, vector<1x1x32xf32>
    %329 = vector.shape_cast %328 : vector<1x1x32xf32> to vector<1x32xf32>
    %c0_139 = arith.constant 0 : index
    %c0_140 = arith.constant 0 : index
    %c0_141 = arith.constant 0 : index
    %330 = vector.load %arg14[%c0_139, %c0_140, %c0_141] : memref<1x1x32xf32, #tpu.memory_space<vmem>>, vector<1x1x32xf32>
    %331 = vector.shape_cast %330 : vector<1x1x32xf32> to vector<1x32xf32>
    %cst_142 = arith.constant dense<0.000000e+00> : vector<8xf32>
    %332 = vector.multi_reduction <add>, %327, %cst_142 [1] : vector<8x32xf32> to vector<8xf32>
    %333 = vector.shape_cast %332 : vector<8xf32> to vector<8x1xf32>
    %cst_143 = arith.constant 3.200000e+01 : f32
    %334 = vector.broadcast %cst_143 : f32 to vector<8x1xf32>
    %335 = arith.divf %333, %334 : vector<8x1xf32>
    %336 = vector.broadcast %335 : vector<8x1xf32> to vector<8x32xf32>
    %337 = arith.subf %327, %336 : vector<8x32xf32>
    %338 = arith.mulf %337, %337 : vector<8x32xf32>
    %cst_144 = arith.constant dense<0.000000e+00> : vector<8xf32>
    %339 = vector.multi_reduction <add>, %338, %cst_144 [1] : vector<8x32xf32> to vector<8xf32>
    %340 = vector.shape_cast %339 : vector<8xf32> to vector<8x1xf32>
    %cst_145 = arith.constant 3.200000e+01 : f32
    %341 = vector.broadcast %cst_145 : f32 to vector<8x1xf32>
    %342 = arith.divf %340, %341 : vector<8x1xf32>
    %cst_146 = arith.constant 9.99999974E-6 : f32
    %343 = vector.broadcast %cst_146 : f32 to vector<8x1xf32>
    %344 = arith.addf %342, %343 : vector<8x1xf32>
    %345 = math.rsqrt %344 : vector<8x1xf32>
    %346 = vector.broadcast %345 : vector<8x1xf32> to vector<8x32xf32>
    %347 = arith.mulf %337, %346 : vector<8x32xf32>
    %348 = vector.broadcast %329 : vector<1x32xf32> to vector<8x32xf32>
    %349 = arith.mulf %347, %348 : vector<8x32xf32>
    %350 = vector.broadcast %331 : vector<1x32xf32> to vector<8x32xf32>
    %351 = arith.addf %349, %350 : vector<8x32xf32>
    %c0_147 = arith.constant 0 : index
    %c0_148 = arith.constant 0 : index
    %c0_149 = arith.constant 0 : index
    %352 = vector.load %arg15[%c0_147, %c0_148, %c0_149] : memref<1x32x128xf32, #tpu.memory_space<vmem>>, vector<1x32x128xf32>
    %353 = vector.shape_cast %352 : vector<1x32x128xf32> to vector<32x128xf32>
    %cst_150 = arith.constant dense<0.000000e+00> : vector<8x128xf32>
    %354 = tpu.matmul %351, %353, %cst_150 {dimension_numbers = #tpu.dot_dimension_numbers<[1], [0], [0], [1], [0, 0, 1, 1], [], []>} : vector<8x32xf32>, vector<32x128xf32>, vector<8x128xf32> -> vector<8x128xf32>
    %c0_151 = arith.constant 0 : index
    %c0_152 = arith.constant 0 : index
    %c0_153 = arith.constant 0 : index
    %355 = vector.load %arg16[%c0_151, %c0_152, %c0_153] : memref<1x1x128xf32, #tpu.memory_space<vmem>>, vector<1x1x128xf32>
    %356 = vector.shape_cast %355 : vector<1x1x128xf32> to vector<1x128xf32>
    %357 = vector.broadcast %356 : vector<1x128xf32> to vector<8x128xf32>
    %358 = arith.addf %354, %357 : vector<8x128xf32>
    %cst_154 = arith.constant 5.000000e-01 : f32
    %359 = vector.broadcast %cst_154 : f32 to vector<8x128xf32>
    %360 = arith.mulf %359, %358 : vector<8x128xf32>
    %cst_155 = arith.constant 0.707106769 : f32
    %361 = vector.broadcast %cst_155 : f32 to vector<8x128xf32>
    %362 = arith.mulf %358, %361 : vector<8x128xf32>
    %363 = math.absf %362 : vector<8x128xf32>
    %cst_156 = arith.constant 0.327591091 : f32
    %364 = vector.broadcast %cst_156 : f32 to vector<8x128xf32>
    %365 = arith.mulf %364, %363 : vector<8x128xf32>
    %cst_157 = arith.constant 1.000000e+00 : f32
    %366 = vector.broadcast %cst_157 : f32 to vector<8x128xf32>
    %367 = arith.addf %366, %365 : vector<8x128xf32>
    %cst_158 = arith.constant 1.000000e+00 : f32
    %368 = vector.broadcast %cst_158 : f32 to vector<8x128xf32>
    %369 = arith.divf %368, %367 : vector<8x128xf32>
    %cst_159 = arith.constant 1.06140542 : f32
    %370 = vector.broadcast %cst_159 : f32 to vector<8x128xf32>
    %371 = arith.mulf %370, %369 : vector<8x128xf32>
    %cst_160 = arith.constant -1.45315206 : f32
    %372 = vector.broadcast %cst_160 : f32 to vector<8x128xf32>
    %373 = arith.addf %371, %372 : vector<8x128xf32>
    %374 = arith.mulf %373, %369 : vector<8x128xf32>
    %cst_161 = arith.constant 1.42141378 : f32
    %375 = vector.broadcast %cst_161 : f32 to vector<8x128xf32>
    %376 = arith.addf %374, %375 : vector<8x128xf32>
    %377 = arith.mulf %376, %369 : vector<8x128xf32>
    %cst_162 = arith.constant -0.284496725 : f32
    %378 = vector.broadcast %cst_162 : f32 to vector<8x128xf32>
    %379 = arith.addf %377, %378 : vector<8x128xf32>
    %380 = arith.mulf %379, %369 : vector<8x128xf32>
    %cst_163 = arith.constant 0.254829586 : f32
    %381 = vector.broadcast %cst_163 : f32 to vector<8x128xf32>
    %382 = arith.addf %380, %381 : vector<8x128xf32>
    %383 = arith.mulf %382, %369 : vector<8x128xf32>
    %cst_164 = arith.constant 0.000000e+00 : f32
    %384 = vector.broadcast %cst_164 : f32 to vector<8x128xf32>
    %385 = arith.subf %384, %363 : vector<8x128xf32>
    %386 = arith.mulf %385, %363 : vector<8x128xf32>
    %387 = math.exp %386 : vector<8x128xf32>
    %388 = arith.mulf %383, %387 : vector<8x128xf32>
    %cst_165 = arith.constant 1.000000e+00 : f32
    %389 = vector.broadcast %cst_165 : f32 to vector<8x128xf32>
    %390 = arith.subf %389, %388 : vector<8x128xf32>
    %cst_166 = arith.constant 0.000000e+00 : f32
    %391 = vector.broadcast %cst_166 : f32 to vector<8x128xf32>
    %392 = arith.cmpf oge, %362, %391 : vector<8x128xf32>
    %cst_167 = arith.constant 0.000000e+00 : f32
    %393 = vector.broadcast %cst_167 : f32 to vector<8x128xf32>
    %394 = arith.subf %393, %390 : vector<8x128xf32>
    %395 = arith.select %392, %390, %394 : vector<8x128xi1>, vector<8x128xf32>
    %cst_168 = arith.constant 1.000000e+00 : f32
    %396 = vector.broadcast %cst_168 : f32 to vector<8x128xf32>
    %397 = arith.addf %396, %395 : vector<8x128xf32>
    %398 = arith.mulf %360, %397 : vector<8x128xf32>
    %c0_169 = arith.constant 0 : index
    %c0_170 = arith.constant 0 : index
    %c0_171 = arith.constant 0 : index
    %399 = vector.load %arg17[%c0_169, %c0_170, %c0_171] : memref<1x128x32xf32, #tpu.memory_space<vmem>>, vector<1x128x32xf32>
    %400 = vector.shape_cast %399 : vector<1x128x32xf32> to vector<128x32xf32>
    %cst_172 = arith.constant dense<0.000000e+00> : vector<8x32xf32>
    %401 = tpu.matmul %398, %400, %cst_172 {dimension_numbers = #tpu.dot_dimension_numbers<[1], [0], [0], [1], [0, 0, 1, 1], [], []>} : vector<8x128xf32>, vector<128x32xf32>, vector<8x32xf32> -> vector<8x32xf32>
    %c0_173 = arith.constant 0 : index
    %c0_174 = arith.constant 0 : index
    %c0_175 = arith.constant 0 : index
    %402 = vector.load %arg18[%c0_173, %c0_174, %c0_175] : memref<1x1x32xf32, #tpu.memory_space<vmem>>, vector<1x1x32xf32>
    %403 = vector.shape_cast %402 : vector<1x1x32xf32> to vector<1x32xf32>
    %404 = vector.broadcast %403 : vector<1x32xf32> to vector<8x32xf32>
    %405 = arith.addf %401, %404 : vector<8x32xf32>
    %406 = arith.addf %351, %405 : vector<8x32xf32>
    %c0_176 = arith.constant 0 : index
    %c0_177 = arith.constant 0 : index
    %c0_178 = arith.constant 0 : index
    %407 = vector.load %arg19[%c0_176, %c0_177, %c0_178] : memref<1x1x32xf32, #tpu.memory_space<vmem>>, vector<1x1x32xf32>
    %408 = vector.shape_cast %407 : vector<1x1x32xf32> to vector<1x32xf32>
    %c0_179 = arith.constant 0 : index
    %c0_180 = arith.constant 0 : index
    %c0_181 = arith.constant 0 : index
    %409 = vector.load %arg20[%c0_179, %c0_180, %c0_181] : memref<1x1x32xf32, #tpu.memory_space<vmem>>, vector<1x1x32xf32>
    %410 = vector.shape_cast %409 : vector<1x1x32xf32> to vector<1x32xf32>
    %cst_182 = arith.constant dense<0.000000e+00> : vector<8xf32>
    %411 = vector.multi_reduction <add>, %406, %cst_182 [1] : vector<8x32xf32> to vector<8xf32>
    %412 = vector.shape_cast %411 : vector<8xf32> to vector<8x1xf32>
    %cst_183 = arith.constant 3.200000e+01 : f32
    %413 = vector.broadcast %cst_183 : f32 to vector<8x1xf32>
    %414 = arith.divf %412, %413 : vector<8x1xf32>
    %415 = vector.broadcast %414 : vector<8x1xf32> to vector<8x32xf32>
    %416 = arith.subf %406, %415 : vector<8x32xf32>
    %417 = arith.mulf %416, %416 : vector<8x32xf32>
    %cst_184 = arith.constant dense<0.000000e+00> : vector<8xf32>
    %418 = vector.multi_reduction <add>, %417, %cst_184 [1] : vector<8x32xf32> to vector<8xf32>
    %419 = vector.shape_cast %418 : vector<8xf32> to vector<8x1xf32>
    %cst_185 = arith.constant 3.200000e+01 : f32
    %420 = vector.broadcast %cst_185 : f32 to vector<8x1xf32>
    %421 = arith.divf %419, %420 : vector<8x1xf32>
    %cst_186 = arith.constant 9.99999974E-6 : f32
    %422 = vector.broadcast %cst_186 : f32 to vector<8x1xf32>
    %423 = arith.addf %421, %422 : vector<8x1xf32>
    %424 = math.rsqrt %423 : vector<8x1xf32>
    %425 = vector.broadcast %424 : vector<8x1xf32> to vector<8x32xf32>
    %426 = arith.mulf %416, %425 : vector<8x32xf32>
    %427 = vector.broadcast %408 : vector<1x32xf32> to vector<8x32xf32>
    %428 = arith.mulf %426, %427 : vector<8x32xf32>
    %429 = vector.broadcast %410 : vector<1x32xf32> to vector<8x32xf32>
    %430 = arith.addf %428, %429 : vector<8x32xf32>
    %c0_187 = arith.constant 0 : index
    %c0_188 = arith.constant 0 : index
    %431 = vector.load %arg30[%c0_187, %c0_188] : memref<8x32xf32, #tpu.memory_space<vmem>>, vector<8x32xf32>
    tpu.vector_store %arg30[%c0_187, %c0_188], %430 {strides = array<i32>} : memref<8x32xf32, #tpu.memory_space<vmem>>, vector<8x32xf32>,
    %c1_i32 = arith.constant 1 : i32
    %432 = arith.cmpi eq, %arg1, %c1_i32 : i32
    %433 = arith.extui %432 : i1 to i32
    %c0_i32_189 = arith.constant 0 : i32
    %434 = arith.cmpi ne, %433, %c0_i32_189 : i32
    scf.if %434 {
      %c0_190 = arith.constant 0 : index
      %c0_191 = arith.constant 0 : index
      %435 = vector.load %arg21[%c0_190, %c0_191] : memref<1x32xf32, #tpu.memory_space<vmem>>, vector<1x32xf32>
      %c0_192 = arith.constant 0 : index
      %c0_193 = arith.constant 0 : index
      %436 = vector.load %arg22[%c0_192, %c0_193] : memref<1x32xf32, #tpu.memory_space<vmem>>, vector<1x32xf32>
      %cst_194 = arith.constant dense<0.000000e+00> : vector<8xf32>
      %437 = vector.multi_reduction <add>, %430, %cst_194 [1] : vector<8x32xf32> to vector<8xf32>
      %438 = vector.shape_cast %437 : vector<8xf32> to vector<8x1xf32>
      %cst_195 = arith.constant 3.200000e+01 : f32
      %439 = vector.broadcast %cst_195 : f32 to vector<8x1xf32>
      %440 = arith.divf %438, %439 : vector<8x1xf32>
      %441 = vector.broadcast %440 : vector<8x1xf32> to vector<8x32xf32>
      %442 = arith.subf %430, %441 : vector<8x32xf32>
      %443 = arith.mulf %442, %442 : vector<8x32xf32>
      %cst_196 = arith.constant dense<0.000000e+00> : vector<8xf32>
      %444 = vector.multi_reduction <add>, %443, %cst_196 [1] : vector<8x32xf32> to vector<8xf32>
      %445 = vector.shape_cast %444 : vector<8xf32> to vector<8x1xf32>
      %cst_197 = arith.constant 3.200000e+01 : f32
      %446 = vector.broadcast %cst_197 : f32 to vector<8x1xf32>
      %447 = arith.divf %445, %446 : vector<8x1xf32>
      %cst_198 = arith.constant 9.99999974E-6 : f32
      %448 = vector.broadcast %cst_198 : f32 to vector<8x1xf32>
      %449 = arith.addf %447, %448 : vector<8x1xf32>
      %450 = math.rsqrt %449 : vector<8x1xf32>
      %451 = vector.broadcast %450 : vector<8x1xf32> to vector<8x32xf32>
      %452 = arith.mulf %442, %451 : vector<8x32xf32>
      %453 = vector.broadcast %435 : vector<1x32xf32> to vector<8x32xf32>
      %454 = arith.mulf %452, %453 : vector<8x32xf32>
      %455 = vector.broadcast %436 : vector<1x32xf32> to vector<8x32xf32>
      %456 = arith.addf %454, %455 : vector<8x32xf32>
      %c0_199 = arith.constant 0 : index
      %c0_200 = arith.constant 0 : index
      %457 = vector.load %arg23[%c0_199, %c0_200] : memref<32x128xf32, #tpu.memory_space<vmem>>, vector<32x128xf32>
      %cst_201 = arith.constant dense<0.000000e+00> : vector<8x128xf32>
      %458 = tpu.matmul %456, %457, %cst_201 {dimension_numbers = #tpu.dot_dimension_numbers<[1], [0], [0], [1], [0, 0, 1, 1], [], []>} : vector<8x32xf32>, vector<32x128xf32>, vector<8x128xf32> -> vector<8x128xf32>
      %c0_202 = arith.constant 0 : index
      %c0_203 = arith.constant 0 : index
      %459 = vector.load %arg24[%c0_202, %c0_203] : memref<1x128xf32, #tpu.memory_space<vmem>>, vector<1x128xf32>
      %460 = vector.broadcast %459 : vector<1x128xf32> to vector<8x128xf32>
      %461 = arith.addf %458, %460 : vector<8x128xf32>
      %cst_204 = arith.constant 5.000000e-01 : f32
      %462 = vector.broadcast %cst_204 : f32 to vector<8x128xf32>
      %463 = arith.mulf %462, %461 : vector<8x128xf32>
      %cst_205 = arith.constant 0.707106769 : f32
      %464 = vector.broadcast %cst_205 : f32 to vector<8x128xf32>
      %465 = arith.mulf %461, %464 : vector<8x128xf32>
      %466 = math.absf %465 : vector<8x128xf32>
      %cst_206 = arith.constant 0.327591091 : f32
      %467 = vector.broadcast %cst_206 : f32 to vector<8x128xf32>
      %468 = arith.mulf %467, %466 : vector<8x128xf32>
      %cst_207 = arith.constant 1.000000e+00 : f32
      %469 = vector.broadcast %cst_207 : f32 to vector<8x128xf32>
      %470 = arith.addf %469, %468 : vector<8x128xf32>
      %cst_208 = arith.constant 1.000000e+00 : f32
      %471 = vector.broadcast %cst_208 : f32 to vector<8x128xf32>
      %472 = arith.divf %471, %470 : vector<8x128xf32>
      %cst_209 = arith.constant 1.06140542 : f32
      %473 = vector.broadcast %cst_209 : f32 to vector<8x128xf32>
      %474 = arith.mulf %473, %472 : vector<8x128xf32>
      %cst_210 = arith.constant -1.45315206 : f32
      %475 = vector.broadcast %cst_210 : f32 to vector<8x128xf32>
      %476 = arith.addf %474, %475 : vector<8x128xf32>
      %477 = arith.mulf %476, %472 : vector<8x128xf32>
      %cst_211 = arith.constant 1.42141378 : f32
      %478 = vector.broadcast %cst_211 : f32 to vector<8x128xf32>
      %479 = arith.addf %477, %478 : vector<8x128xf32>
      %480 = arith.mulf %479, %472 : vector<8x128xf32>
      %cst_212 = arith.constant -0.284496725 : f32
      %481 = vector.broadcast %cst_212 : f32 to vector<8x128xf32>
      %482 = arith.addf %480, %481 : vector<8x128xf32>
      %483 = arith.mulf %482, %472 : vector<8x128xf32>
      %cst_213 = arith.constant 0.254829586 : f32
      %484 = vector.broadcast %cst_213 : f32 to vector<8x128xf32>
      %485 = arith.addf %483, %484 : vector<8x128xf32>
      %486 = arith.mulf %485, %472 : vector<8x128xf32>
      %cst_214 = arith.constant 0.000000e+00 : f32
      %487 = vector.broadcast %cst_214 : f32 to vector<8x128xf32>
      %488 = arith.subf %487, %466 : vector<8x128xf32>
      %489 = arith.mulf %488, %466 : vector<8x128xf32>
      %490 = math.exp %489 : vector<8x128xf32>
      %491 = arith.mulf %486, %490 : vector<8x128xf32>
      %cst_215 = arith.constant 1.000000e+00 : f32
      %492 = vector.broadcast %cst_215 : f32 to vector<8x128xf32>
      %493 = arith.subf %492, %491 : vector<8x128xf32>
      %cst_216 = arith.constant 0.000000e+00 : f32
      %494 = vector.broadcast %cst_216 : f32 to vector<8x128xf32>
      %495 = arith.cmpf oge, %465, %494 : vector<8x128xf32>
      %cst_217 = arith.constant 0.000000e+00 : f32
      %496 = vector.broadcast %cst_217 : f32 to vector<8x128xf32>
      %497 = arith.subf %496, %493 : vector<8x128xf32>
      %498 = arith.select %495, %493, %497 : vector<8x128xi1>, vector<8x128xf32>
      %cst_218 = arith.constant 1.000000e+00 : f32
      %499 = vector.broadcast %cst_218 : f32 to vector<8x128xf32>
      %500 = arith.addf %499, %498 : vector<8x128xf32>
      %501 = arith.mulf %463, %500 : vector<8x128xf32>
      %c0_219 = arith.constant 0 : index
      %c0_220 = arith.constant 0 : index
      %502 = vector.load %arg25[%c0_219, %c0_220] : memref<128x128xf32, #tpu.memory_space<vmem>>, vector<128x128xf32>
      %cst_221 = arith.constant dense<0.000000e+00> : vector<8x128xf32>
      %503 = tpu.matmul %501, %502, %cst_221 {dimension_numbers = #tpu.dot_dimension_numbers<[1], [0], [0], [1], [0, 0, 1, 1], [], []>} : vector<8x128xf32>, vector<128x128xf32>, vector<8x128xf32> -> vector<8x128xf32>
      %c0_222 = arith.constant 0 : index
      %c0_223 = arith.constant 0 : index
      %504 = vector.load %arg26[%c0_222, %c0_223] : memref<1x128xf32, #tpu.memory_space<vmem>>, vector<1x128xf32>
      %505 = vector.broadcast %504 : vector<1x128xf32> to vector<8x128xf32>
      %506 = arith.addf %503, %505 : vector<8x128xf32>
      %c0_224 = arith.constant 0 : index
      %c0_225 = arith.constant 0 : index
      %507 = vector.load %arg29[%c0_224, %c0_225] : memref<8x1xf32, #tpu.memory_space<vmem>>, vector<8x1xf32>
      %508 = vector.broadcast %507 : vector<8x1xf32> to vector<8x128xf32>
      %509 = arith.mulf %506, %508 : vector<8x128xf32>
      %c0_226 = arith.constant 0 : index
      %c0_227 = arith.constant 0 : index
      %510 = vector.load %arg28[%c0_226, %c0_227] : memref<8x1xf32, #tpu.memory_space<vmem>>, vector<8x1xf32>
      %511 = vector.broadcast %510 : vector<8x1xf32> to vector<8x128xf32>
      %512 = arith.addf %509, %511 : vector<8x128xf32>
      %c0_228 = arith.constant 0 : index
      %c0_229 = arith.constant 0 : index
      %513 = vector.load %arg27[%c0_228, %c0_229] : memref<8x128xf32, #tpu.memory_space<vmem>>, vector<8x128xf32>
      tpu.vector_store %arg27[%c0_228, %c0_229], %512 {strides = array<i32>} : memref<8x128xf32, #tpu.memory_space<vmem>>, vector<8x128xf32>,
    } else {
    }
    return
  }
  func.func @transform_0(%arg0: i32, %arg1: i32) -> (i32, i32) {
    %c0_i32 = arith.constant 0 : i32
    %c0_i32_0 = arith.constant 0 : i32
    return %arg0, %c0_i32 : i32, i32
  }
  func.func @transform_1(%arg0: i32, %arg1: i32) -> (i32, i32) {
    %c0_i32 = arith.constant 0 : i32
    %c0_i32_0 = arith.constant 0 : i32
    %c0_i32_1 = arith.constant 0 : i32
    return %c0_i32, %c0_i32_0 : i32, i32
  }
  func.func @transform_2(%arg0: i32, %arg1: i32) -> (i32, i32) {
    %c0_i32 = arith.constant 0 : i32
    %c0_i32_0 = arith.constant 0 : i32
    %c0_i32_1 = arith.constant 0 : i32
    return %c0_i32, %c0_i32_0 : i32, i32
  }
  func.func @transform_3(%arg0: i32, %arg1: i32) -> (i32, i32, i32) {
    %c0_i32 = arith.constant 0 : i32
    %c0_i32_0 = arith.constant 0 : i32
    %c0_i32_1 = arith.constant 0 : i32
    return %arg1, %c0_i32, %c0_i32_0 : i32, i32, i32
  }
  func.func @transform_4(%arg0: i32, %arg1: i32) -> (i32, i32, i32) {
    %c0_i32 = arith.constant 0 : i32
    %c0_i32_0 = arith.constant 0 : i32
    %c0_i32_1 = arith.constant 0 : i32
    return %arg1, %c0_i32, %c0_i32_0 : i32, i32, i32
  }
  func.func @transform_5(%arg0: i32, %arg1: i32) -> (i32, i32, i32) {
    %c0_i32 = arith.constant 0 : i32
    %c0_i32_0 = arith.constant 0 : i32
    %c0_i32_1 = arith.constant 0 : i32
    return %arg1, %c0_i32, %c0_i32_0 : i32, i32, i32
  }
  func.func @transform_6(%arg0: i32, %arg1: i32) -> (i32, i32, i32) {
    %c0_i32 = arith.constant 0 : i32
    %c0_i32_0 = arith.constant 0 : i32
    %c0_i32_1 = arith.constant 0 : i32
    return %arg1, %c0_i32, %c0_i32_0 : i32, i32, i32
  }
  func.func @transform_7(%arg0: i32, %arg1: i32) -> (i32, i32, i32) {
    %c0_i32 = arith.constant 0 : i32
    %c0_i32_0 = arith.constant 0 : i32
    %c0_i32_1 = arith.constant 0 : i32
    return %arg1, %c0_i32, %c0_i32_0 : i32, i32, i32
  }
  func.func @transform_8(%arg0: i32, %arg1: i32) -> (i32, i32, i32) {
    %c0_i32 = arith.constant 0 : i32
    %c0_i32_0 = arith.constant 0 : i32
    %c0_i32_1 = arith.constant 0 : i32
    return %arg1, %c0_i32, %c0_i32_0 : i32, i32, i32
  }
  func.func @transform_9(%arg0: i32, %arg1: i32) -> (i32, i32, i32) {
    %c0_i32 = arith.constant 0 : i32
    %c0_i32_0 = arith.constant 0 : i32
    %c0_i32_1 = arith.constant 0 : i32
    return %arg1, %c0_i32, %c0_i32_0 : i32, i32, i32
  }
  func.func @transform_10(%arg0: i32, %arg1: i32) -> (i32, i32, i32) {
    %c0_i32 = arith.constant 0 : i32
    %c0_i32_0 = arith.constant 0 : i32
    %c0_i32_1 = arith.constant 0 : i32
    return %arg1, %c0_i32, %c0_i32_0 : i32, i32, i32
  }
  func.func @transform_11(%arg0: i32, %arg1: i32) -> (i32, i32, i32) {
    %c0_i32 = arith.constant 0 : i32
    %c0_i32_0 = arith.constant 0 : i32
    %c0_i32_1 = arith.constant 0 : i32
    return %arg1, %c0_i32, %c0_i32_0 : i32, i32, i32
  }
  func.func @transform_12(%arg0: i32, %arg1: i32) -> (i32, i32, i32) {
    %c0_i32 = arith.constant 0 : i32
    %c0_i32_0 = arith.constant 0 : i32
    %c0_i32_1 = arith.constant 0 : i32
    return %arg1, %c0_i32, %c0_i32_0 : i32, i32, i32
  }
  func.func @transform_13(%arg0: i32, %arg1: i32) -> (i32, i32, i32) {
    %c0_i32 = arith.constant 0 : i32
    %c0_i32_0 = arith.constant 0 : i32
    %c0_i32_1 = arith.constant 0 : i32
    return %arg1, %c0_i32, %c0_i32_0 : i32, i32, i32
  }
  func.func @transform_14(%arg0: i32, %arg1: i32) -> (i32, i32, i32) {
    %c0_i32 = arith.constant 0 : i32
    %c0_i32_0 = arith.constant 0 : i32
    %c0_i32_1 = arith.constant 0 : i32
    return %arg1, %c0_i32, %c0_i32_0 : i32, i32, i32
  }
  func.func @transform_15(%arg0: i32, %arg1: i32) -> (i32, i32, i32) {
    %c0_i32 = arith.constant 0 : i32
    %c0_i32_0 = arith.constant 0 : i32
    %c0_i32_1 = arith.constant 0 : i32
    return %arg1, %c0_i32, %c0_i32_0 : i32, i32, i32
  }
  func.func @transform_16(%arg0: i32, %arg1: i32) -> (i32, i32, i32) {
    %c0_i32 = arith.constant 0 : i32
    %c0_i32_0 = arith.constant 0 : i32
    %c0_i32_1 = arith.constant 0 : i32
    return %arg1, %c0_i32, %c0_i32_0 : i32, i32, i32
  }
  func.func @transform_17(%arg0: i32, %arg1: i32) -> (i32, i32, i32) {
    %c0_i32 = arith.constant 0 : i32
    %c0_i32_0 = arith.constant 0 : i32
    %c0_i32_1 = arith.constant 0 : i32
    return %arg1, %c0_i32, %c0_i32_0 : i32, i32, i32
  }
  func.func @transform_18(%arg0: i32, %arg1: i32) -> (i32, i32, i32) {
    %c0_i32 = arith.constant 0 : i32
    %c0_i32_0 = arith.constant 0 : i32
    %c0_i32_1 = arith.constant 0 : i32
    return %arg1, %c0_i32, %c0_i32_0 : i32, i32, i32
  }
  func.func @transform_19(%arg0: i32, %arg1: i32) -> (i32, i32) {
    %c0_i32 = arith.constant 0 : i32
    %c0_i32_0 = arith.constant 0 : i32
    %c0_i32_1 = arith.constant 0 : i32
    return %c0_i32, %c0_i32_0 : i32, i32
  }
  func.func @transform_20(%arg0: i32, %arg1: i32) -> (i32, i32) {
    %c0_i32 = arith.constant 0 : i32
    %c0_i32_0 = arith.constant 0 : i32
    %c0_i32_1 = arith.constant 0 : i32
    return %c0_i32, %c0_i32_0 : i32, i32
  }
  func.func @transform_21(%arg0: i32, %arg1: i32) -> (i32, i32) {
    %c0_i32 = arith.constant 0 : i32
    %c0_i32_0 = arith.constant 0 : i32
    %c0_i32_1 = arith.constant 0 : i32
    return %c0_i32, %c0_i32_0 : i32, i32
  }
  func.func @transform_22(%arg0: i32, %arg1: i32) -> (i32, i32) {
    %c0_i32 = arith.constant 0 : i32
    %c0_i32_0 = arith.constant 0 : i32
    %c0_i32_1 = arith.constant 0 : i32
    return %c0_i32, %c0_i32_0 : i32, i32
  }
  func.func @transform_23(%arg0: i32, %arg1: i32) -> (i32, i32) {
    %c0_i32 = arith.constant 0 : i32
    %c0_i32_0 = arith.constant 0 : i32
    %c0_i32_1 = arith.constant 0 : i32
    return %c0_i32, %c0_i32_0 : i32, i32
  }
  func.func @transform_24(%arg0: i32, %arg1: i32) -> (i32, i32) {
    %c0_i32 = arith.constant 0 : i32
    %c0_i32_0 = arith.constant 0 : i32
    %c0_i32_1 = arith.constant 0 : i32
    return %c0_i32, %c0_i32_0 : i32, i32
  }
  func.func @transform_25(%arg0: i32, %arg1: i32) -> (i32, i32) {
    %c0_i32 = arith.constant 0 : i32
    %c0_i32_0 = arith.constant 0 : i32
    return %arg0, %c0_i32 : i32, i32
  }
}

</mosaic_0001>

<llo_original>
// kernel: tpu_custom_call.1
$region0: #{tpu_custom_call.1}
  #allocation0 [shape = 'u32[]', space=smem, size = 0x4, offset = 0x4, fixed_abs, tag = 'smem constant byte address 0x4 - core index']
  #allocation1 [shape = 'u32[144,128]{1,0:T(1,128)}', space=vmem, size = 0x12000, scoped, tag = 'internal scratch']
  #allocation2 [shape = 'f32[8,1]{1,0:T(8,128)}', space=vmem, size = 0x1000, scoped, tag = 'scratch operand']
  #allocation3 [shape = 'f32[8,1]{1,0:T(8,128)}', space=vmem, size = 0x1000, scoped, tag = 'scratch operand']
  #allocation4 [shape = 'f32[8,32]{1,0:T(8,128)}', space=vmem, size = 0x1000, scoped, tag = 'scratch operand']
  #allocation5 [shape = 'f32[8,32]{1,0:T(8,128)}', space=vmem, size = 0x1000, scoped, tag = 'scratch operand']
  %s0 = inlined_call_operand.hbm [shape: f32[8,8], index: 0, kind: input, shape index: {}]
  %s1 = inlined_call_operand.hbm [shape: f32[8,32], index: 1, kind: input, shape index: {}]
  %s2 = inlined_call_operand.vmem [shape: f32[1,32], index: 2, kind: input, shape index: {}]
  %s3 = inlined_call_operand.vmem [shape: f32[2,32,32], index: 3, kind: input, shape index: {}]
  %s4 = inlined_call_operand.vmem [shape: f32[2,1,32], index: 4, kind: input, shape index: {}]
  %s5 = inlined_call_operand.vmem [shape: f32[2,32,32], index: 5, kind: input, shape index: {}]
  %s6 = inlined_call_operand.vmem [shape: f32[2,1,32], index: 6, kind: input, shape index: {}]
  %s7 = inlined_call_operand.vmem [shape: f32[2,32,32], index: 7, kind: input, shape index: {}]
  %s8 = inlined_call_operand.hbm [shape: f32[2,1,32], index: 8, kind: input, shape index: {}]
  %s9 = inlined_call_operand.hbm [shape: f32[2,32,32], index: 9, kind: input, shape index: {}]
  %s10 = inlined_call_operand.hbm [shape: f32[2,1,32], index: 10, kind: input, shape index: {}]
  %s11 = inlined_call_operand.vmem [shape: f32[2,1,32], index: 11, kind: input, shape index: {}]
  %s12 = inlined_call_operand.vmem [shape: f32[2,1,32], index: 12, kind: input, shape index: {}]
  %s13 = inlined_call_operand.hbm [shape: f32[2,32,128], index: 13, kind: input, shape index: {}]
  %s14 = inlined_call_operand.vmem [shape: f32[2,1,128], index: 14, kind: input, shape index: {}]
  %s15 = inlined_call_operand.vmem [shape: f32[2,128,32], index: 15, kind: input, shape index: {}]
  %s16 = inlined_call_operand.vmem [shape: f32[2,1,32], index: 16, kind: input, shape index: {}]
  %s17 = inlined_call_operand.vmem [shape: f32[2,1,32], index: 17, kind: input, shape index: {}]
  %s18 = inlined_call_operand.vmem [shape: f32[2,1,32], index: 18, kind: input, shape index: {}]
  %s19 = inlined_call_operand.vmem [shape: f32[1,32], index: 19, kind: input, shape index: {}]
  %s20 = inlined_call_operand.vmem [shape: f32[1,32], index: 20, kind: input, shape index: {}]
  %s21 = inlined_call_operand.vmem [shape: f32[32,128], index: 21, kind: input, shape index: {}]
  %s22 = inlined_call_operand.vmem [shape: f32[1,128], index: 22, kind: input, shape index: {}]
  %s23 = inlined_call_operand.vmem [shape: f32[128,128], index: 23, kind: input, shape index: {}]
  %s24 = inlined_call_operand.vmem [shape: f32[1,128], index: 24, kind: input, shape index: {}]
  %s25 = inlined_call_operand.hbm [shape: f32[8,128], index: 25, kind: output, shape index: {}]
  %s26 = sld [smem:[#allocation0]]
  $region165: #{tpu_custom_call.1} parent=0
    _
  %s28 = ssub.s32 1, %s26
  %s29 = scalar_select 0, %s28, %s26
  $region1: #{tpu_custom_call.1} parent=0
    #allocation6 [shape = 'u8[4096]{0}', space=vmem, size = 0x1000, scoped, tag = 'input window, operand 0, single buffered']
    #allocation7 [shape = 's32[2]{0}', space=sflag, size = 0x8, scoped, tag = 'scoped memory for tpu_custom_call.1']
    #allocation8 [shape = 's32[2]{0}', space=sflag, size = 0x8, scoped, tag = 'scoped memory for tpu_custom_call.1']
    #allocation9 [shape = 'u8[4096]{0}', space=vmem, size = 0x1000, scoped, tag = 'input window, operand 1, single buffered']
    #allocation10 [shape = 's32[1]{0}', space=sflag, size = 0x4, scoped, tag = 'scoped memory for tpu_custom_call.1']
    #allocation11 [shape = 'u8[1024]{0}', space=vmem, size = 0x400, scoped, tag = 'input window, operand 8']
    #allocation12 [shape = 'u8[32768]{0}', space=vmem, size = 0x8000, scoped, tag = 'input window, operand 9']
    #allocation13 [shape = 'u8[1024]{0}', space=vmem, size = 0x400, scoped, tag = 'input window, operand 10']
    #allocation14 [shape = 'u8[32768]{0}', space=vmem, size = 0x8000, scoped, tag = 'input window, operand 13']
    #allocation15 [shape = 'u8[4096]{0}', space=vmem, size = 0x1000, scoped, tag = 'output window, operand 0, single buffered']
    %30 = vsyncpa [#allocation7], 0
    %31 = vsyncpa [#allocation10], 0
    %32 = vsyncpa [#allocation8], 0
    loop: start=0, step=1, limit=4
    $region2: #{tpu_custom_call.1} parent=1 // loop_pre_header
      _
    $region3: #{tpu_custom_call.1} parent=1 // loop_header
      %s34 = sphi 0, %s38
      %p35 = scmp.ge.s32.totalorder %s34, 4
      %s41 = sphi 0, %s53
      %s42 = sphi 0, %s49
      %s43 = sphi 0, %s41
      %s44 = sphi 0, %s42
      %s45 = sphi 0, %s43
      %s46 = sphi 0, %s44
      %s56 = sphi 0, %s58
      %s59 = sphi 0, %s56
      %s60 = sphi 0, %s59
      %s76 = sphi 0, %s60
      %s80 = sphi 0, %s80
      %s82 = sphi 0, %s80
      %s83 = sphi 0, %s82
      %s97 = sphi 0, %s83
      %s101 = sphi 0, %s101
      %s103 = sphi 0, %s101
      %s104 = sphi 0, %s103
      %s118 = sphi 0, %s104
      %s124 = sphi 0, %s126
      %s127 = sphi 0, %s124
      %s128 = sphi 0, %s127
      %s144 = sphi 0, %s128
      %s150 = sphi 0, %s152
      %s153 = sphi 0, %s150
      %s154 = sphi 0, %s153
      %s170 = sphi 0, %s154
      %s176 = sphi 0, %s178
      %s179 = sphi 0, %s176
      %s180 = sphi 0, %s179
      %s196 = sphi 0, %s180
      %s202 = sphi 0, %s204
      %s205 = sphi 0, %s202
      %s206 = sphi 0, %s205
      %s222 = sphi 0, %s206
      %s228 = sphi 0, %s230
      %s231 = sphi 0, %s228
      %s232 = sphi 0, %s231
      %s248 = sphi 0, %s232
      %s254 = sphi 0, %s256
      %s257 = sphi 0, %s254
      %s258 = sphi 0, %s257
      %s274 = sphi 0, %s258
      %s280 = sphi 0, %s282
      %s283 = sphi 0, %s280
      %s284 = sphi 0, %s283
      %s300 = sphi 0, %s284
      %s306 = sphi 0, %s308
      %s309 = sphi 0, %s306
      %s310 = sphi 0, %s309
      %s326 = sphi 0, %s310
      %s332 = sphi 0, %s334
      %s335 = sphi 0, %s332
      %s336 = sphi 0, %s335
      %s352 = sphi 0, %s336
      %s358 = sphi 0, %s360
      %s361 = sphi 0, %s358
      %s362 = sphi 0, %s361
      %s378 = sphi 0, %s362
      %s384 = sphi 0, %s386
      %s387 = sphi 0, %s384
      %s388 = sphi 0, %s387
      %s404 = sphi 0, %s388
      %s410 = sphi 0, %s412
      %s413 = sphi 0, %s410
      %s414 = sphi 0, %s413
      %s430 = sphi 0, %s414
      %s436 = sphi 0, %s438
      %s439 = sphi 0, %s436
      %s440 = sphi 0, %s439
      %s456 = sphi 0, %s440
      %s462 = sphi 0, %s464
      %s465 = sphi 0, %s462
      %s466 = sphi 0, %s465
      %s482 = sphi 0, %s466
      %s488 = sphi 0, %s490
      %s491 = sphi 0, %s488
      %s492 = sphi 0, %s491
      %s508 = sphi 0, %s492
      %s514 = sphi 0, %s516
      %s517 = sphi 0, %s514
      %s518 = sphi 0, %s517
      %s534 = sphi 0, %s518
      %s538 = sphi 0, %s538
      %s540 = sphi 0, %s538
      %s541 = sphi 0, %s540
      %s555 = sphi 0, %s541
      %s559 = sphi 0, %s559
      %s561 = sphi 0, %s559
      %s562 = sphi 0, %s561
      %s576 = sphi 0, %s562
      %s580 = sphi 0, %s580
      %s582 = sphi 0, %s580
      %s583 = sphi 0, %s582
      %s597 = sphi 0, %s583
      %s601 = sphi 0, %s601
      %s603 = sphi 0, %s601
      %s604 = sphi 0, %s603
      %s618 = sphi 0, %s604
      %s622 = sphi 0, %s622
      %s624 = sphi 0, %s622
      %s625 = sphi 0, %s624
      %s639 = sphi 0, %s625
      %s643 = sphi 0, %s643
      %s645 = sphi 0, %s643
      %s646 = sphi 0, %s645
      %s660 = sphi 0, %s646
      %s666 = sphi 0, %s668
      %s669 = sphi 0, %s666
      %s670 = sphi 0, %s669
      %s686 = sphi 0, %s670
    $region4: #{tpu_custom_call.1} parent=1 // loop_header_branch
      %37 = sbr.rel (%p35) target = $region8
    $region5: #{tpu_custom_call.1} parent=1 // loop_body
      %s39 = ssub.s32 %s34, 1
      %s40 = ssub.s32 %s34, 2
      %s47 = sadd.s32 1, %s42
      %p48 = scmp.ge.s32.totalorder %s47, 2
      %s49 = scalar_select %p48, 0, %s47
      %s50 = sadd.s32 1, %s41
      %s51 = scalar_select %p48, %s50, %s41
      %p52 = scmp.ge.s32.totalorder %s51, 1
      %s53 = scalar_select %p52, 0, %s51
      %s54 = ssub.s32 %s41, %s53
      %p55 = scmp.eq.s32.totalorder %s54, 0
      %s57 = sadd.s32 %s56, 1
      %s58 = scalar_select %p55, %s56, %s57
      %p61 = pneg %p55
      %p62 = scmp.eq.s32.totalorder %s34, 1
      %p63 = por %p61, %p62
      %p64 = scmp.ne.s32.totalorder %s56, %s59
      %p65 = scmp.eq.s32.totalorder %s34, 0
      %p66 = por %p64, %p65
      %p67 = scmp.ne.s32.totalorder %s56, %s59
      %p68 = scmp.eq.s32.totalorder %s39, 1
      %p69 = por %p67, %p68
      %p70 = scmp.ne.s32.totalorder %s59, %s60
      %p71 = scmp.eq.s32.totalorder %s39, 0
      %p72 = por %p70, %p71
      %p73 = scmp.ne.s32.totalorder %s59, %s60
      %p74 = scmp.eq.s32.totalorder %s40, 1
      %p75 = por %p73, %p74
      %p77 = scmp.ne.s32.totalorder %s60, %s76
      %p78 = scmp.eq.s32.totalorder %s40, 0
      %p79 = por %p77, %p78
      %s81 = sadd.s32 %s80, 1
      %p84 = scmp.eq.s32.totalorder %s34, 1
      %p85 = scmp.ne.s32.totalorder %s80, %s82
      %p86 = scmp.eq.s32.totalorder %s34, 0
      %p87 = por %p85, %p86
      %p88 = scmp.ne.s32.totalorder %s80, %s82
      %p89 = scmp.eq.s32.totalorder %s39, 1
      %p90 = por %p88, %p89
      %p91 = scmp.ne.s32.totalorder %s82, %s83
      %p92 = scmp.eq.s32.totalorder %s39, 0
      %p93 = por %p91, %p92
      %p94 = scmp.ne.s32.totalorder %s82, %s83
      %p95 = scmp.eq.s32.totalorder %s40, 1
      %p96 = por %p94, %p95
      %p98 = scmp.ne.s32.totalorder %s83, %s97
      %p99 = scmp.eq.s32.totalorder %s40, 0
      %p100 = por %p98, %p99
      %s102 = sadd.s32 %s101, 1
      %p105 = scmp.eq.s32.totalorder %s34, 1
      %p106 = scmp.ne.s32.totalorder %s101, %s103
      %p107 = scmp.eq.s32.totalorder %s34, 0
      %p108 = por %p106, %p107
      %p109 = scmp.ne.s32.totalorder %s101, %s103
      %p110 = scmp.eq.s32.totalorder %s39, 1
      %p111 = por %p109, %p110
      %p112 = scmp.ne.s32.totalorder %s103, %s104
      %p113 = scmp.eq.s32.totalorder %s39, 0
      %p114 = por %p112, %p113
      %p115 = scmp.ne.s32.totalorder %s103, %s104
      %p116 = scmp.eq.s32.totalorder %s40, 1
      %p117 = por %p115, %p116
      %p119 = scmp.ne.s32.totalorder %s104, %s118
      %p120 = scmp.eq.s32.totalorder %s40, 0
      %p121 = por %p119, %p120
      %s122 = ssub.s32 %s42, %s49
      %p123 = scmp.eq.s32.totalorder %s122, 0
      %s125 = sadd.s32 %s124, 1
      %s126 = scalar_select %p123, %s124, %s125
      %p129 = pneg %p123
      %p130 = scmp.eq.s32.totalorder %s34, 1
      %p131 = por %p129, %p130
      %p132 = scmp.ne.s32.totalorder %s124, %s127
      %p133 = scmp.eq.s32.totalorder %s34, 0
      %p134 = por %p132, %p133
      %p135 = scmp.ne.s32.totalorder %s124, %s127
      %p136 = scmp.eq.s32.totalorder %s39, 1
      %p137 = por %p135, %p136
      %p138 = scmp.ne.s32.totalorder %s127, %s128
      %p139 = scmp.eq.s32.totalorder %s39, 0
      %p140 = por %p138, %p139
      %p141 = scmp.ne.s32.totalorder %s127, %s128
      %p142 = scmp.eq.s32.totalorder %s40, 1
      %p143 = por %p141, %p142
      %p145 = scmp.ne.s32.totalorder %s128, %s144
      %p146 = scmp.eq.s32.totalorder %s40, 0
      %p147 = por %p145, %p146
      %s148 = ssub.s32 %s42, %s49
      %p149 = scmp.eq.s32.totalorder %s148, 0
      %s151 = sadd.s32 %s150, 1
      %s152 = scalar_select %p149, %s150, %s151
      %p155 = pneg %p149
      %p156 = scmp.eq.s32.totalorder %s34, 1
      %p157 = por %p155, %p156
      %p158 = scmp.ne.s32.totalorder %s150, %s153
      %p159 = scmp.eq.s32.totalorder %s34, 0
      %p160 = por %p158, %p159
      %p161 = scmp.ne.s32.totalorder %s150, %s153
      %p162 = scmp.eq.s32.totalorder %s39, 1
      %p163 = por %p161, %p162
      %p164 = scmp.ne.s32.totalorder %s153, %s154
      %p165 = scmp.eq.s32.totalorder %s39, 0
      %p166 = por %p164, %p165
      %p167 = scmp.ne.s32.totalorder %s153, %s154
      %p168 = scmp.eq.s32.totalorder %s40, 1
      %p169 = por %p167, %p168
      %p171 = scmp.ne.s32.totalorder %s154, %s170
      %p172 = scmp.eq.s32.totalorder %s40, 0
      %p173 = por %p171, %p172
      %s174 = ssub.s32 %s42, %s49
      %p175 = scmp.eq.s32.totalorder %s174, 0
      %s177 = sadd.s32 %s176, 1
      %s178 = scalar_select %p175, %s176, %s177
      %p181 = pneg %p175
      %p182 = scmp.eq.s32.totalorder %s34, 1
      %p183 = por %p181, %p182
      %p184 = scmp.ne.s32.totalorder %s176, %s179
      %p185 = scmp.eq.s32.totalorder %s34, 0
      %p186 = por %p184, %p185
      %p187 = scmp.ne.s32.totalorder %s176, %s179
      %p188 = scmp.eq.s32.totalorder %s39, 1
      %p189 = por %p187, %p188
      %p190 = scmp.ne.s32.totalorder %s179, %s180
      %p191 = scmp.eq.s32.totalorder %s39, 0
      %p192 = por %p190, %p191
      %p193 = scmp.ne.s32.totalorder %s179, %s180
      %p194 = scmp.eq.s32.totalorder %s40, 1
      %p195 = por %p193, %p194
      %p197 = scmp.ne.s32.totalorder %s180, %s196
      %p198 = scmp.eq.s32.totalorder %s40, 0
      %p199 = por %p197, %p198
      %s200 = ssub.s32 %s42, %s49
      %p201 = scmp.eq.s32.totalorder %s200, 0
      %s203 = sadd.s32 %s202, 1
      %s204 = scalar_select %p201, %s202, %s203
      %p207 = pneg %p201
      %p208 = scmp.eq.s32.totalorder %s34, 1
      %p209 = por %p207, %p208
      %p210 = scmp.ne.s32.totalorder %s202, %s205
      %p211 = scmp.eq.s32.totalorder %s34, 0
      %p212 = por %p210, %p211
      %p213 = scmp.ne.s32.totalorder %s202, %s205
      %p214 = scmp.eq.s32.totalorder %s39, 1
      %p215 = por %p213, %p214
      %p216 = scmp.ne.s32.totalorder %s205, %s206
      %p217 = scmp.eq.s32.totalorder %s39, 0
      %p218 = por %p216, %p217
      %p219 = scmp.ne.s32.totalorder %s205, %s206
      %p220 = scmp.eq.s32.totalorder %s40, 1
      %p221 = por %p219, %p220
      %p223 = scmp.ne.s32.totalorder %s206, %s222
      %p224 = scmp.eq.s32.totalorder %s40, 0
      %p225 = por %p223, %p224
      %s226 = ssub.s32 %s42, %s49
      %p227 = scmp.eq.s32.totalorder %s226, 0
      %s229 = sadd.s32 %s228, 1
      %s230 = scalar_select %p227, %s228, %s229
      %p233 = pneg %p227
      %p234 = scmp.eq.s32.totalorder %s34, 1
      %p235 = por %p233, %p234
      %p236 = scmp.ne.s32.totalorder %s228, %s231
      %p237 = scmp.eq.s32.totalorder %s34, 0
      %p238 = por %p236, %p237
      %p239 = scmp.ne.s32.totalorder %s228, %s231
      %p240 = scmp.eq.s32.totalorder %s39, 1
      %p241 = por %p239, %p240
      %p242 = scmp.ne.s32.totalorder %s231, %s232
      %p243 = scmp.eq.s32.totalorder %s39, 0
      %p244 = por %p242, %p243
      %p245 = scmp.ne.s32.totalorder %s231, %s232
      %p246 = scmp.eq.s32.totalorder %s40, 1
      %p247 = por %p245, %p246
      %p249 = scmp.ne.s32.totalorder %s232, %s248
      %p250 = scmp.eq.s32.totalorder %s40, 0
      %p251 = por %p249, %p250
      %s252 = ssub.s32 %s42, %s49
      %p253 = scmp.eq.s32.totalorder %s252, 0
      %s255 = sadd.s32 %s254, 1
      %s256 = scalar_select %p253, %s254, %s255
      %p259 = pneg %p253
      %p260 = scmp.eq.s32.totalorder %s34, 1
      %p261 = por %p259, %p260
      %p262 = scmp.ne.s32.totalorder %s254, %s257
      %p263 = scmp.eq.s32.totalorder %s34, 0
      %p264 = por %p262, %p263
      %p265 = scmp.ne.s32.totalorder %s254, %s257
      %p266 = scmp.eq.s32.totalorder %s39, 1
      %p267 = por %p265, %p266
      %p268 = scmp.ne.s32.totalorder %s257, %s258
      %p269 = scmp.eq.s32.totalorder %s39, 0
      %p270 = por %p268, %p269
      %p271 = scmp.ne.s32.totalorder %s257, %s258
      %p272 = scmp.eq.s32.totalorder %s40, 1
      %p273 = por %p271, %p272
      %p275 = scmp.ne.s32.totalorder %s258, %s274
      %p276 = scmp.eq.s32.totalorder %s40, 0
      %p277 = por %p275, %p276
      %s278 = ssub.s32 %s42, %s49
      %p279 = scmp.eq.s32.totalorder %s278, 0
      %s281 = sadd.s32 %s280, 1
      %s282 = scalar_select %p279, %s280, %s281
      %p285 = pneg %p279
      %p286 = scmp.eq.s32.totalorder %s34, 1
      %p287 = por %p285, %p286
      %p288 = scmp.ne.s32.totalorder %s280, %s283
      %p289 = scmp.eq.s32.totalorder %s34, 0
      %p290 = por %p288, %p289
      %p291 = scmp.ne.s32.totalorder %s280, %s283
      %p292 = scmp.eq.s32.totalorder %s39, 1
      %p293 = por %p291, %p292
      %p294 = scmp.ne.s32.totalorder %s283, %s284
      %p295 = scmp.eq.s32.totalorder %s39, 0
      %p296 = por %p294, %p295
      %p297 = scmp.ne.s32.totalorder %s283, %s284
      %p298 = scmp.eq.s32.totalorder %s40, 1
      %p299 = por %p297, %p298
      %p301 = scmp.ne.s32.totalorder %s284, %s300
      %p302 = scmp.eq.s32.totalorder %s40, 0
      %p303 = por %p301, %p302
      %s304 = ssub.s32 %s42, %s49
      %p305 = scmp.eq.s32.totalorder %s304, 0
      %s307 = sadd.s32 %s306, 1
      %s308 = scalar_select %p305, %s306, %s307
      %p311 = pneg %p305
      %p312 = scmp.eq.s32.totalorder %s34, 1
      %p313 = por %p311, %p312
      %p314 = scmp.ne.s32.totalorder %s306, %s309
      %p315 = scmp.eq.s32.totalorder %s34, 0
      %p316 = por %p314, %p315
      %p317 = scmp.ne.s32.totalorder %s306, %s309
      %p318 = scmp.eq.s32.totalorder %s39, 1
      %p319 = por %p317, %p318
      %p320 = scmp.ne.s32.totalorder %s309, %s310
      %p321 = scmp.eq.s32.totalorder %s39, 0
      %p322 = por %p320, %p321
      %p323 = scmp.ne.s32.totalorder %s309, %s310
      %p324 = scmp.eq.s32.totalorder %s40, 1
      %p325 = por %p323, %p324
      %p327 = scmp.ne.s32.totalorder %s310, %s326
      %p328 = scmp.eq.s32.totalorder %s40, 0
      %p329 = por %p327, %p328
      %s330 = ssub.s32 %s42, %s49
      %p331 = scmp.eq.s32.totalorder %s330, 0
      %s333 = sadd.s32 %s332, 1
      %s334 = scalar_select %p331, %s332, %s333
      %p337 = pneg %p331
      %p338 = scmp.eq.s32.totalorder %s34, 1
      %p339 = por %p337, %p338
      %p340 = scmp.ne.s32.totalorder %s332, %s335
      %p341 = scmp.eq.s32.totalorder %s34, 0
      %p342 = por %p340, %p341
      %p343 = scmp.ne.s32.totalorder %s332, %s335
      %p344 = scmp.eq.s32.totalorder %s39, 1
      %p345 = por %p343, %p344
      %p346 = scmp.ne.s32.totalorder %s335, %s336
      %p347 = scmp.eq.s32.totalorder %s39, 0
      %p348 = por %p346, %p347
      %p349 = scmp.ne.s32.totalorder %s335, %s336
      %p350 = scmp.eq.s32.totalorder %s40, 1
      %p351 = por %p349, %p350
      %p353 = scmp.ne.s32.totalorder %s336, %s352
      %p354 = scmp.eq.s32.totalorder %s40, 0
      %p355 = por %p353, %p354
      %s356 = ssub.s32 %s42, %s49
      %p357 = scmp.eq.s32.totalorder %s356, 0
      %s359 = sadd.s32 %s358, 1
      %s360 = scalar_select %p357, %s358, %s359
      %p363 = pneg %p357
      %p364 = scmp.eq.s32.totalorder %s34, 1
      %p365 = por %p363, %p364
      %p366 = scmp.ne.s32.totalorder %s358, %s361
      %p367 = scmp.eq.s32.totalorder %s34, 0
      %p368 = por %p366, %p367
      %p369 = scmp.ne.s32.totalorder %s358, %s361
      %p370 = scmp.eq.s32.totalorder %s39, 1
      %p371 = por %p369, %p370
      %p372 = scmp.ne.s32.totalorder %s361, %s362
      %p373 = scmp.eq.s32.totalorder %s39, 0
      %p374 = por %p372, %p373
      %p375 = scmp.ne.s32.totalorder %s361, %s362
      %p376 = scmp.eq.s32.totalorder %s40, 1
      %p377 = por %p375, %p376
      %p379 = scmp.ne.s32.totalorder %s362, %s378
      %p380 = scmp.eq.s32.totalorder %s40, 0
      %p381 = por %p379, %p380
      %s382 = ssub.s32 %s42, %s49
      %p383 = scmp.eq.s32.totalorder %s382, 0
      %s385 = sadd.s32 %s384, 1
      %s386 = scalar_select %p383, %s384, %s385
      %p389 = pneg %p383
      %p390 = scmp.eq.s32.totalorder %s34, 1
      %p391 = por %p389, %p390
      %p392 = scmp.ne.s32.totalorder %s384, %s387
      %p393 = scmp.eq.s32.totalorder %s34, 0
      %p394 = por %p392, %p393
      %p395 = scmp.ne.s32.totalorder %s384, %s387
      %p396 = scmp.eq.s32.totalorder %s39, 1
      %p397 = por %p395, %p396
      %p398 = scmp.ne.s32.totalorder %s387, %s388
      %p399 = scmp.eq.s32.totalorder %s39, 0
      %p400 = por %p398, %p399
      %p401 = scmp.ne.s32.totalorder %s387, %s388
      %p402 = scmp.eq.s32.totalorder %s40, 1
      %p403 = por %p401, %p402
      %p405 = scmp.ne.s32.totalorder %s388, %s404
      %p406 = scmp.eq.s32.totalorder %s40, 0
      %p407 = por %p405, %p406
      %s408 = ssub.s32 %s42, %s49
      %p409 = scmp.eq.s32.totalorder %s408, 0
      %s411 = sadd.s32 %s410, 1
      %s412 = scalar_select %p409, %s410, %s411
      %p415 = pneg %p409
      %p416 = scmp.eq.s32.totalorder %s34, 1
      %p417 = por %p415, %p416
      %p418 = scmp.ne.s32.totalorder %s410, %s413
      %p419 = scmp.eq.s32.totalorder %s34, 0
      %p420 = por %p418, %p419
      %p421 = scmp.ne.s32.totalorder %s410, %s413
      %p422 = scmp.eq.s32.totalorder %s39, 1
      %p423 = por %p421, %p422
      %p424 = scmp.ne.s32.totalorder %s413, %s414
      %p425 = scmp.eq.s32.totalorder %s39, 0
      %p426 = por %p424, %p425
      %p427 = scmp.ne.s32.totalorder %s413, %s414
      %p428 = scmp.eq.s32.totalorder %s40, 1
      %p429 = por %p427, %p428
      %p431 = scmp.ne.s32.totalorder %s414, %s430
      %p432 = scmp.eq.s32.totalorder %s40, 0
      %p433 = por %p431, %p432
      %s434 = ssub.s32 %s42, %s49
      %p435 = scmp.eq.s32.totalorder %s434, 0
      %s437 = sadd.s32 %s436, 1
      %s438 = scalar_select %p435, %s436, %s437
      %p441 = pneg %p435
      %p442 = scmp.eq.s32.totalorder %s34, 1
      %p443 = por %p441, %p442
      %p444 = scmp.ne.s32.totalorder %s436, %s439
      %p445 = scmp.eq.s32.totalorder %s34, 0
      %p446 = por %p444, %p445
      %p447 = scmp.ne.s32.totalorder %s436, %s439
      %p448 = scmp.eq.s32.totalorder %s39, 1
      %p449 = por %p447, %p448
      %p450 = scmp.ne.s32.totalorder %s439, %s440
      %p451 = scmp.eq.s32.totalorder %s39, 0
      %p452 = por %p450, %p451
      %p453 = scmp.ne.s32.totalorder %s439, %s440
      %p454 = scmp.eq.s32.totalorder %s40, 1
      %p455 = por %p453, %p454
      %p457 = scmp.ne.s32.totalorder %s440, %s456
      %p458 = scmp.eq.s32.totalorder %s40, 0
      %p459 = por %p457, %p458
      %s460 = ssub.s32 %s42, %s49
      %p461 = scmp.eq.s32.totalorder %s460, 0
      %s463 = sadd.s32 %s462, 1
      %s464 = scalar_select %p461, %s462, %s463
      %p467 = pneg %p461
      %p468 = scmp.eq.s32.totalorder %s34, 1
      %p469 = por %p467, %p468
      %p470 = scmp.ne.s32.totalorder %s462, %s465
      %p471 = scmp.eq.s32.totalorder %s34, 0
      %p472 = por %p470, %p471
      %p473 = scmp.ne.s32.totalorder %s462, %s465
      %p474 = scmp.eq.s32.totalorder %s39, 1
      %p475 = por %p473, %p474
      %p476 = scmp.ne.s32.totalorder %s465, %s466
      %p477 = scmp.eq.s32.totalorder %s39, 0
      %p478 = por %p476, %p477
      %p479 = scmp.ne.s32.totalorder %s465, %s466
      %p480 = scmp.eq.s32.totalorder %s40, 1
      %p481 = por %p479, %p480
      %p483 = scmp.ne.s32.totalorder %s466, %s482
      %p484 = scmp.eq.s32.totalorder %s40, 0
      %p485 = por %p483, %p484
      %s486 = ssub.s32 %s42, %s49
      %p487 = scmp.eq.s32.totalorder %s486, 0
      %s489 = sadd.s32 %s488, 1
      %s490 = scalar_select %p487, %s488, %s489
      %p493 = pneg %p487
      %p494 = scmp.eq.s32.totalorder %s34, 1
      %p495 = por %p493, %p494
      %p496 = scmp.ne.s32.totalorder %s488, %s491
      %p497 = scmp.eq.s32.totalorder %s34, 0
      %p498 = por %p496, %p497
      %p499 = scmp.ne.s32.totalorder %s488, %s491
      %p500 = scmp.eq.s32.totalorder %s39, 1
      %p501 = por %p499, %p500
      %p502 = scmp.ne.s32.totalorder %s491, %s492
      %p503 = scmp.eq.s32.totalorder %s39, 0
      %p504 = por %p502, %p503
      %p505 = scmp.ne.s32.totalorder %s491, %s492
      %p506 = scmp.eq.s32.totalorder %s40, 1
      %p507 = por %p505, %p506
      %p509 = scmp.ne.s32.totalorder %s492, %s508
      %p510 = scmp.eq.s32.totalorder %s40, 0
      %p511 = por %p509, %p510
      %s512 = ssub.s32 %s42, %s49
      %p513 = scmp.eq.s32.totalorder %s512, 0
      %s515 = sadd.s32 %s514, 1
      %s516 = scalar_select %p513, %s514, %s515
      %p519 = pneg %p513
      %p520 = scmp.eq.s32.totalorder %s34, 1
      %p521 = por %p519, %p520
      %p522 = scmp.ne.s32.totalorder %s514, %s517
      %p523 = scmp.eq.s32.totalorder %s34, 0
      %p524 = por %p522, %p523
      %p525 = scmp.ne.s32.totalorder %s514, %s517
      %p526 = scmp.eq.s32.totalorder %s39, 1
      %p527 = por %p525, %p526
      %p528 = scmp.ne.s32.totalorder %s517, %s518
      %p529 = scmp.eq.s32.totalorder %s39, 0
      %p530 = por %p528, %p529
      %p531 = scmp.ne.s32.totalorder %s517, %s518
      %p532 = scmp.eq.s32.totalorder %s40, 1
      %p533 = por %p531, %p532
      %p535 = scmp.ne.s32.totalorder %s518, %s534
      %p536 = scmp.eq.s32.totalorder %s40, 0
      %p537 = por %p535, %p536
      %s539 = sadd.s32 %s538, 1
      %p542 = scmp.eq.s32.totalorder %s34, 1
      %p543 = scmp.ne.s32.totalorder %s538, %s540
      %p544 = scmp.eq.s32.totalorder %s34, 0
      %p545 = por %p543, %p544
      %p546 = scmp.ne.s32.totalorder %s538, %s540
      %p547 = scmp.eq.s32.totalorder %s39, 1
      %p548 = por %p546, %p547
      %p549 = scmp.ne.s32.totalorder %s540, %s541
      %p550 = scmp.eq.s32.totalorder %s39, 0
      %p551 = por %p549, %p550
      %p552 = scmp.ne.s32.totalorder %s540, %s541
      %p553 = scmp.eq.s32.totalorder %s40, 1
      %p554 = por %p552, %p553
      %p556 = scmp.ne.s32.totalorder %s541, %s555
      %p557 = scmp.eq.s32.totalorder %s40, 0
      %p558 = por %p556, %p557
      %s560 = sadd.s32 %s559, 1
      %p563 = scmp.eq.s32.totalorder %s34, 1
      %p564 = scmp.ne.s32.totalorder %s559, %s561
      %p565 = scmp.eq.s32.totalorder %s34, 0
      %p566 = por %p564, %p565
      %p567 = scmp.ne.s32.totalorder %s559, %s561
      %p568 = scmp.eq.s32.totalorder %s39, 1
      %p569 = por %p567, %p568
      %p570 = scmp.ne.s32.totalorder %s561, %s562
      %p571 = scmp.eq.s32.totalorder %s39, 0
      %p572 = por %p570, %p571
      %p573 = scmp.ne.s32.totalorder %s561, %s562
      %p574 = scmp.eq.s32.totalorder %s40, 1
      %p575 = por %p573, %p574
      %p577 = scmp.ne.s32.totalorder %s562, %s576
      %p578 = scmp.eq.s32.totalorder %s40, 0
      %p579 = por %p577, %p578
      %s581 = sadd.s32 %s580, 1
      %p584 = scmp.eq.s32.totalorder %s34, 1
      %p585 = scmp.ne.s32.totalorder %s580, %s582
      %p586 = scmp.eq.s32.totalorder %s34, 0
      %p587 = por %p585, %p586
      %p588 = scmp.ne.s32.totalorder %s580, %s582
      %p589 = scmp.eq.s32.totalorder %s39, 1
      %p590 = por %p588, %p589
      %p591 = scmp.ne.s32.totalorder %s582, %s583
      %p592 = scmp.eq.s32.totalorder %s39, 0
      %p593 = por %p591, %p592
      %p594 = scmp.ne.s32.totalorder %s582, %s583
      %p595 = scmp.eq.s32.totalorder %s40, 1
      %p596 = por %p594, %p595
      %p598 = scmp.ne.s32.totalorder %s583, %s597
      %p599 = scmp.eq.s32.totalorder %s40, 0
      %p600 = por %p598, %p599
      %s602 = sadd.s32 %s601, 1
      %p605 = scmp.eq.s32.totalorder %s34, 1
      %p606 = scmp.ne.s32.totalorder %s601, %s603
      %p607 = scmp.eq.s32.totalorder %s34, 0
      %p608 = por %p606, %p607
      %p609 = scmp.ne.s32.totalorder %s601, %s603
      %p610 = scmp.eq.s32.totalorder %s39, 1
      %p611 = por %p609, %p610
      %p612 = scmp.ne.s32.totalorder %s603, %s604
      %p613 = scmp.eq.s32.totalorder %s39, 0
      %p614 = por %p612, %p613
      %p615 = scmp.ne.s32.totalorder %s603, %s604
      %p616 = scmp.eq.s32.totalorder %s40, 1
      %p617 = por %p615, %p616
      %p619 = scmp.ne.s32.totalorder %s604, %s618
      %p620 = scmp.eq.s32.totalorder %s40, 0
      %p621 = por %p619, %p620
      %s623 = sadd.s32 %s622, 1
      %p626 = scmp.eq.s32.totalorder %s34, 1
      %p627 = scmp.ne.s32.totalorder %s622, %s624
      %p628 = scmp.eq.s32.totalorder %s34, 0
      %p629 = por %p627, %p628
      %p630 = scmp.ne.s32.totalorder %s622, %s624
      %p631 = scmp.eq.s32.totalorder %s39, 1
      %p632 = por %p630, %p631
      %p633 = scmp.ne.s32.totalorder %s624, %s625
      %p634 = scmp.eq.s32.totalorder %s39, 0
      %p635 = por %p633, %p634
      %p636 = scmp.ne.s32.totalorder %s624, %s625
      %p637 = scmp.eq.s32.totalorder %s40, 1
      %p638 = por %p636, %p637
      %p640 = scmp.ne.s32.totalorder %s625, %s639
      %p641 = scmp.eq.s32.totalorder %s40, 0
      %p642 = por %p640, %p641
      %s644 = sadd.s32 %s643, 1
      %p647 = scmp.eq.s32.totalorder %s34, 1
      %p648 = scmp.ne.s32.totalorder %s643, %s645
      %p649 = scmp.eq.s32.totalorder %s34, 0
      %p650 = por %p648, %p649
      %p651 = scmp.ne.s32.totalorder %s643, %s645
      %p652 = scmp.eq.s32.totalorder %s39, 1
      %p653 = por %p651, %p652
      %p654 = scmp.ne.s32.totalorder %s645, %s646
      %p655 = scmp.eq.s32.totalorder %s39, 0
      %p656 = por %p654, %p655
      %p657 = scmp.ne.s32.totalorder %s645, %s646
      %p658 = scmp.eq.s32.totalorder %s40, 1
      %p659 = por %p657, %p658
      %p661 = scmp.ne.s32.totalorder %s646, %s660
      %p662 = scmp.eq.s32.totalorder %s40, 0
      %p663 = por %p661, %p662
      %s664 = ssub.s32 %s41, %s53
      %p665 = scmp.eq.s32.totalorder %s664, 0
      %s667 = sadd.s32 %s666, 1
      %s668 = scalar_select %p665, %s666, %s667
      %p671 = pneg %p665
      %p672 = scmp.eq.s32.totalorder %s34, 1
      %p673 = por %p671, %p672
      %p674 = scmp.ne.s32.totalorder %s666, %s669
      %p675 = scmp.eq.s32.totalorder %s34, 0
      %p676 = por %p674, %p675
      %p677 = scmp.ne.s32.totalorder %s666, %s669
      %p678 = scmp.eq.s32.totalorder %s39, 1
      %p679 = por %p677, %p678
      %p680 = scmp.ne.s32.totalorder %s669, %s670
      %p681 = scmp.eq.s32.totalorder %s39, 0
      %p682 = por %p680, %p681
      %p683 = scmp.ne.s32.totalorder %s669, %s670
      %p684 = scmp.eq.s32.totalorder %s40, 1
      %p685 = por %p683, %p684
      %p687 = scmp.ne.s32.totalorder %s670, %s686
      %p688 = scmp.eq.s32.totalorder %s40, 0
      %p689 = por %p687, %p688
      %p690 = scmp.le.s32.totalorder 1, %s34
      %p691 = scmp.lt.s32.totalorder %s34, 3
      %p692 = pnand %p690, %p691
      %p693 = pneg %p692
      // Predicated region
      $region9: #{tpu_custom_call.1} parent=5 // pred_check
        _
      $region10: #{tpu_custom_call.1} parent=5 // pred_check_branch
        %695 = sbr.rel (%p692) target = $region12
      $region11: #{tpu_custom_call.1} parent=5 // pred_region
        %s696 = ssub.s32 %s34, 1
        // Predicated region
        $region13: #{tpu_custom_call.1} parent=11 // pred_check
          %p697 = pneg %p72
        $region14: #{tpu_custom_call.1} parent=11 // pred_check_branch
          %699 = sbr.rel (%p697) target = $region16
        $region15: #{tpu_custom_call.1} parent=11 // pred_region
          %s701 = ssub.s32 128, 128
          %702 = vsyncadd [#allocation7], %s701
          %s703 = smul.addr %s43, 128
          %s704 = scalar_lea.hbm %s0, %s703
          %s706 = sshll.u32 [#allocation6], 4
          %s707 = int_to_ptr.vmem [resolvable:$true] %s706
          %709 = dma.hbm_to_vmem [thread:$0]  %s704, 128, %s707, [#allocation7]
        $region16: #{tpu_custom_call.1} parent=11 // pred_fallthru
          _
        // Predicated region
        $region17: #{tpu_custom_call.1} parent=11 // pred_check
          %p710 = pneg %p93
        $region18: #{tpu_custom_call.1} parent=11 // pred_check_branch
          %712 = sbr.rel (%p710) target = $region20
        $region19: #{tpu_custom_call.1} parent=11 // pred_region
          %s714 = ssub.s32 128, 128
          %715 = vsyncadd [#allocation10], %s714
          %s717 = sshll.u32 [#allocation9], 4
          %s718 = int_to_ptr.vmem [resolvable:$true] %s717
          %720 = dma.hbm_to_vmem [thread:$0]  %s1, 128, %s718, [#allocation10]
        $region20: #{tpu_custom_call.1} parent=11 // pred_fallthru
          _
        // Predicated region
        $region21: #{tpu_custom_call.1} parent=11 // pred_check
          %p721 = pneg %p114
        $region22: #{tpu_custom_call.1} parent=11 // pred_check_branch
          %723 = sbr.rel (%p721) target = $region24
        $region23: #{tpu_custom_call.1} parent=11 // pred_region
          _
        $region24: #{tpu_custom_call.1} parent=11 // pred_fallthru
          _
        // Predicated region
        $region25: #{tpu_custom_call.1} parent=11 // pred_check
          %p724 = pneg %p551
        $region26: #{tpu_custom_call.1} parent=11 // pred_check_branch
          %726 = sbr.rel (%p724) target = $region28
        $region27: #{tpu_custom_call.1} parent=11 // pred_region
          _
        $region28: #{tpu_custom_call.1} parent=11 // pred_fallthru
          _
        // Predicated region
        $region29: #{tpu_custom_call.1} parent=11 // pred_check
          %p727 = pneg %p572
        $region30: #{tpu_custom_call.1} parent=11 // pred_check_branch
          %729 = sbr.rel (%p727) target = $region32
        $region31: #{tpu_custom_call.1} parent=11 // pred_region
          _
        $region32: #{tpu_custom_call.1} parent=11 // pred_fallthru
          _
        // Predicated region
        $region33: #{tpu_custom_call.1} parent=11 // pred_check
          %p730 = pneg %p593
        $region34: #{tpu_custom_call.1} parent=11 // pred_check_branch
          %732 = sbr.rel (%p730) target = $region36
        $region35: #{tpu_custom_call.1} parent=11 // pred_region
          _
        $region36: #{tpu_custom_call.1} parent=11 // pred_fallthru
          _
        // Predicated region
        $region37: #{tpu_custom_call.1} parent=11 // pred_check
          %p733 = pneg %p614
        $region38: #{tpu_custom_call.1} parent=11 // pred_check_branch
          %735 = sbr.rel (%p733) target = $region40
        $region39: #{tpu_custom_call.1} parent=11 // pred_region
          _
        $region40: #{tpu_custom_call.1} parent=11 // pred_fallthru
          _
        // Predicated region
        $region41: #{tpu_custom_call.1} parent=11 // pred_check
          %p736 = pneg %p635
        $region42: #{tpu_custom_call.1} parent=11 // pred_check_branch
          %738 = sbr.rel (%p736) target = $region44
        $region43: #{tpu_custom_call.1} parent=11 // pred_region
          _
        $region44: #{tpu_custom_call.1} parent=11 // pred_fallthru
          _
        // Predicated region
        $region45: #{tpu_custom_call.1} parent=11 // pred_check
          %p739 = pneg %p656
        $region46: #{tpu_custom_call.1} parent=11 // pred_check_branch
          %741 = sbr.rel (%p739) target = $region48
        $region47: #{tpu_custom_call.1} parent=11 // pred_region
          _
        $region48: #{tpu_custom_call.1} parent=11 // pred_fallthru
          _
      $region12: #{tpu_custom_call.1} parent=5 // pred_fallthru
        _
      %p742 = scmp.lt.s32.totalorder %s34, 2
      // Predicated region
      $region49: #{tpu_custom_call.1} parent=5 // pred_check
        %p743 = pneg %p742
      $region50: #{tpu_custom_call.1} parent=5 // pred_check_branch
        %745 = sbr.rel (%p743) target = $region52
      $region51: #{tpu_custom_call.1} parent=5 // pred_region
        // Predicated region
        $region53: #{tpu_custom_call.1} parent=51 // pred_check
          %p746 = pneg %p134
        $region54: #{tpu_custom_call.1} parent=51 // pred_check_branch
          %748 = sbr.rel (%p746) target = $region56
        $region55: #{tpu_custom_call.1} parent=51 // pred_region
          %p749 = scmp.lt.s32.totalorder %s42, 1
          %s750 = scalar_select %p749, %s42, 1
          %s751 = smul.addr %s750, 4
          %s752 = smul.addr %s751, 8
          %s753 = scalar_lea.vmem %s3, %s752
        $region56: #{tpu_custom_call.1} parent=51 // pred_fallthru
          _
        // Predicated region
        $region57: #{tpu_custom_call.1} parent=51 // pred_check
          %p754 = pneg %p160
        $region58: #{tpu_custom_call.1} parent=51 // pred_check_branch
          %756 = sbr.rel (%p754) target = $region60
        $region59: #{tpu_custom_call.1} parent=51 // pred_region
          %p757 = scmp.lt.s32.totalorder %s42, 1
          %s758 = scalar_select %p757, %s42, 1
          %s759 = scalar_lea.vmem %s4, %s758
        $region60: #{tpu_custom_call.1} parent=51 // pred_fallthru
          _
        // Predicated region
        $region61: #{tpu_custom_call.1} parent=51 // pred_check
          %p760 = pneg %p186
        $region62: #{tpu_custom_call.1} parent=51 // pred_check_branch
          %762 = sbr.rel (%p760) target = $region64
        $region63: #{tpu_custom_call.1} parent=51 // pred_region
          %p763 = scmp.lt.s32.totalorder %s42, 1
          %s764 = scalar_select %p763, %s42, 1
          %s765 = smul.addr %s764, 4
          %s766 = smul.addr %s765, 8
          %s767 = scalar_lea.vmem %s5, %s766
        $region64: #{tpu_custom_call.1} parent=51 // pred_fallthru
          _
        // Predicated region
        $region65: #{tpu_custom_call.1} parent=51 // pred_check
          %p768 = pneg %p212
        $region66: #{tpu_custom_call.1} parent=51 // pred_check_branch
          %770 = sbr.rel (%p768) target = $region68
        $region67: #{tpu_custom_call.1} parent=51 // pred_region
          %p771 = scmp.lt.s32.totalorder %s42, 1
          %s772 = scalar_select %p771, %s42, 1
          %s773 = scalar_lea.vmem %s6, %s772
        $region68: #{tpu_custom_call.1} parent=51 // pred_fallthru
          _
        // Predicated region
        $region69: #{tpu_custom_call.1} parent=51 // pred_check
          %p774 = pneg %p238
        $region70: #{tpu_custom_call.1} parent=51 // pred_check_branch
          %776 = sbr.rel (%p774) target = $region72
        $region71: #{tpu_custom_call.1} parent=51 // pred_region
          %p777 = scmp.lt.s32.totalorder %s42, 1
          %s778 = scalar_select %p777, %s42, 1
          %s779 = smul.addr %s778, 4
          %s780 = smul.addr %s779, 8
          %s781 = scalar_lea.vmem %s7, %s780
        $region72: #{tpu_custom_call.1} parent=51 // pred_fallthru
          _
        // Predicated region
        $region73: #{tpu_custom_call.1} parent=51 // pred_check
          %p782 = pneg %p264
        $region74: #{tpu_custom_call.1} parent=51 // pred_check_branch
          %784 = sbr.rel (%p782) target = $region76
        $region75: #{tpu_custom_call.1} parent=51 // pred_region
          %s785 = sand.u32 %s34, 1
          %s786 = scalar_lea.sflag [#allocation7], %s785
          %s787 = sand.u32 %s254, 1
          %s788 = scalar_lea.vmem [#allocation11], %s787
          %s790 = ssub.s32 16, 16
          %791 = vsyncadd %s786, %s790
          %s792 = smul.addr %s42, 16
          %s793 = scalar_lea.hbm %s8, %s792
          %s795 = sshll.u32 %s788, 4
          %s796 = int_to_ptr.vmem [resolvable:$true] %s795
          %798 = dma.hbm_to_vmem [thread:$0]  %s793, 16, %s796, %s786
        $region76: #{tpu_custom_call.1} parent=51 // pred_fallthru
          _
        // Predicated region
        $region77: #{tpu_custom_call.1} parent=51 // pred_check
          %p799 = pneg %p290
        $region78: #{tpu_custom_call.1} parent=51 // pred_check_branch
          %801 = sbr.rel (%p799) target = $region80
        $region79: #{tpu_custom_call.1} parent=51 // pred_region
          %s802 = sand.u32 %s34, 1
          %s803 = scalar_lea.sflag [#allocation7], %s802
          %s804 = sand.u32 %s280, 1
          %s805 = smul.addr %s804, 32
          %s806 = scalar_lea.vmem [#allocation12], %s805
          %s808 = ssub.s32 512, 512
          %809 = vsyncadd %s803, %s808
          %s810 = smul.addr %s42, 4
          %s811 = smul.addr %s810, 128
          %s812 = scalar_lea.hbm %s9, %s811
          %s813 = sshll.u32 %s806, 4
          %s814 = int_to_ptr.vmem [resolvable:$true] %s813
          %819 = dma.hbm_to_vmem [thread:$0]  %s812, 512, %s814, %s803, 128, 128, 8
        $region80: #{tpu_custom_call.1} parent=51 // pred_fallthru
          _
        // Predicated region
        $region81: #{tpu_custom_call.1} parent=51 // pred_check
          %p820 = pneg %p316
        $region82: #{tpu_custom_call.1} parent=51 // pred_check_branch
          %822 = sbr.rel (%p820) target = $region84
        $region83: #{tpu_custom_call.1} parent=51 // pred_region
          %s823 = sand.u32 %s34, 1
          %s824 = scalar_lea.sflag [#allocation7], %s823
          %s825 = sand.u32 %s306, 1
          %s826 = scalar_lea.vmem [#allocation13], %s825
          %s828 = ssub.s32 16, 16
          %829 = vsyncadd %s824, %s828
          %s830 = smul.addr %s42, 16
          %s831 = scalar_lea.hbm %s10, %s830
          %s833 = sshll.u32 %s826, 4
          %s834 = int_to_ptr.vmem [resolvable:$true] %s833
          %836 = dma.hbm_to_vmem [thread:$0]  %s831, 16, %s834, %s824
        $region84: #{tpu_custom_call.1} parent=51 // pred_fallthru
          _
        // Predicated region
        $region85: #{tpu_custom_call.1} parent=51 // pred_check
          %p837 = pneg %p342
        $region86: #{tpu_custom_call.1} parent=51 // pred_check_branch
          %839 = sbr.rel (%p837) target = $region88
        $region87: #{tpu_custom_call.1} parent=51 // pred_region
          %p840 = scmp.lt.s32.totalorder %s42, 1
          %s841 = scalar_select %p840, %s42, 1
          %s842 = scalar_lea.vmem %s11, %s841
        $region88: #{tpu_custom_call.1} parent=51 // pred_fallthru
          _
        // Predicated region
        $region89: #{tpu_custom_call.1} parent=51 // pred_check
          %p843 = pneg %p368
        $region90: #{tpu_custom_call.1} parent=51 // pred_check_branch
          %845 = sbr.rel (%p843) target = $region92
        $region91: #{tpu_custom_call.1} parent=51 // pred_region
          %p846 = scmp.lt.s32.totalorder %s42, 1
          %s847 = scalar_select %p846, %s42, 1
          %s848 = scalar_lea.vmem %s12, %s847
        $region92: #{tpu_custom_call.1} parent=51 // pred_fallthru
          _
        // Predicated region
        $region93: #{tpu_custom_call.1} parent=51 // pred_check
          %p849 = pneg %p394
        $region94: #{tpu_custom_call.1} parent=51 // pred_check_branch
          %851 = sbr.rel (%p849) target = $region96
        $region95: #{tpu_custom_call.1} parent=51 // pred_region
          %s852 = sand.u32 %s34, 1
          %s853 = scalar_lea.sflag [#allocation7], %s852
          %s854 = sand.u32 %s384, 1
          %s855 = smul.addr %s854, 32
          %s856 = scalar_lea.vmem [#allocation14], %s855
          %s858 = ssub.s32 512, 512
          %859 = vsyncadd %s853, %s858
          %s860 = smul.addr %s42, 4
          %s861 = smul.addr %s860, 128
          %s862 = scalar_lea.hbm %s13, %s861
          %s863 = sshll.u32 %s856, 4
          %s864 = int_to_ptr.vmem [resolvable:$true] %s863
          %869 = dma.hbm_to_vmem [thread:$0]  %s862, 512, %s864, %s853, 128, 128, 8
        $region96: #{tpu_custom_call.1} parent=51 // pred_fallthru
          _
        // Predicated region
        $region97: #{tpu_custom_call.1} parent=51 // pred_check
          %p870 = pneg %p420
        $region98: #{tpu_custom_call.1} parent=51 // pred_check_branch
          %872 = sbr.rel (%p870) target = $region100
        $region99: #{tpu_custom_call.1} parent=51 // pred_region
          %p873 = scmp.lt.s32.totalorder %s42, 1
          %s874 = scalar_select %p873, %s42, 1
          %s875 = scalar_lea.vmem %s14, %s874
        $region100: #{tpu_custom_call.1} parent=51 // pred_fallthru
          _
        // Predicated region
        $region101: #{tpu_custom_call.1} parent=51 // pred_check
          %p876 = pneg %p446
        $region102: #{tpu_custom_call.1} parent=51 // pred_check_branch
          %878 = sbr.rel (%p876) target = $region104
        $region103: #{tpu_custom_call.1} parent=51 // pred_region
          %p879 = scmp.lt.s32.totalorder %s42, 1
          %s880 = scalar_select %p879, %s42, 1
          %s881 = smul.addr %s880, 16
          %s882 = smul.addr %s881, 8
          %s883 = scalar_lea.vmem %s15, %s882
        $region104: #{tpu_custom_call.1} parent=51 // pred_fallthru
          _
        // Predicated region
        $region105: #{tpu_custom_call.1} parent=51 // pred_check
          %p884 = pneg %p472
        $region106: #{tpu_custom_call.1} parent=51 // pred_check_branch
          %886 = sbr.rel (%p884) target = $region108
        $region107: #{tpu_custom_call.1} parent=51 // pred_region
          %p887 = scmp.lt.s32.totalorder %s42, 1
          %s888 = scalar_select %p887, %s42, 1
          %s889 = scalar_lea.vmem %s16, %s888
        $region108: #{tpu_custom_call.1} parent=51 // pred_fallthru
          _
        // Predicated region
        $region109: #{tpu_custom_call.1} parent=51 // pred_check
          %p890 = pneg %p498
        $region110: #{tpu_custom_call.1} parent=51 // pred_check_branch
          %892 = sbr.rel (%p890) target = $region112
        $region111: #{tpu_custom_call.1} parent=51 // pred_region
          %p893 = scmp.lt.s32.totalorder %s42, 1
          %s894 = scalar_select %p893, %s42, 1
          %s895 = scalar_lea.vmem %s17, %s894
        $region112: #{tpu_custom_call.1} parent=51 // pred_fallthru
          _
        // Predicated region
        $region113: #{tpu_custom_call.1} parent=51 // pred_check
          %p896 = pneg %p524
        $region114: #{tpu_custom_call.1} parent=51 // pred_check_branch
          %898 = sbr.rel (%p896) target = $region116
        $region115: #{tpu_custom_call.1} parent=51 // pred_region
          %p899 = scmp.lt.s32.totalorder %s42, 1
          %s900 = scalar_select %p899, %s42, 1
          %s901 = scalar_lea.vmem %s18, %s900
        $region116: #{tpu_custom_call.1} parent=51 // pred_fallthru
          _
      $region52: #{tpu_custom_call.1} parent=5 // pred_fallthru
        _
      %p902 = scmp.le.s32.totalorder 1, %s34
      %p903 = scmp.lt.s32.totalorder %s34, 3
      %p904 = pnand %p902, %p903
      %p905 = pneg %p904
      // Predicated region
      $region117: #{tpu_custom_call.1} parent=5 // pred_check
        _
      $region118: #{tpu_custom_call.1} parent=5 // pred_check_branch
        %907 = sbr.rel (%p904) target = $region120
      $region119: #{tpu_custom_call.1} parent=5 // pred_region
        %s908 = ssub.s32 %s34, 1
        // Predicated region
        $region121: #{tpu_custom_call.1} parent=119 // pred_check
          %p909 = pneg %p72
        $region122: #{tpu_custom_call.1} parent=119 // pred_check_branch
          %911 = sbr.rel (%p909) target = $region124
        $region123: #{tpu_custom_call.1} parent=119 // pred_region
          %912 = dma.done [#allocation7], 128
        $region124: #{tpu_custom_call.1} parent=119 // pred_fallthru
          _
        // Predicated region
        $region125: #{tpu_custom_call.1} parent=119 // pred_check
          %p913 = pneg %p93
        $region126: #{tpu_custom_call.1} parent=119 // pred_check_branch
          %915 = sbr.rel (%p913) target = $region128
        $region127: #{tpu_custom_call.1} parent=119 // pred_region
          %916 = dma.done [#allocation10], 128
        $region128: #{tpu_custom_call.1} parent=119 // pred_fallthru
          _
        %s917 = sand.u32 %s39, 1
        %s918 = scalar_lea.sflag [#allocation7], %s917
        %s919 = sand.u32 %s257, 1
        %s920 = scalar_lea.vmem [#allocation11], %s919
        // Predicated region
        $region129: #{tpu_custom_call.1} parent=119 // pred_check
          %p921 = pneg %p270
        $region130: #{tpu_custom_call.1} parent=119 // pred_check_branch
          %923 = sbr.rel (%p921) target = $region132
        $region131: #{tpu_custom_call.1} parent=119 // pred_region
          %924 = dma.done %s918, 16
        $region132: #{tpu_custom_call.1} parent=119 // pred_fallthru
          _
        %s925 = sand.u32 %s39, 1
        %s926 = scalar_lea.sflag [#allocation7], %s925
        %s927 = sand.u32 %s283, 1
        %s928 = smul.addr %s927, 32
        %s929 = scalar_lea.vmem [#allocation12], %s928
        // Predicated region
        $region133: #{tpu_custom_call.1} parent=119 // pred_check
          %p930 = pneg %p296
        $region134: #{tpu_custom_call.1} parent=119 // pred_check_branch
          %932 = sbr.rel (%p930) target = $region136
        $region135: #{tpu_custom_call.1} parent=119 // pred_region
          %933 = dma.done %s926, 512
        $region136: #{tpu_custom_call.1} parent=119 // pred_fallthru
          _
        %s934 = sand.u32 %s39, 1
        %s935 = scalar_lea.sflag [#allocation7], %s934
        %s936 = sand.u32 %s309, 1
        %s937 = scalar_lea.vmem [#allocation13], %s936
        // Predicated region
        $region137: #{tpu_custom_call.1} parent=119 // pred_check
          %p938 = pneg %p322
        $region138: #{tpu_custom_call.1} parent=119 // pred_check_branch
          %940 = sbr.rel (%p938) target = $region140
        $region139: #{tpu_custom_call.1} parent=119 // pred_region
          %941 = dma.done %s935, 16
        $region140: #{tpu_custom_call.1} parent=119 // pred_fallthru
          _
        %s942 = sand.u32 %s39, 1
        %s943 = scalar_lea.sflag [#allocation7], %s942
        %s944 = sand.u32 %s387, 1
        %s945 = smul.addr %s944, 32
        %s946 = scalar_lea.vmem [#allocation14], %s945
        // Predicated region
        $region141: #{tpu_custom_call.1} parent=119 // pred_check
          %p947 = pneg %p400
        $region142: #{tpu_custom_call.1} parent=119 // pred_check_branch
          %949 = sbr.rel (%p947) target = $region144
        $region143: #{tpu_custom_call.1} parent=119 // pred_region
          %950 = dma.done %s943, 512
        $region144: #{tpu_custom_call.1} parent=119 // pred_fallthru
          _
        %p951 = pneg %p72
        %p952 = pneg %p69
        %p953 = pneg %p93
        %p954 = pneg %p90
        %p955 = pneg %p114
        %p956 = pneg %p111
        %p957 = scmp.lt.s32.totalorder %s44, 1
        %s958 = scalar_select %p957, %s44, 1
        %s959 = smul.addr %s958, 4
        %s960 = smul.addr %s959, 8
        %s961 = scalar_lea.vmem %s3, %s960
        %p962 = pneg %p140
        %p963 = pneg %p137
        %p964 = scmp.lt.s32.totalorder %s44, 1
        %s965 = scalar_select %p964, %s44, 1
        %s966 = scalar_lea.vmem %s4, %s965
        %p967 = pneg %p166
        %p968 = pneg %p163
        %p969 = scmp.lt.s32.totalorder %s44, 1
        %s970 = scalar_select %p969, %s44, 1
        %s971 = smul.addr %s970, 4
        %s972 = smul.addr %s971, 8
        %s973 = scalar_lea.vmem %s5, %s972
        %p974 = pneg %p192
        %p975 = pneg %p189
        %p976 = scmp.lt.s32.totalorder %s44, 1
        %s977 = scalar_select %p976, %s44, 1
        %s978 = scalar_lea.vmem %s6, %s977
        %p979 = pneg %p218
        %p980 = pneg %p215
        %p981 = scmp.lt.s32.totalorder %s44, 1
        %s982 = scalar_select %p981, %s44, 1
        %s983 = smul.addr %s982, 4
        %s984 = smul.addr %s983, 8
        %s985 = scalar_lea.vmem %s7, %s984
        %p986 = pneg %p244
        %p987 = pneg %p241
        %s988 = sand.u32 %s39, 1
        %s989 = scalar_lea.sflag [#allocation7], %s988
        %s990 = sand.u32 %s257, 1
        %s991 = scalar_lea.vmem [#allocation11], %s990
        %p992 = pneg %p270
        %p993 = pneg %p267
        %s994 = sand.u32 %s39, 1
        %s995 = scalar_lea.sflag [#allocation7], %s994
        %s996 = sand.u32 %s283, 1
        %s997 = smul.addr %s996, 32
        %s998 = scalar_lea.vmem [#allocation12], %s997
        %p999 = pneg %p296
        %p1000 = pneg %p293
        %s1001 = sand.u32 %s39, 1
        %s1002 = scalar_lea.sflag [#allocation7], %s1001
        %s1003 = sand.u32 %s309, 1
        %s1004 = scalar_lea.vmem [#allocation13], %s1003
        %p1005 = pneg %p322
        %p1006 = pneg %p319
        %p1007 = scmp.lt.s32.totalorder %s44, 1
        %s1008 = scalar_select %p1007, %s44, 1
        %s1009 = scalar_lea.vmem %s11, %s1008
        %p1010 = pneg %p348
        %p1011 = pneg %p345
        %p1012 = scmp.lt.s32.totalorder %s44, 1
        %s1013 = scalar_select %p1012, %s44, 1
        %s1014 = scalar_lea.vmem %s12, %s1013
        %p1015 = pneg %p374
        %p1016 = pneg %p371
        %s1017 = sand.u32 %s39, 1
        %s1018 = scalar_lea.sflag [#allocation7], %s1017
        %s1019 = sand.u32 %s387, 1
        %s1020 = smul.addr %s1019, 32
        %s1021 = scalar_lea.vmem [#allocation14], %s1020
        %p1022 = pneg %p400
        %p1023 = pneg %p397
        %p1024 = scmp.lt.s32.totalorder %s44, 1
        %s1025 = scalar_select %p1024, %s44, 1
        %s1026 = scalar_lea.vmem %s14, %s1025
        %p1027 = pneg %p426
        %p1028 = pneg %p423
        %p1029 = scmp.lt.s32.totalorder %s44, 1
        %s1030 = scalar_select %p1029, %s44, 1
        %s1031 = smul.addr %s1030, 16
        %s1032 = smul.addr %s1031, 8
        %s1033 = scalar_lea.vmem %s15, %s1032
        %p1034 = pneg %p452
        %p1035 = pneg %p449
        %p1036 = scmp.lt.s32.totalorder %s44, 1
        %s1037 = scalar_select %p1036, %s44, 1
        %s1038 = scalar_lea.vmem %s16, %s1037
        %p1039 = pneg %p478
        %p1040 = pneg %p475
        %p1041 = scmp.lt.s32.totalorder %s44, 1
        %s1042 = scalar_select %p1041, %s44, 1
        %s1043 = scalar_lea.vmem %s17, %s1042
        %p1044 = pneg %p504
        %p1045 = pneg %p501
        %p1046 = scmp.lt.s32.totalorder %s44, 1
        %s1047 = scalar_select %p1046, %s44, 1
        %s1048 = scalar_lea.vmem %s18, %s1047
        %p1049 = pneg %p530
        %p1050 = pneg %p527
        %p1051 = pneg %p551
        %p1052 = pneg %p548
        %p1053 = pneg %p572
        %p1054 = pneg %p569
        %p1055 = pneg %p593
        %p1056 = pneg %p590
        %p1057 = pneg %p614
        %p1058 = pneg %p611
        %p1059 = pneg %p635
        %p1060 = pneg %p632
        %p1061 = pneg %p656
        %p1062 = pneg %p653
        %p1063 = pneg %p682
        %p1064 = pneg %p679
        %p1065 = scmp.lt.s32.totalorder %s44, 1
        %s1066 = scalar_select %p1065, %s44, 1
        %s1067 = smul.addr %s1066, 4
        %s1068 = smul.addr %s1067, 8
        %s1069 = scalar_lea.vmem %s3, %s1068
        %p1070 = scmp.lt.s32.totalorder %s44, 1
        %s1071 = scalar_select %p1070, %s44, 1
        %s1072 = scalar_lea.vmem %s4, %s1071
        %p1073 = scmp.lt.s32.totalorder %s44, 1
        %s1074 = scalar_select %p1073, %s44, 1
        %s1075 = smul.addr %s1074, 4
        %s1076 = smul.addr %s1075, 8
        %s1077 = scalar_lea.vmem %s5, %s1076
        %p1078 = scmp.lt.s32.totalorder %s44, 1
        %s1079 = scalar_select %p1078, %s44, 1
        %s1080 = scalar_lea.vmem %s6, %s1079
        %p1081 = scmp.lt.s32.totalorder %s44, 1
        %s1082 = scalar_select %p1081, %s44, 1
        %s1083 = smul.addr %s1082, 4
        %s1084 = smul.addr %s1083, 8
        %s1085 = scalar_lea.vmem %s7, %s1084
        %p1086 = scmp.lt.s32.totalorder %s44, 1
        %s1087 = scalar_select %p1086, %s44, 1
        %s1088 = scalar_lea.vmem %s11, %s1087
        %p1089 = scmp.lt.s32.totalorder %s44, 1
        %s1090 = scalar_select %p1089, %s44, 1
        %s1091 = scalar_lea.vmem %s12, %s1090
        %p1092 = scmp.lt.s32.totalorder %s44, 1
        %s1093 = scalar_select %p1092, %s44, 1
        %s1094 = scalar_lea.vmem %s14, %s1093
        %p1095 = scmp.lt.s32.totalorder %s44, 1
        %s1096 = scalar_select %p1095, %s44, 1
        %s1097 = smul.addr %s1096, 16
        %s1098 = smul.addr %s1097, 8
        %s1099 = scalar_lea.vmem %s15, %s1098
        %p1100 = scmp.lt.s32.totalorder %s44, 1
        %s1101 = scalar_select %p1100, %s44, 1
        %s1102 = scalar_lea.vmem %s16, %s1101
        %p1103 = scmp.lt.s32.totalorder %s44, 1
        %s1104 = scalar_select %p1103, %s44, 1
        %s1105 = scalar_lea.vmem %s17, %s1104
        %p1106 = scmp.lt.s32.totalorder %s44, 1
        %s1107 = scalar_select %p1106, %s44, 1
        %s1108 = scalar_lea.vmem %s18, %s1107
        %p1109 = scmp.eq.s32.totalorder %s44, 0
        // Predicated region
        $region145: #{tpu_custom_call.1} parent=119 // pred_check
          %p1110 = pneg %p1109
        $region146: #{tpu_custom_call.1} parent=119 // pred_check_branch
          %1112 = sbr.rel (%p1110) target = $region148
        $region147: #{tpu_custom_call.1} parent=119 // pred_region
          %v1113 = vld [vmem:[#allocation6] sm:$0xff]
          %vm1114 = vcmask 64512
          %v1115 = vsel %vm1114, %v1113, 0.0
          %1116 = vadd.xlane.f32.xlu0 %v1115
          %v1117 = vpop.xlane.xlu0 %1116
          %v1118 = vrcp.pop 8.0
          %v1119 = vmul.f32 %v1117, %v1118
          %v1120 = vsub.f32 %v1113, %v1119
          %v1121 = vmul.f32 %v1120, %v1120
          %v1122 = vsel %vm1114, %v1121, 0.0
          %1123 = vadd.xlane.f32.xlu0 %v1122
          %v1124 = vpop.xlane.xlu0 %1123
          %v1125 = vmul.f32 %v1124, %v1118
          %vm1126 = vcmask 7168
          %1127 = vst.msk [vmem:[#allocation2] sm:$0xff] %vm1126, %v1119
          %v1128 = vadd.f32 %v1125, 1e-05
          %v1129 = vrsqrt.pop %v1128
          %v1130 = vmul.f32 %v1128, %v1129
          %vm1131 = vcmp.eq.f32.partialorder %v1128, inf
          %v1132 = vsel %vm1131, %v1128, %v1130
          %vm1133 = vcmp.eq.f32.partialorder %v1128, 0.0
          %v1134 = vand.u32 %v1128, 2147483648
          %v1135 = vsel %vm1133, %v1134, %v1132
          %1136 = vst.msk [vmem:[#allocation3] sm:$0xff] %vm1126, %v1135
          %v1137 = vrsqrt.pop %v1128
          %v1138 = vmul.f32 %v1120, %v1137
          %v1139 = vld [vmem:[#allocation9] sm:$0xff]
          %v1140 = vld [vmem:[%s2] sm:$0x1]
          %v1142 = vlaneseq
          %v1143 = vshrl.u32 %v1142, 7
          %v1144 = vsub.s32 0, %v1143
          %v1145 = vrot.slane %v1140, %v1144
          %v1148 = vsel %vm1114, %v1138, 0
          %1150 = vmatprep.subr.mxu0 0.0
          %1151 = vmatpush1.msra.mxu0 %v1139
          %1152 = vmatprep.subr.mxu0 0.0
          %1153 = vmatpush1.msra.mxu0 0.0
          %1154 = vmatprep.subr.mxu0 0.0
          %1155 = vmatpush1.msra.mxu0 0.0
          %1156 = vmatprep.subr.mxu0 0.0
          %1157 = vmatpush1.msra.mxu0 0.0
          %1158 = vmatprep.subr.mxu0 0.0
          %1159 = vmatpush1.msra.mxu0 0.0
          %1160 = vmatprep.subr.mxu0 0.0
          %1161 = vmatpush1.msra.mxu0 0.0
          %1162 = vmatprep.subr.mxu0 0.0
          %1163 = vmatpush1.msra.mxu0 0.0
          %1164 = vmatprep.subr.mxu0 0.0
          %1165 = vmatpush1.msra.mxu0 0.0
          %1166 = vmatprep.subr.mxu0 0.0
          %1167 = vmatpush1.msra.mxu0 0.0
          %1168 = vmatprep.subr.mxu0 0.0
          %1169 = vmatpush1.msra.mxu0 0.0
          %1170 = vmatprep.subr.mxu0 0.0
          %1171 = vmatpush1.msra.mxu0 0.0
          %1172 = vmatprep.subr.mxu0 0.0
          %1173 = vmatpush1.msra.mxu0 0.0
          %1174 = vmatprep.subr.mxu0 0.0
          %1175 = vmatpush1.msra.mxu0 0.0
          %1176 = vmatprep.subr.mxu0 0.0
          %1177 = vmatpush1.msra.mxu0 0.0
          %1178 = vmatprep.subr.mxu0 0.0
          %1179 = vmatpush1.msra.mxu0 0.0
          %1180 = vmatprep.subr.mxu0 0.0
          %1181 = vmatpush1.msra.mxu0 0.0
          %1182 = vmatprep.subr.mxu0 0.0
          %1183 = vmatpush1.msra.mxu0 0.0
          %1184 = vmatprep.subr.mxu0 0.0
          %1185 = vmatpush1.msra.mxu0 0.0
          %1186 = vmatprep.subr.mxu0 0.0
          %1187 = vmatpush1.msra.mxu0 0.0
          %1188 = vmatprep.subr.mxu0 0.0
          %1189 = vmatpush1.msra.mxu0 0.0
          %1190 = vmatprep.subr.mxu0 0.0
          %1191 = vmatpush1.msra.mxu0 0.0
          %1192 = vmatprep.subr.mxu0 0.0
          %1193 = vmatpush1.msra.mxu0 0.0
          %1194 = vmatprep.subr.mxu0 0.0
          %1195 = vmatpush1.msra.mxu0 0.0
          %1196 = vmatprep.subr.mxu0 0.0
          %1197 = vmatpush1.msra.mxu0 0.0
          %1198 = vmatprep.subr.mxu0 0.0
          %1199 = vmatpush1.msra.mxu0 0.0
          %1200 = vmatprep.subr.mxu0 0.0
          %1201 = vmatpush1.msra.mxu0 0.0
          %1202 = vmatprep.subr.mxu0 0.0
          %1203 = vmatpush1.msra.mxu0 0.0
          %1204 = vmatprep.subr.mxu0 0.0
          %1205 = vmatpush1.msra.mxu0 0.0
          %1206 = vmatprep.subr.mxu0 0.0
          %1207 = vmatpush1.msra.mxu0 0.0
          %1208 = vmatprep.subr.mxu0 0.0
          %1209 = vmatpush1.msra.mxu0 0.0
          %1210 = vmatprep.subr.mxu0 0.0
          %1211 = vmatpush1.msra.mxu0 0.0
          %1212 = vmatprep.subr.mxu0 0.0
          %1213 = vmatpush1.msra.mxu0 0.0
          %1214 = vmatprep.mubr.f32.mxu0 0.0
          %1215 = vmatmul.mubr.f32.gmra.mrb[0].mxu0 %v1148
          %v1216 = vpop.f32.mrb[0].mxu0
          %v1217 = vadd.f32 %v1145, %v1216
          %v1218 = vpop.f32.mrb[0].mxu0
          %1219 = vdwg.mxu0
          %vm1220 = vcmask 261120
          %1221 = vst.msk [vmem:[#allocation4] sm:$0xff] %vm1220, %v1217
        $region148: #{tpu_custom_call.1} parent=119 // pred_fallthru
          _
        %v1222 = vld [vmem:[#allocation4] sm:$0xff]
        %v1223 = vld [vmem:[%s1069] sm:$0xff]
        %v1224 = vld [vmem:[%s1069 + $0x8] sm:$0xff]
        %v1225 = vld [vmem:[%s1069 + $0x10] sm:$0xff]
        %v1226 = vld [vmem:[%s1069 + $0x18] sm:$0xff]
        %v1227 = vld [vmem:[%s1072] sm:$0x1]
        %v1229 = vlaneseq
        %v1230 = vshrl.u32 %v1229, 7
        %v1231 = vsub.s32 0, %v1230
        %v1232 = vrot.slane %v1227, %v1231
        %vm1234 = vcmask 261120
        %v1236 = vsel %vm1234, %v1222, 0
        %1238 = vmatprep.subr.mxu0 0.0
        %1239 = vmatpush1.msra.mxu0 %v1223
        %1240 = vmatprep.subr.mxu0 0.0
        %1241 = vmatpush1.msra.mxu0 %v1224
        %1242 = vmatprep.subr.mxu0 0.0
        %1243 = vmatpush1.msra.mxu0 %v1225
        %1244 = vmatprep.subr.mxu0 0.0
        %1245 = vmatpush1.msra.mxu0 %v1226
        %1246 = vmatprep.subr.mxu0 0.0
        %1247 = vmatpush1.msra.mxu0 0.0
        %1248 = vmatprep.subr.mxu0 0.0
        %1249 = vmatpush1.msra.mxu0 0.0
        %1250 = vmatprep.subr.mxu0 0.0
        %1251 = vmatpush1.msra.mxu0 0.0
        %1252 = vmatprep.subr.mxu0 0.0
        %1253 = vmatpush1.msra.mxu0 0.0
        %1254 = vmatprep.subr.mxu0 0.0
        %1255 = vmatpush1.msra.mxu0 0.0
        %1256 = vmatprep.subr.mxu0 0.0
        %1257 = vmatpush1.msra.mxu0 0.0
        %1258 = vmatprep.subr.mxu0 0.0
        %1259 = vmatpush1.msra.mxu0 0.0
        %1260 = vmatprep.subr.mxu0 0.0
        %1261 = vmatpush1.msra.mxu0 0.0
        %1262 = vmatprep.subr.mxu0 0.0
        %1263 = vmatpush1.msra.mxu0 0.0
        %1264 = vmatprep.subr.mxu0 0.0
        %1265 = vmatpush1.msra.mxu0 0.0
        %1266 = vmatprep.subr.mxu0 0.0
        %1267 = vmatpush1.msra.mxu0 0.0
        %1268 = vmatprep.subr.mxu0 0.0
        %1269 = vmatpush1.msra.mxu0 0.0
        %1270 = vmatprep.subr.mxu0 0.0
        %1271 = vmatpush1.msra.mxu0 0.0
        %1272 = vmatprep.subr.mxu0 0.0
        %1273 = vmatpush1.msra.mxu0 0.0
        %1274 = vmatprep.subr.mxu0 0.0
        %1275 = vmatpush1.msra.mxu0 0.0
        %1276 = vmatprep.subr.mxu0 0.0
        %1277 = vmatpush1.msra.mxu0 0.0
        %1278 = vmatprep.subr.mxu0 0.0
        %1279 = vmatpush1.msra.mxu0 0.0
        %1280 = vmatprep.subr.mxu0 0.0
        %1281 = vmatpush1.msra.mxu0 0.0
        %1282 = vmatprep.subr.mxu0 0.0
        %1283 = vmatpush1.msra.mxu0 0.0
        %1284 = vmatprep.subr.mxu0 0.0
        %1285 = vmatpush1.msra.mxu0 0.0
        %1286 = vmatprep.subr.mxu0 0.0
        %1287 = vmatpush1.msra.mxu0 0.0
        %1288 = vmatprep.subr.mxu0 0.0
        %1289 = vmatpush1.msra.mxu0 0.0
        %1290 = vmatprep.subr.mxu0 0.0
        %1291 = vmatpush1.msra.mxu0 0.0
        %1292 = vmatprep.subr.mxu0 0.0
        %1293 = vmatpush1.msra.mxu0 0.0
        %1294 = vmatprep.subr.mxu0 0.0
        %1295 = vmatpush1.msra.mxu0 0.0
        %1296 = vmatprep.subr.mxu0 0.0
        %1297 = vmatpush1.msra.mxu0 0.0
        %1298 = vmatprep.subr.mxu0 0.0
        %1299 = vmatpush1.msra.mxu0 0.0
        %1300 = vmatprep.subr.mxu0 0.0
        %1301 = vmatpush1.msra.mxu0 0.0
        %1302 = vmatprep.mubr.f32.mxu0 0.0
        %1303 = vmatmul.mubr.f32.gmra.mrb[0].mxu0 %v1236
        %v1304 = vpop.f32.mrb[0].mxu0
        %v1305 = vadd.f32 %v1232, %v1304
        %v1306 = vpop.f32.mrb[0].mxu0
        %1307 = vdwg.mxu0
        %v1308 = vld [vmem:[%s1077] sm:$0xff]
        %v1309 = vld [vmem:[%s1077 + $0x8] sm:$0xff]
        %v1310 = vld [vmem:[%s1077 + $0x10] sm:$0xff]
        %v1311 = vld [vmem:[%s1077 + $0x18] sm:$0xff]
        %v1312 = vld [vmem:[%s1080] sm:$0x1]
        %v1314 = vlaneseq
        %v1315 = vshrl.u32 %v1314, 7
        %v1316 = vsub.s32 0, %v1315
        %v1317 = vrot.slane %v1312, %v1316
        %1319 = vmatprep.subr.mxu0 0.0
        %1320 = vmatpush1.msra.mxu0 %v1308
        %1321 = vmatprep.subr.mxu0 0.0
        %1322 = vmatpush1.msra.mxu0 %v1309
        %1323 = vmatprep.subr.mxu0 0.0
        %1324 = vmatpush1.msra.mxu0 %v1310
        %1325 = vmatprep.subr.mxu0 0.0
        %1326 = vmatpush1.msra.mxu0 %v1311
        %1327 = vmatprep.subr.mxu0 0.0
        %1328 = vmatpush1.msra.mxu0 0.0
        %1329 = vmatprep.subr.mxu0 0.0
        %1330 = vmatpush1.msra.mxu0 0.0
        %1331 = vmatprep.subr.mxu0 0.0
        %1332 = vmatpush1.msra.mxu0 0.0
        %1333 = vmatprep.subr.mxu0 0.0
        %1334 = vmatpush1.msra.mxu0 0.0
        %1335 = vmatprep.subr.mxu0 0.0
        %1336 = vmatpush1.msra.mxu0 0.0
        %1337 = vmatprep.subr.mxu0 0.0
        %1338 = vmatpush1.msra.mxu0 0.0
        %1339 = vmatprep.subr.mxu0 0.0
        %1340 = vmatpush1.msra.mxu0 0.0
        %1341 = vmatprep.subr.mxu0 0.0
        %1342 = vmatpush1.msra.mxu0 0.0
        %1343 = vmatprep.subr.mxu0 0.0
        %1344 = vmatpush1.msra.mxu0 0.0
        %1345 = vmatprep.subr.mxu0 0.0
        %1346 = vmatpush1.msra.mxu0 0.0
        %1347 = vmatprep.subr.mxu0 0.0
        %1348 = vmatpush1.msra.mxu0 0.0
        %1349 = vmatprep.subr.mxu0 0.0
        %1350 = vmatpush1.msra.mxu0 0.0
        %1351 = vmatprep.subr.mxu0 0.0
        %1352 = vmatpush1.msra.mxu0 0.0
        %1353 = vmatprep.subr.mxu0 0.0
        %1354 = vmatpush1.msra.mxu0 0.0
        %1355 = vmatprep.subr.mxu0 0.0
        %1356 = vmatpush1.msra.mxu0 0.0
        %1357 = vmatprep.subr.mxu0 0.0
        %1358 = vmatpush1.msra.mxu0 0.0
        %1359 = vmatprep.subr.mxu0 0.0
        %1360 = vmatpush1.msra.mxu0 0.0
        %1361 = vmatprep.subr.mxu0 0.0
        %1362 = vmatpush1.msra.mxu0 0.0
        %1363 = vmatprep.subr.mxu0 0.0
        %1364 = vmatpush1.msra.mxu0 0.0
        %1365 = vmatprep.subr.mxu0 0.0
        %1366 = vmatpush1.msra.mxu0 0.0
        %1367 = vmatprep.subr.mxu0 0.0
        %1368 = vmatpush1.msra.mxu0 0.0
        %1369 = vmatprep.subr.mxu0 0.0
        %1370 = vmatpush1.msra.mxu0 0.0
        %1371 = vmatprep.subr.mxu0 0.0
        %1372 = vmatpush1.msra.mxu0 0.0
        %1373 = vmatprep.subr.mxu0 0.0
        %1374 = vmatpush1.msra.mxu0 0.0
        %1375 = vmatprep.subr.mxu0 0.0
        %1376 = vmatpush1.msra.mxu0 0.0
        %1377 = vmatprep.subr.mxu0 0.0
        %1378 = vmatpush1.msra.mxu0 0.0
        %1379 = vmatprep.subr.mxu0 0.0
        %1380 = vmatpush1.msra.mxu0 0.0
        %1381 = vmatprep.subr.mxu0 0.0
        %1382 = vmatpush1.msra.mxu0 0.0
        %1383 = vmatprep.mubr.f32.mxu0 0.0
        %1384 = vmatmul.mubr.f32.gmra.mrb[0].mxu0 %v1236
        %v1385 = vpop.f32.mrb[0].mxu0
        %v1386 = vadd.f32 %v1317, %v1385
        %v1387 = vpop.f32.mrb[0].mxu0
        %1388 = vdwg.mxu0
        %v1389 = vld [vmem:[%s1085] sm:$0xff]
        %v1390 = vld [vmem:[%s1085 + $0x8] sm:$0xff]
        %v1391 = vld [vmem:[%s1085 + $0x10] sm:$0xff]
        %v1392 = vld [vmem:[%s1085 + $0x18] sm:$0xff]
        %v1393 = vld [vmem:[%s920] sm:$0x1]
        %v1395 = vlaneseq
        %v1396 = vshrl.u32 %v1395, 7
        %v1397 = vsub.s32 0, %v1396
        %v1398 = vrot.slane %v1393, %v1397
        %1400 = vmatprep.subr.mxu0 0.0
        %1401 = vmatpush1.msra.mxu0 %v1389
        %1402 = vmatprep.subr.mxu0 0.0
        %1403 = vmatpush1.msra.mxu0 %v1390
        %1404 = vmatprep.subr.mxu0 0.0
        %1405 = vmatpush1.msra.mxu0 %v1391
        %1406 = vmatprep.subr.mxu0 0.0
        %1407 = vmatpush1.msra.mxu0 %v1392
        %1408 = vmatprep.subr.mxu0 0.0
        %1409 = vmatpush1.msra.mxu0 0.0
        %1410 = vmatprep.subr.mxu0 0.0
        %1411 = vmatpush1.msra.mxu0 0.0
        %1412 = vmatprep.subr.mxu0 0.0
        %1413 = vmatpush1.msra.mxu0 0.0
        %1414 = vmatprep.subr.mxu0 0.0
        %1415 = vmatpush1.msra.mxu0 0.0
        %1416 = vmatprep.subr.mxu0 0.0
        %1417 = vmatpush1.msra.mxu0 0.0
        %1418 = vmatprep.subr.mxu0 0.0
        %1419 = vmatpush1.msra.mxu0 0.0
        %1420 = vmatprep.subr.mxu0 0.0
        %1421 = vmatpush1.msra.mxu0 0.0
        %1422 = vmatprep.subr.mxu0 0.0
        %1423 = vmatpush1.msra.mxu0 0.0
        %1424 = vmatprep.subr.mxu0 0.0
        %1425 = vmatpush1.msra.mxu0 0.0
        %1426 = vmatprep.subr.mxu0 0.0
        %1427 = vmatpush1.msra.mxu0 0.0
        %1428 = vmatprep.subr.mxu0 0.0
        %1429 = vmatpush1.msra.mxu0 0.0
        %1430 = vmatprep.subr.mxu0 0.0
        %1431 = vmatpush1.msra.mxu0 0.0
        %1432 = vmatprep.subr.mxu0 0.0
        %1433 = vmatpush1.msra.mxu0 0.0
        %1434 = vmatprep.subr.mxu0 0.0
        %1435 = vmatpush1.msra.mxu0 0.0
        %1436 = vmatprep.subr.mxu0 0.0
        %1437 = vmatpush1.msra.mxu0 0.0
        %1438 = vmatprep.subr.mxu0 0.0
        %1439 = vmatpush1.msra.mxu0 0.0
        %1440 = vmatprep.subr.mxu0 0.0
        %1441 = vmatpush1.msra.mxu0 0.0
        %1442 = vmatprep.subr.mxu0 0.0
        %1443 = vmatpush1.msra.mxu0 0.0
        %1444 = vmatprep.subr.mxu0 0.0
        %1445 = vmatpush1.msra.mxu0 0.0
        %1446 = vmatprep.subr.mxu0 0.0
        %1447 = vmatpush1.msra.mxu0 0.0
        %1448 = vmatprep.subr.mxu0 0.0
        %1449 = vmatpush1.msra.mxu0 0.0
        %1450 = vmatprep.subr.mxu0 0.0
        %1451 = vmatpush1.msra.mxu0 0.0
        %1452 = vmatprep.subr.mxu0 0.0
        %1453 = vmatpush1.msra.mxu0 0.0
        %1454 = vmatprep.subr.mxu0 0.0
        %1455 = vmatpush1.msra.mxu0 0.0
        %1456 = vmatprep.subr.mxu0 0.0
        %1457 = vmatpush1.msra.mxu0 0.0
        %1458 = vmatprep.subr.mxu0 0.0
        %1459 = vmatpush1.msra.mxu0 0.0
        %1460 = vmatprep.subr.mxu0 0.0
        %1461 = vmatpush1.msra.mxu0 0.0
        %1462 = vmatprep.subr.mxu0 0.0
        %1463 = vmatpush1.msra.mxu0 0.0
        %1464 = vmatprep.mubr.f32.mxu0 0.0
        %1465 = vmatmul.mubr.f32.gmra.mrb[0].mxu0 %v1236
        %v1466 = vpop.f32.mrb[0].mxu0
        %v1467 = vadd.f32 %v1398, %v1466
        %v1468 = vpop.f32.mrb[0].mxu0
        %1469 = vdwg.mxu0
        %vm1470 = vcmask 31744
        %v1472 = vsel %vm1470, %v1305, 0
        %v1475 = vsel %vm1470, %v1386, 0
        %1477 = vmatprep.subr.mxu0 0.0
        %1478 = vmatpush1.xpose.msra.mxu0 %v1475
        %1479 = vmatprep.subr.mxu0 0.0
        %1480 = vmatpush1.xpose.msra.mxu0 0.0
        %1481 = vmatprep.subr.mxu0 0.0
        %1482 = vmatpush1.xpose.msra.mxu0 0.0
        %1483 = vmatprep.subr.mxu0 0.0
        %1484 = vmatpush1.xpose.msra.mxu0 0.0
        %1485 = vmatprep.subr.mxu0 0.0
        %1486 = vmatpush1.xpose.msra.mxu0 0.0
        %1487 = vmatprep.subr.mxu0 0.0
        %1488 = vmatpush1.xpose.msra.mxu0 0.0
        %1489 = vmatprep.subr.mxu0 0.0
        %1490 = vmatpush1.xpose.msra.mxu0 0.0
        %1491 = vmatprep.subr.mxu0 0.0
        %1492 = vmatpush1.xpose.msra.mxu0 0.0
        %1493 = vmatprep.subr.mxu0 0.0
        %1494 = vmatpush1.xpose.msra.mxu0 0.0
        %1495 = vmatprep.subr.mxu0 0.0
        %1496 = vmatpush1.xpose.msra.mxu0 0.0
        %1497 = vmatprep.subr.mxu0 0.0
        %1498 = vmatpush1.xpose.msra.mxu0 0.0
        %1499 = vmatprep.subr.mxu0 0.0
        %1500 = vmatpush1.xpose.msra.mxu0 0.0
        %1501 = vmatprep.subr.mxu0 0.0
        %1502 = vmatpush1.xpose.msra.mxu0 0.0
        %1503 = vmatprep.subr.mxu0 0.0
        %1504 = vmatpush1.xpose.msra.mxu0 0.0
        %1505 = vmatprep.subr.mxu0 0.0
        %1506 = vmatpush1.xpose.msra.mxu0 0.0
        %1507 = vmatprep.subr.mxu0 0.0
        %1508 = vmatpush1.xpose.msra.mxu0 0.0
        %1509 = vmatprep.subr.mxu0 0.0
        %1510 = vmatpush1.xpose.msra.mxu0 0.0
        %1511 = vmatprep.subr.mxu0 0.0
        %1512 = vmatpush1.xpose.msra.mxu0 0.0
        %1513 = vmatprep.subr.mxu0 0.0
        %1514 = vmatpush1.xpose.msra.mxu0 0.0
        %1515 = vmatprep.subr.mxu0 0.0
        %1516 = vmatpush1.xpose.msra.mxu0 0.0
        %1517 = vmatprep.subr.mxu0 0.0
        %1518 = vmatpush1.xpose.msra.mxu0 0.0
        %1519 = vmatprep.subr.mxu0 0.0
        %1520 = vmatpush1.xpose.msra.mxu0 0.0
        %1521 = vmatprep.subr.mxu0 0.0
        %1522 = vmatpush1.xpose.msra.mxu0 0.0
        %1523 = vmatprep.subr.mxu0 0.0
        %1524 = vmatpush1.xpose.msra.mxu0 0.0
        %1525 = vmatprep.subr.mxu0 0.0
        %1526 = vmatpush1.xpose.msra.mxu0 0.0
        %1527 = vmatprep.subr.mxu0 0.0
        %1528 = vmatpush1.xpose.msra.mxu0 0.0
        %1529 = vmatprep.subr.mxu0 0.0
        %1530 = vmatpush1.xpose.msra.mxu0 0.0
        %1531 = vmatprep.subr.mxu0 0.0
        %1532 = vmatpush1.xpose.msra.mxu0 0.0
        %1533 = vmatprep.subr.mxu0 0.0
        %1534 = vmatpush1.xpose.msra.mxu0 0.0
        %1535 = vmatprep.subr.mxu0 0.0
        %1536 = vmatpush1.xpose.msra.mxu0 0.0
        %1537 = vmatprep.subr.mxu0 0.0
        %1538 = vmatpush1.xpose.msra.mxu0 0.0
        %1539 = vmatprep.subr.mxu0 0.0
        %1540 = vmatpush1.xpose.msra.mxu0 0.0
        %1541 = vmatprep.mubr.f32.mxu0 0.0
        %1542 = vmatmul.mubr.f32.gmra.mrb[0].mxu0 %v1472
        %v1543 = vpop.f32.mrb[0].mxu0
        %v1544 = vadd.f32 0.0, %v1543
        %v1545 = vpop.f32.mrb[0].mxu0
        %1546 = vdwg.mxu0
        %v1547 = vmul.f32 %v1544, 0.5
        %vm1548 = vcmask 27648
        %v1549 = vsel %vm1548, %v1547, -inf
        %1550 = vmax.xlane.f32.xlu0 %v1549
        %v1551 = vpop.xlane.xlu0 %1550
        %v1552 = vsub.f32 %v1547, %v1551
        %v1553 = vmul.f32 %v1552, 1.442695
        %v1554 = vpow.pop %v1553
        %v1555 = vsel %vm1548, %v1554, 0.0
        %1556 = vadd.xlane.f32.xlu0 %v1555
        %v1557 = vpop.xlane.xlu0 %1556
        %v1558 = vrcp.pop %v1557
        %v1559 = vmul.f32 %v1554, %v1558
        %v1561 = vsel %vm1470, %v1559, 0
        %vm1563 = vcmask 1043456
        %v1565 = vsel %vm1563, %v1467, 0
        %1567 = vmatprep.subr.mxu0 0.0
        %1568 = vmatpush1.msra.mxu0 %v1565
        %1569 = vmatprep.subr.mxu0 0.0
        %1570 = vmatpush1.msra.mxu0 0.0
        %1571 = vmatprep.subr.mxu0 0.0
        %1572 = vmatpush1.msra.mxu0 0.0
        %1573 = vmatprep.subr.mxu0 0.0
        %1574 = vmatpush1.msra.mxu0 0.0
        %1575 = vmatprep.subr.mxu0 0.0
        %1576 = vmatpush1.msra.mxu0 0.0
        %1577 = vmatprep.subr.mxu0 0.0
        %1578 = vmatpush1.msra.mxu0 0.0
        %1579 = vmatprep.subr.mxu0 0.0
        %1580 = vmatpush1.msra.mxu0 0.0
        %1581 = vmatprep.subr.mxu0 0.0
        %1582 = vmatpush1.msra.mxu0 0.0
        %1583 = vmatprep.subr.mxu0 0.0
        %1584 = vmatpush1.msra.mxu0 0.0
        %1585 = vmatprep.subr.mxu0 0.0
        %1586 = vmatpush1.msra.mxu0 0.0
        %1587 = vmatprep.subr.mxu0 0.0
        %1588 = vmatpush1.msra.mxu0 0.0
        %1589 = vmatprep.subr.mxu0 0.0
        %1590 = vmatpush1.msra.mxu0 0.0
        %1591 = vmatprep.subr.mxu0 0.0
        %1592 = vmatpush1.msra.mxu0 0.0
        %1593 = vmatprep.subr.mxu0 0.0
        %1594 = vmatpush1.msra.mxu0 0.0
        %1595 = vmatprep.subr.mxu0 0.0
        %1596 = vmatpush1.msra.mxu0 0.0
        %1597 = vmatprep.subr.mxu0 0.0
        %1598 = vmatpush1.msra.mxu0 0.0
        %1599 = vmatprep.subr.mxu0 0.0
        %1600 = vmatpush1.msra.mxu0 0.0
        %1601 = vmatprep.subr.mxu0 0.0
        %1602 = vmatpush1.msra.mxu0 0.0
        %1603 = vmatprep.subr.mxu0 0.0
        %1604 = vmatpush1.msra.mxu0 0.0
        %1605 = vmatprep.subr.mxu0 0.0
        %1606 = vmatpush1.msra.mxu0 0.0
        %1607 = vmatprep.subr.mxu0 0.0
        %1608 = vmatpush1.msra.mxu0 0.0
        %1609 = vmatprep.subr.mxu0 0.0
        %1610 = vmatpush1.msra.mxu0 0.0
        %1611 = vmatprep.subr.mxu0 0.0
        %1612 = vmatpush1.msra.mxu0 0.0
        %1613 = vmatprep.subr.mxu0 0.0
        %1614 = vmatpush1.msra.mxu0 0.0
        %1615 = vmatprep.subr.mxu0 0.0
        %1616 = vmatpush1.msra.mxu0 0.0
        %1617 = vmatprep.subr.mxu0 0.0
        %1618 = vmatpush1.msra.mxu0 0.0
        %1619 = vmatprep.subr.mxu0 0.0
        %1620 = vmatpush1.msra.mxu0 0.0
        %1621 = vmatprep.subr.mxu0 0.0
        %1622 = vmatpush1.msra.mxu0 0.0
        %1623 = vmatprep.subr.mxu0 0.0
        %1624 = vmatpush1.msra.mxu0 0.0
        %1625 = vmatprep.subr.mxu0 0.0
        %1626 = vmatpush1.msra.mxu0 0.0
        %1627 = vmatprep.subr.mxu0 0.0
        %1628 = vmatpush1.msra.mxu0 0.0
        %1629 = vmatprep.subr.mxu0 0.0
        %1630 = vmatpush1.msra.mxu0 0.0
        %1631 = vmatprep.mubr.f32.mxu0 0.0
        %1632 = vmatmul.mubr.f32.gmra.mrb[0].mxu0 %v1561
        %v1633 = vpop.f32.mrb[0].mxu0
        %v1634 = vadd.f32 0.0, %v1633
        %v1635 = vpop.f32.mrb[0].mxu0
        %1636 = vdwg.mxu0
        %1637 = vst.msk [vmem:[#allocation5] sm:$0xf] %vm1548, %v1634
        %1638 = vrot.lane.b32.xlu0 %v1305, 124
        %v1639 = vpop.permute.xlu0 %1638
        %1640 = vrot.lane.b32.xlu0 %v1386, 124
        %v1641 = vpop.permute.xlu0 %1640
        %v1642 = vsel %vm1470, %v1639, 0
        %v1644 = vsel %vm1470, %v1641, 0
        %1646 = vmatprep.subr.mxu0 0.0
        %1647 = vmatpush1.xpose.msra.mxu0 %v1644
        %1648 = vmatprep.subr.mxu0 0.0
        %1649 = vmatpush1.xpose.msra.mxu0 0.0
        %1650 = vmatprep.subr.mxu0 0.0
        %1651 = vmatpush1.xpose.msra.mxu0 0.0
        %1652 = vmatprep.subr.mxu0 0.0
        %1653 = vmatpush1.xpose.msra.mxu0 0.0
        %1654 = vmatprep.subr.mxu0 0.0
        %1655 = vmatpush1.xpose.msra.mxu0 0.0
        %1656 = vmatprep.subr.mxu0 0.0
        %1657 = vmatpush1.xpose.msra.mxu0 0.0
        %1658 = vmatprep.subr.mxu0 0.0
        %1659 = vmatpush1.xpose.msra.mxu0 0.0
        %1660 = vmatprep.subr.mxu0 0.0
        %1661 = vmatpush1.xpose.msra.mxu0 0.0
        %1662 = vmatprep.subr.mxu0 0.0
        %1663 = vmatpush1.xpose.msra.mxu0 0.0
        %1664 = vmatprep.subr.mxu0 0.0
        %1665 = vmatpush1.xpose.msra.mxu0 0.0
        %1666 = vmatprep.subr.mxu0 0.0
        %1667 = vmatpush1.xpose.msra.mxu0 0.0
        %1668 = vmatprep.subr.mxu0 0.0
        %1669 = vmatpush1.xpose.msra.mxu0 0.0
        %1670 = vmatprep.subr.mxu0 0.0
        %1671 = vmatpush1.xpose.msra.mxu0 0.0
        %1672 = vmatprep.subr.mxu0 0.0
        %1673 = vmatpush1.xpose.msra.mxu0 0.0
        %1674 = vmatprep.subr.mxu0 0.0
        %1675 = vmatpush1.xpose.msra.mxu0 0.0
        %1676 = vmatprep.subr.mxu0 0.0
        %1677 = vmatpush1.xpose.msra.mxu0 0.0
        %1678 = vmatprep.subr.mxu0 0.0
        %1679 = vmatpush1.xpose.msra.mxu0 0.0
        %1680 = vmatprep.subr.mxu0 0.0
        %1681 = vmatpush1.xpose.msra.mxu0 0.0
        %1682 = vmatprep.subr.mxu0 0.0
        %1683 = vmatpush1.xpose.msra.mxu0 0.0
        %1684 = vmatprep.subr.mxu0 0.0
        %1685 = vmatpush1.xpose.msra.mxu0 0.0
        %1686 = vmatprep.subr.mxu0 0.0
        %1687 = vmatpush1.xpose.msra.mxu0 0.0
        %1688 = vmatprep.subr.mxu0 0.0
        %1689 = vmatpush1.xpose.msra.mxu0 0.0
        %1690 = vmatprep.subr.mxu0 0.0
        %1691 = vmatpush1.xpose.msra.mxu0 0.0
        %1692 = vmatprep.subr.mxu0 0.0
        %1693 = vmatpush1.xpose.msra.mxu0 0.0
        %1694 = vmatprep.subr.mxu0 0.0
        %1695 = vmatpush1.xpose.msra.mxu0 0.0
        %1696 = vmatprep.subr.mxu0 0.0
        %1697 = vmatpush1.xpose.msra.mxu0 0.0
        %1698 = vmatprep.subr.mxu0 0.0
        %1699 = vmatpush1.xpose.msra.mxu0 0.0
        %1700 = vmatprep.subr.mxu0 0.0
        %1701 = vmatpush1.xpose.msra.mxu0 0.0
        %1702 = vmatprep.subr.mxu0 0.0
        %1703 = vmatpush1.xpose.msra.mxu0 0.0
        %1704 = vmatprep.subr.mxu0 0.0
        %1705 = vmatpush1.xpose.msra.mxu0 0.0
        %1706 = vmatprep.subr.mxu0 0.0
        %1707 = vmatpush1.xpose.msra.mxu0 0.0
        %1708 = vmatprep.subr.mxu0 0.0
        %1709 = vmatpush1.xpose.msra.mxu0 0.0
        %1710 = vmatprep.mubr.f32.mxu0 0.0
        %1711 = vmatmul.mubr.f32.gmra.mrb[0].mxu0 %v1642
        %v1712 = vpop.f32.mrb[0].mxu0
        %v1713 = vadd.f32 0.0, %v1712
        %v1714 = vpop.f32.mrb[0].mxu0
        %1715 = vdwg.mxu0
        %v1716 = vmul.f32 %v1713, 0.5
        %v1717 = vsel %vm1548, %v1716, -inf
        %1718 = vmax.xlane.f32.xlu0 %v1717
        %v1719 = vpop.xlane.xlu0 %1718
        %v1720 = vsub.f32 %v1716, %v1719
        %v1721 = vmul.f32 %v1720, 1.442695
        %v1722 = vpow.pop %v1721
        %v1723 = vsel %vm1548, %v1722, 0.0
        %1724 = vadd.xlane.f32.xlu0 %v1723
        %v1725 = vpop.xlane.xlu0 %1724
        %v1726 = vrcp.pop %v1725
        %v1727 = vmul.f32 %v1722, %v1726
        %1728 = vrot.lane.b32.xlu0 %v1467, 124
        %v1729 = vpop.permute.xlu0 %1728
        %v1731 = vsel %vm1470, %v1727, 0
        %v1733 = vsel %vm1563, %v1729, 0
        %1735 = vmatprep.subr.mxu0 0.0
        %1736 = vmatpush1.msra.mxu0 %v1733
        %1737 = vmatprep.subr.mxu0 0.0
        %1738 = vmatpush1.msra.mxu0 0.0
        %1739 = vmatprep.subr.mxu0 0.0
        %1740 = vmatpush1.msra.mxu0 0.0
        %1741 = vmatprep.subr.mxu0 0.0
        %1742 = vmatpush1.msra.mxu0 0.0
        %1743 = vmatprep.subr.mxu0 0.0
        %1744 = vmatpush1.msra.mxu0 0.0
        %1745 = vmatprep.subr.mxu0 0.0
        %1746 = vmatpush1.msra.mxu0 0.0
        %1747 = vmatprep.subr.mxu0 0.0
        %1748 = vmatpush1.msra.mxu0 0.0
        %1749 = vmatprep.subr.mxu0 0.0
        %1750 = vmatpush1.msra.mxu0 0.0
        %1751 = vmatprep.subr.mxu0 0.0
        %1752 = vmatpush1.msra.mxu0 0.0
        %1753 = vmatprep.subr.mxu0 0.0
        %1754 = vmatpush1.msra.mxu0 0.0
        %1755 = vmatprep.subr.mxu0 0.0
        %1756 = vmatpush1.msra.mxu0 0.0
        %1757 = vmatprep.subr.mxu0 0.0
        %1758 = vmatpush1.msra.mxu0 0.0
        %1759 = vmatprep.subr.mxu0 0.0
        %1760 = vmatpush1.msra.mxu0 0.0
        %1761 = vmatprep.subr.mxu0 0.0
        %1762 = vmatpush1.msra.mxu0 0.0
        %1763 = vmatprep.subr.mxu0 0.0
        %1764 = vmatpush1.msra.mxu0 0.0
        %1765 = vmatprep.subr.mxu0 0.0
        %1766 = vmatpush1.msra.mxu0 0.0
        %1767 = vmatprep.subr.mxu0 0.0
        %1768 = vmatpush1.msra.mxu0 0.0
        %1769 = vmatprep.subr.mxu0 0.0
        %1770 = vmatpush1.msra.mxu0 0.0
        %1771 = vmatprep.subr.mxu0 0.0
        %1772 = vmatpush1.msra.mxu0 0.0
        %1773 = vmatprep.subr.mxu0 0.0
        %1774 = vmatpush1.msra.mxu0 0.0
        %1775 = vmatprep.subr.mxu0 0.0
        %1776 = vmatpush1.msra.mxu0 0.0
        %1777 = vmatprep.subr.mxu0 0.0
        %1778 = vmatpush1.msra.mxu0 0.0
        %1779 = vmatprep.subr.mxu0 0.0
        %1780 = vmatpush1.msra.mxu0 0.0
        %1781 = vmatprep.subr.mxu0 0.0
        %1782 = vmatpush1.msra.mxu0 0.0
        %1783 = vmatprep.subr.mxu0 0.0
        %1784 = vmatpush1.msra.mxu0 0.0
        %1785 = vmatprep.subr.mxu0 0.0
        %1786 = vmatpush1.msra.mxu0 0.0
        %1787 = vmatprep.subr.mxu0 0.0
        %1788 = vmatpush1.msra.mxu0 0.0
        %1789 = vmatprep.subr.mxu0 0.0
        %1790 = vmatpush1.msra.mxu0 0.0
        %1791 = vmatprep.subr.mxu0 0.0
        %1792 = vmatpush1.msra.mxu0 0.0
        %1793 = vmatprep.subr.mxu0 0.0
        %1794 = vmatpush1.msra.mxu0 0.0
        %1795 = vmatprep.subr.mxu0 0.0
        %1796 = vmatpush1.msra.mxu0 0.0
        %1797 = vmatprep.subr.mxu0 0.0
        %1798 = vmatpush1.msra.mxu0 0.0
        %1799 = vmatprep.mubr.f32.mxu0 0.0
        %1800 = vmatmul.mubr.f32.gmra.mrb[0].mxu0 %v1731
        %v1801 = vpop.f32.mrb[0].mxu0
        %v1802 = vadd.f32 0.0, %v1801
        %v1803 = vpop.f32.mrb[0].mxu0
        %1804 = vdwg.mxu0
        %1806 = vrot.lane.b32.xlu0 %v1802, 4
        %v1807 = vpop.permute.xlu0 %1806
        %vm1809 = vcmask 60448
        %1810 = vst.msk [vmem:[#allocation5] sm:$0xf] %vm1809, %v1807
        %1811 = vrot.lane.b32.xlu0 %v1305, 120
        %v1812 = vpop.permute.xlu0 %1811
        %1813 = vrot.lane.b32.xlu0 %v1386, 120
        %v1814 = vpop.permute.xlu0 %1813
        %v1815 = vsel %vm1470, %v1812, 0
        %v1817 = vsel %vm1470, %v1814, 0
        %1819 = vmatprep.subr.mxu0 0.0
        %1820 = vmatpush1.xpose.msra.mxu0 %v1817
        %1821 = vmatprep.subr.mxu0 0.0
        %1822 = vmatpush1.xpose.msra.mxu0 0.0
        %1823 = vmatprep.subr.mxu0 0.0
        %1824 = vmatpush1.xpose.msra.mxu0 0.0
        %1825 = vmatprep.subr.mxu0 0.0
        %1826 = vmatpush1.xpose.msra.mxu0 0.0
        %1827 = vmatprep.subr.mxu0 0.0
        %1828 = vmatpush1.xpose.msra.mxu0 0.0
        %1829 = vmatprep.subr.mxu0 0.0
        %1830 = vmatpush1.xpose.msra.mxu0 0.0
        %1831 = vmatprep.subr.mxu0 0.0
        %1832 = vmatpush1.xpose.msra.mxu0 0.0
        %1833 = vmatprep.subr.mxu0 0.0
        %1834 = vmatpush1.xpose.msra.mxu0 0.0
        %1835 = vmatprep.subr.mxu0 0.0
        %1836 = vmatpush1.xpose.msra.mxu0 0.0
        %1837 = vmatprep.subr.mxu0 0.0
        %1838 = vmatpush1.xpose.msra.mxu0 0.0
        %1839 = vmatprep.subr.mxu0 0.0
        %1840 = vmatpush1.xpose.msra.mxu0 0.0
        %1841 = vmatprep.subr.mxu0 0.0
        %1842 = vmatpush1.xpose.msra.mxu0 0.0
        %1843 = vmatprep.subr.mxu0 0.0
        %1844 = vmatpush1.xpose.msra.mxu0 0.0
        %1845 = vmatprep.subr.mxu0 0.0
        %1846 = vmatpush1.xpose.msra.mxu0 0.0
        %1847 = vmatprep.subr.mxu0 0.0
        %1848 = vmatpush1.xpose.msra.mxu0 0.0
        %1849 = vmatprep.subr.mxu0 0.0
        %1850 = vmatpush1.xpose.msra.mxu0 0.0
        %1851 = vmatprep.subr.mxu0 0.0
        %1852 = vmatpush1.xpose.msra.mxu0 0.0
        %1853 = vmatprep.subr.mxu0 0.0
        %1854 = vmatpush1.xpose.msra.mxu0 0.0
        %1855 = vmatprep.subr.mxu0 0.0
        %1856 = vmatpush1.xpose.msra.mxu0 0.0
        %1857 = vmatprep.subr.mxu0 0.0
        %1858 = vmatpush1.xpose.msra.mxu0 0.0
        %1859 = vmatprep.subr.mxu0 0.0
        %1860 = vmatpush1.xpose.msra.mxu0 0.0
        %1861 = vmatprep.subr.mxu0 0.0
        %1862 = vmatpush1.xpose.msra.mxu0 0.0
        %1863 = vmatprep.subr.mxu0 0.0
        %1864 = vmatpush1.xpose.msra.mxu0 0.0
        %1865 = vmatprep.subr.mxu0 0.0
        %1866 = vmatpush1.xpose.msra.mxu0 0.0
        %1867 = vmatprep.subr.mxu0 0.0
        %1868 = vmatpush1.xpose.msra.mxu0 0.0
        %1869 = vmatprep.subr.mxu0 0.0
        %1870 = vmatpush1.xpose.msra.mxu0 0.0
        %1871 = vmatprep.subr.mxu0 0.0
        %1872 = vmatpush1.xpose.msra.mxu0 0.0
        %1873 = vmatprep.subr.mxu0 0.0
        %1874 = vmatpush1.xpose.msra.mxu0 0.0
        %1875 = vmatprep.subr.mxu0 0.0
        %1876 = vmatpush1.xpose.msra.mxu0 0.0
        %1877 = vmatprep.subr.mxu0 0.0
        %1878 = vmatpush1.xpose.msra.mxu0 0.0
        %1879 = vmatprep.subr.mxu0 0.0
        %1880 = vmatpush1.xpose.msra.mxu0 0.0
        %1881 = vmatprep.subr.mxu0 0.0
        %1882 = vmatpush1.xpose.msra.mxu0 0.0
        %1883 = vmatprep.mubr.f32.mxu0 0.0
        %1884 = vmatmul.mubr.f32.gmra.mrb[0].mxu0 %v1815
        %v1885 = vpop.f32.mrb[0].mxu0
        %v1886 = vadd.f32 0.0, %v1885
        %v1887 = vpop.f32.mrb[0].mxu0
        %1888 = vdwg.mxu0
        %v1889 = vmul.f32 %v1886, 0.5
        %v1890 = vsel %vm1548, %v1889, -inf
        %1891 = vmax.xlane.f32.xlu0 %v1890
        %v1892 = vpop.xlane.xlu0 %1891
        %v1893 = vsub.f32 %v1889, %v1892
        %v1894 = vmul.f32 %v1893, 1.442695
        %v1895 = vpow.pop %v1894
        %v1896 = vsel %vm1548, %v1895, 0.0
        %1897 = vadd.xlane.f32.xlu0 %v1896
        %v1898 = vpop.xlane.xlu0 %1897
        %v1899 = vrcp.pop %v1898
        %v1900 = vmul.f32 %v1895, %v1899
        %1901 = vrot.lane.b32.xlu0 %v1467, 120
        %v1902 = vpop.permute.xlu0 %1901
        %v1904 = vsel %vm1470, %v1900, 0
        %v1906 = vsel %vm1563, %v1902, 0
        %1908 = vmatprep.subr.mxu0 0.0
        %1909 = vmatpush1.msra.mxu0 %v1906
        %1910 = vmatprep.subr.mxu0 0.0
        %1911 = vmatpush1.msra.mxu0 0.0
        %1912 = vmatprep.subr.mxu0 0.0
        %1913 = vmatpush1.msra.mxu0 0.0
        %1914 = vmatprep.subr.mxu0 0.0
        %1915 = vmatpush1.msra.mxu0 0.0
        %1916 = vmatprep.subr.mxu0 0.0
        %1917 = vmatpush1.msra.mxu0 0.0
        %1918 = vmatprep.subr.mxu0 0.0
        %1919 = vmatpush1.msra.mxu0 0.0
        %1920 = vmatprep.subr.mxu0 0.0
        %1921 = vmatpush1.msra.mxu0 0.0
        %1922 = vmatprep.subr.mxu0 0.0
        %1923 = vmatpush1.msra.mxu0 0.0
        %1924 = vmatprep.subr.mxu0 0.0
        %1925 = vmatpush1.msra.mxu0 0.0
        %1926 = vmatprep.subr.mxu0 0.0
        %1927 = vmatpush1.msra.mxu0 0.0
        %1928 = vmatprep.subr.mxu0 0.0
        %1929 = vmatpush1.msra.mxu0 0.0
        %1930 = vmatprep.subr.mxu0 0.0
        %1931 = vmatpush1.msra.mxu0 0.0
        %1932 = vmatprep.subr.mxu0 0.0
        %1933 = vmatpush1.msra.mxu0 0.0
        %1934 = vmatprep.subr.mxu0 0.0
        %1935 = vmatpush1.msra.mxu0 0.0
        %1936 = vmatprep.subr.mxu0 0.0
        %1937 = vmatpush1.msra.mxu0 0.0
        %1938 = vmatprep.subr.mxu0 0.0
        %1939 = vmatpush1.msra.mxu0 0.0
        %1940 = vmatprep.subr.mxu0 0.0
        %1941 = vmatpush1.msra.mxu0 0.0
        %1942 = vmatprep.subr.mxu0 0.0
        %1943 = vmatpush1.msra.mxu0 0.0
        %1944 = vmatprep.subr.mxu0 0.0
        %1945 = vmatpush1.msra.mxu0 0.0
        %1946 = vmatprep.subr.mxu0 0.0
        %1947 = vmatpush1.msra.mxu0 0.0
        %1948 = vmatprep.subr.mxu0 0.0
        %1949 = vmatpush1.msra.mxu0 0.0
        %1950 = vmatprep.subr.mxu0 0.0
        %1951 = vmatpush1.msra.mxu0 0.0
        %1952 = vmatprep.subr.mxu0 0.0
        %1953 = vmatpush1.msra.mxu0 0.0
        %1954 = vmatprep.subr.mxu0 0.0
        %1955 = vmatpush1.msra.mxu0 0.0
        %1956 = vmatprep.subr.mxu0 0.0
        %1957 = vmatpush1.msra.mxu0 0.0
        %1958 = vmatprep.subr.mxu0 0.0
        %1959 = vmatpush1.msra.mxu0 0.0
        %1960 = vmatprep.subr.mxu0 0.0
        %1961 = vmatpush1.msra.mxu0 0.0
        %1962 = vmatprep.subr.mxu0 0.0
        %1963 = vmatpush1.msra.mxu0 0.0
        %1964 = vmatprep.subr.mxu0 0.0
        %1965 = vmatpush1.msra.mxu0 0.0
        %1966 = vmatprep.subr.mxu0 0.0
        %1967 = vmatpush1.msra.mxu0 0.0
        %1968 = vmatprep.subr.mxu0 0.0
        %1969 = vmatpush1.msra.mxu0 0.0
        %1970 = vmatprep.subr.mxu0 0.0
        %1971 = vmatpush1.msra.mxu0 0.0
        %1972 = vmatprep.mubr.f32.mxu0 0.0
        %1973 = vmatmul.mubr.f32.gmra.mrb[0].mxu0 %v1904
        %v1974 = vpop.f32.mrb[0].mxu0
        %v1975 = vadd.f32 0.0, %v1974
        %v1976 = vpop.f32.mrb[0].mxu0
        %1977 = vdwg.mxu0
        %1979 = vrot.lane.b32.xlu0 %v1975, 8
        %v1980 = vpop.permute.xlu0 %1979
        %vm1982 = vcmask 93248
        %1983 = vst.msk [vmem:[#allocation5] sm:$0xf] %vm1982, %v1980
        %1984 = vrot.lane.b32.xlu0 %v1305, 116
        %v1985 = vpop.permute.xlu0 %1984
        %1986 = vrot.lane.b32.xlu0 %v1386, 116
        %v1987 = vpop.permute.xlu0 %1986
        %v1988 = vsel %vm1470, %v1985, 0
        %v1990 = vsel %vm1470, %v1987, 0
        %1992 = vmatprep.subr.mxu0 0.0
        %1993 = vmatpush1.xpose.msra.mxu0 %v1990
        %1994 = vmatprep.subr.mxu0 0.0
        %1995 = vmatpush1.xpose.msra.mxu0 0.0
        %1996 = vmatprep.subr.mxu0 0.0
        %1997 = vmatpush1.xpose.msra.mxu0 0.0
        %1998 = vmatprep.subr.mxu0 0.0
        %1999 = vmatpush1.xpose.msra.mxu0 0.0
        %2000 = vmatprep.subr.mxu0 0.0
        %2001 = vmatpush1.xpose.msra.mxu0 0.0
        %2002 = vmatprep.subr.mxu0 0.0
        %2003 = vmatpush1.xpose.msra.mxu0 0.0
        %2004 = vmatprep.subr.mxu0 0.0
        %2005 = vmatpush1.xpose.msra.mxu0 0.0
        %2006 = vmatprep.subr.mxu0 0.0
        %2007 = vmatpush1.xpose.msra.mxu0 0.0
        %2008 = vmatprep.subr.mxu0 0.0
        %2009 = vmatpush1.xpose.msra.mxu0 0.0
        %2010 = vmatprep.subr.mxu0 0.0
        %2011 = vmatpush1.xpose.msra.mxu0 0.0
        %2012 = vmatprep.subr.mxu0 0.0
        %2013 = vmatpush1.xpose.msra.mxu0 0.0
        %2014 = vmatprep.subr.mxu0 0.0
        %2015 = vmatpush1.xpose.msra.mxu0 0.0
        %2016 = vmatprep.subr.mxu0 0.0
        %2017 = vmatpush1.xpose.msra.mxu0 0.0
        %2018 = vmatprep.subr.mxu0 0.0
        %2019 = vmatpush1.xpose.msra.mxu0 0.0
        %2020 = vmatprep.subr.mxu0 0.0
        %2021 = vmatpush1.xpose.msra.mxu0 0.0
        %2022 = vmatprep.subr.mxu0 0.0
        %2023 = vmatpush1.xpose.msra.mxu0 0.0
        %2024 = vmatprep.subr.mxu0 0.0
        %2025 = vmatpush1.xpose.msra.mxu0 0.0
        %2026 = vmatprep.subr.mxu0 0.0
        %2027 = vmatpush1.xpose.msra.mxu0 0.0
        %2028 = vmatprep.subr.mxu0 0.0
        %2029 = vmatpush1.xpose.msra.mxu0 0.0
        %2030 = vmatprep.subr.mxu0 0.0
        %2031 = vmatpush1.xpose.msra.mxu0 0.0
        %2032 = vmatprep.subr.mxu0 0.0
        %2033 = vmatpush1.xpose.msra.mxu0 0.0
        %2034 = vmatprep.subr.mxu0 0.0
        %2035 = vmatpush1.xpose.msra.mxu0 0.0
        %2036 = vmatprep.subr.mxu0 0.0
        %2037 = vmatpush1.xpose.msra.mxu0 0.0
        %2038 = vmatprep.subr.mxu0 0.0
        %2039 = vmatpush1.xpose.msra.mxu0 0.0
        %2040 = vmatprep.subr.mxu0 0.0
        %2041 = vmatpush1.xpose.msra.mxu0 0.0
        %2042 = vmatprep.subr.mxu0 0.0
        %2043 = vmatpush1.xpose.msra.mxu0 0.0
        %2044 = vmatprep.subr.mxu0 0.0
        %2045 = vmatpush1.xpose.msra.mxu0 0.0
        %2046 = vmatprep.subr.mxu0 0.0
        %2047 = vmatpush1.xpose.msra.mxu0 0.0
        %2048 = vmatprep.subr.mxu0 0.0
        %2049 = vmatpush1.xpose.msra.mxu0 0.0
        %2050 = vmatprep.subr.mxu0 0.0
        %2051 = vmatpush1.xpose.msra.mxu0 0.0
        %2052 = vmatprep.subr.mxu0 0.0
        %2053 = vmatpush1.xpose.msra.mxu0 0.0
        %2054 = vmatprep.subr.mxu0 0.0
        %2055 = vmatpush1.xpose.msra.mxu0 0.0
        %2056 = vmatprep.mubr.f32.mxu0 0.0
        %2057 = vmatmul.mubr.f32.gmra.mrb[0].mxu0 %v1988
        %v2058 = vpop.f32.mrb[0].mxu0
        %v2059 = vadd.f32 0.0, %v2058
        %v2060 = vpop.f32.mrb[0].mxu0
        %2061 = vdwg.mxu0
        %v2062 = vmul.f32 %v2059, 0.5
        %v2063 = vsel %vm1548, %v2062, -inf
        %2064 = vmax.xlane.f32.xlu0 %v2063
        %v2065 = vpop.xlane.xlu0 %2064
        %v2066 = vsub.f32 %v2062, %v2065
        %v2067 = vmul.f32 %v2066, 1.442695
        %v2068 = vpow.pop %v2067
        %v2069 = vsel %vm1548, %v2068, 0.0
        %2070 = vadd.xlane.f32.xlu0 %v2069
        %v2071 = vpop.xlane.xlu0 %2070
        %v2072 = vrcp.pop %v2071
        %v2073 = vmul.f32 %v2068, %v2072
        %2074 = vrot.lane.b32.xlu0 %v1467, 116
        %v2075 = vpop.permute.xlu0 %2074
        %v2077 = vsel %vm1470, %v2073, 0
        %v2079 = vsel %vm1563, %v2075, 0
        %2081 = vmatprep.subr.mxu0 0.0
        %2082 = vmatpush1.msra.mxu0 %v2079
        %2083 = vmatprep.subr.mxu0 0.0
        %2084 = vmatpush1.msra.mxu0 0.0
        %2085 = vmatprep.subr.mxu0 0.0
        %2086 = vmatpush1.msra.mxu0 0.0
        %2087 = vmatprep.subr.mxu0 0.0
        %2088 = vmatpush1.msra.mxu0 0.0
        %2089 = vmatprep.subr.mxu0 0.0
        %2090 = vmatpush1.msra.mxu0 0.0
        %2091 = vmatprep.subr.mxu0 0.0
        %2092 = vmatpush1.msra.mxu0 0.0
        %2093 = vmatprep.subr.mxu0 0.0
        %2094 = vmatpush1.msra.mxu0 0.0
        %2095 = vmatprep.subr.mxu0 0.0
        %2096 = vmatpush1.msra.mxu0 0.0
        %2097 = vmatprep.subr.mxu0 0.0
        %2098 = vmatpush1.msra.mxu0 0.0
        %2099 = vmatprep.subr.mxu0 0.0
        %2100 = vmatpush1.msra.mxu0 0.0
        %2101 = vmatprep.subr.mxu0 0.0
        %2102 = vmatpush1.msra.mxu0 0.0
        %2103 = vmatprep.subr.mxu0 0.0
        %2104 = vmatpush1.msra.mxu0 0.0
        %2105 = vmatprep.subr.mxu0 0.0
        %2106 = vmatpush1.msra.mxu0 0.0
        %2107 = vmatprep.subr.mxu0 0.0
        %2108 = vmatpush1.msra.mxu0 0.0
        %2109 = vmatprep.subr.mxu0 0.0
        %2110 = vmatpush1.msra.mxu0 0.0
        %2111 = vmatprep.subr.mxu0 0.0
        %2112 = vmatpush1.msra.mxu0 0.0
        %2113 = vmatprep.subr.mxu0 0.0
        %2114 = vmatpush1.msra.mxu0 0.0
        %2115 = vmatprep.subr.mxu0 0.0
        %2116 = vmatpush1.msra.mxu0 0.0
        %2117 = vmatprep.subr.mxu0 0.0
        %2118 = vmatpush1.msra.mxu0 0.0
        %2119 = vmatprep.subr.mxu0 0.0
        %2120 = vmatpush1.msra.mxu0 0.0
        %2121 = vmatprep.subr.mxu0 0.0
        %2122 = vmatpush1.msra.mxu0 0.0
        %2123 = vmatprep.subr.mxu0 0.0
        %2124 = vmatpush1.msra.mxu0 0.0
        %2125 = vmatprep.subr.mxu0 0.0
        %2126 = vmatpush1.msra.mxu0 0.0
        %2127 = vmatprep.subr.mxu0 0.0
        %2128 = vmatpush1.msra.mxu0 0.0
        %2129 = vmatprep.subr.mxu0 0.0
        %2130 = vmatpush1.msra.mxu0 0.0
        %2131 = vmatprep.subr.mxu0 0.0
        %2132 = vmatpush1.msra.mxu0 0.0
        %2133 = vmatprep.subr.mxu0 0.0
        %2134 = vmatpush1.msra.mxu0 0.0
        %2135 = vmatprep.subr.mxu0 0.0
        %2136 = vmatpush1.msra.mxu0 0.0
        %2137 = vmatprep.subr.mxu0 0.0
        %2138 = vmatpush1.msra.mxu0 0.0
        %2139 = vmatprep.subr.mxu0 0.0
        %2140 = vmatpush1.msra.mxu0 0.0
        %2141 = vmatprep.subr.mxu0 0.0
        %2142 = vmatpush1.msra.mxu0 0.0
        %2143 = vmatprep.subr.mxu0 0.0
        %2144 = vmatpush1.msra.mxu0 0.0
        %2145 = vmatprep.mubr.f32.mxu0 0.0
        %2146 = vmatmul.mubr.f32.gmra.mrb[0].mxu0 %v2077
        %v2147 = vpop.f32.mrb[0].mxu0
        %v2148 = vadd.f32 0.0, %v2147
        %v2149 = vpop.f32.mrb[0].mxu0
        %2150 = vdwg.mxu0
        %2152 = vrot.lane.b32.xlu0 %v2148, 12
        %v2153 = vpop.permute.xlu0 %2152
        %vm2155 = vcmask 126048
        %2156 = vst.msk [vmem:[#allocation5] sm:$0xf] %vm2155, %v2153
        %2157 = vrot.lane.b32.xlu0 %v1305, 112
        %v2158 = vpop.permute.xlu0 %2157
        %2159 = vrot.lane.b32.xlu0 %v1386, 112
        %v2160 = vpop.permute.xlu0 %2159
        %v2161 = vsel %vm1470, %v2158, 0
        %v2163 = vsel %vm1470, %v2160, 0
        %2165 = vmatprep.subr.mxu0 0.0
        %2166 = vmatpush1.xpose.msra.mxu0 %v2163
        %2167 = vmatprep.subr.mxu0 0.0
        %2168 = vmatpush1.xpose.msra.mxu0 0.0
        %2169 = vmatprep.subr.mxu0 0.0
        %2170 = vmatpush1.xpose.msra.mxu0 0.0
        %2171 = vmatprep.subr.mxu0 0.0
        %2172 = vmatpush1.xpose.msra.mxu0 0.0
        %2173 = vmatprep.subr.mxu0 0.0
        %2174 = vmatpush1.xpose.msra.mxu0 0.0
        %2175 = vmatprep.subr.mxu0 0.0
        %2176 = vmatpush1.xpose.msra.mxu0 0.0
        %2177 = vmatprep.subr.mxu0 0.0
        %2178 = vmatpush1.xpose.msra.mxu0 0.0
        %2179 = vmatprep.subr.mxu0 0.0
        %2180 = vmatpush1.xpose.msra.mxu0 0.0
        %2181 = vmatprep.subr.mxu0 0.0
        %2182 = vmatpush1.xpose.msra.mxu0 0.0
        %2183 = vmatprep.subr.mxu0 0.0
        %2184 = vmatpush1.xpose.msra.mxu0 0.0
        %2185 = vmatprep.subr.mxu0 0.0
        %2186 = vmatpush1.xpose.msra.mxu0 0.0
        %2187 = vmatprep.subr.mxu0 0.0
        %2188 = vmatpush1.xpose.msra.mxu0 0.0
        %2189 = vmatprep.subr.mxu0 0.0
        %2190 = vmatpush1.xpose.msra.mxu0 0.0
        %2191 = vmatprep.subr.mxu0 0.0
        %2192 = vmatpush1.xpose.msra.mxu0 0.0
        %2193 = vmatprep.subr.mxu0 0.0
        %2194 = vmatpush1.xpose.msra.mxu0 0.0
        %2195 = vmatprep.subr.mxu0 0.0
        %2196 = vmatpush1.xpose.msra.mxu0 0.0
        %2197 = vmatprep.subr.mxu0 0.0
        %2198 = vmatpush1.xpose.msra.mxu0 0.0
        %2199 = vmatprep.subr.mxu0 0.0
        %2200 = vmatpush1.xpose.msra.mxu0 0.0
        %2201 = vmatprep.subr.mxu0 0.0
        %2202 = vmatpush1.xpose.msra.mxu0 0.0
        %2203 = vmatprep.subr.mxu0 0.0
        %2204 = vmatpush1.xpose.msra.mxu0 0.0
        %2205 = vmatprep.subr.mxu0 0.0
        %2206 = vmatpush1.xpose.msra.mxu0 0.0
        %2207 = vmatprep.subr.mxu0 0.0
        %2208 = vmatpush1.xpose.msra.mxu0 0.0
        %2209 = vmatprep.subr.mxu0 0.0
        %2210 = vmatpush1.xpose.msra.mxu0 0.0
        %2211 = vmatprep.subr.mxu0 0.0
        %2212 = vmatpush1.xpose.msra.mxu0 0.0
        %2213 = vmatprep.subr.mxu0 0.0
        %2214 = vmatpush1.xpose.msra.mxu0 0.0
        %2215 = vmatprep.subr.mxu0 0.0
        %2216 = vmatpush1.xpose.msra.mxu0 0.0
        %2217 = vmatprep.subr.mxu0 0.0
        %2218 = vmatpush1.xpose.msra.mxu0 0.0
        %2219 = vmatprep.subr.mxu0 0.0
        %2220 = vmatpush1.xpose.msra.mxu0 0.0
        %2221 = vmatprep.subr.mxu0 0.0
        %2222 = vmatpush1.xpose.msra.mxu0 0.0
        %2223 = vmatprep.subr.mxu0 0.0
        %2224 = vmatpush1.xpose.msra.mxu0 0.0
        %2225 = vmatprep.subr.mxu0 0.0
        %2226 = vmatpush1.xpose.msra.mxu0 0.0
        %2227 = vmatprep.subr.mxu0 0.0
        %2228 = vmatpush1.xpose.msra.mxu0 0.0
        %2229 = vmatprep.mubr.f32.mxu0 0.0
        %2230 = vmatmul.mubr.f32.gmra.mrb[0].mxu0 %v2161
        %v2231 = vpop.f32.mrb[0].mxu0
        %v2232 = vadd.f32 0.0, %v2231
        %v2233 = vpop.f32.mrb[0].mxu0
        %2234 = vdwg.mxu0
        %v2235 = vmul.f32 %v2232, 0.5
        %v2236 = vsel %vm1548, %v2235, -inf
        %2237 = vmax.xlane.f32.xlu0 %v2236
        %v2238 = vpop.xlane.xlu0 %2237
        %v2239 = vsub.f32 %v2235, %v2238
        %v2240 = vmul.f32 %v2239, 1.442695
        %v2241 = vpow.pop %v2240
        %v2242 = vsel %vm1548, %v2241, 0.0
        %2243 = vadd.xlane.f32.xlu0 %v2242
        %v2244 = vpop.xlane.xlu0 %2243
        %v2245 = vrcp.pop %v2244
        %v2246 = vmul.f32 %v2241, %v2245
        %2247 = vrot.lane.b32.xlu0 %v1467, 112
        %v2248 = vpop.permute.xlu0 %2247
        %v2250 = vsel %vm1470, %v2246, 0
        %v2252 = vsel %vm1563, %v2248, 0
        %2254 = vmatprep.subr.mxu0 0.0
        %2255 = vmatpush1.msra.mxu0 %v2252
        %2256 = vmatprep.subr.mxu0 0.0
        %2257 = vmatpush1.msra.mxu0 0.0
        %2258 = vmatprep.subr.mxu0 0.0
        %2259 = vmatpush1.msra.mxu0 0.0
        %2260 = vmatprep.subr.mxu0 0.0
        %2261 = vmatpush1.msra.mxu0 0.0
        %2262 = vmatprep.subr.mxu0 0.0
        %2263 = vmatpush1.msra.mxu0 0.0
        %2264 = vmatprep.subr.mxu0 0.0
        %2265 = vmatpush1.msra.mxu0 0.0
        %2266 = vmatprep.subr.mxu0 0.0
        %2267 = vmatpush1.msra.mxu0 0.0
        %2268 = vmatprep.subr.mxu0 0.0
        %2269 = vmatpush1.msra.mxu0 0.0
        %2270 = vmatprep.subr.mxu0 0.0
        %2271 = vmatpush1.msra.mxu0 0.0
        %2272 = vmatprep.subr.mxu0 0.0
        %2273 = vmatpush1.msra.mxu0 0.0
        %2274 = vmatprep.subr.mxu0 0.0
        %2275 = vmatpush1.msra.mxu0 0.0
        %2276 = vmatprep.subr.mxu0 0.0
        %2277 = vmatpush1.msra.mxu0 0.0
        %2278 = vmatprep.subr.mxu0 0.0
        %2279 = vmatpush1.msra.mxu0 0.0
        %2280 = vmatprep.subr.mxu0 0.0
        %2281 = vmatpush1.msra.mxu0 0.0
        %2282 = vmatprep.subr.mxu0 0.0
        %2283 = vmatpush1.msra.mxu0 0.0
        %2284 = vmatprep.subr.mxu0 0.0
        %2285 = vmatpush1.msra.mxu0 0.0
        %2286 = vmatprep.subr.mxu0 0.0
        %2287 = vmatpush1.msra.mxu0 0.0
        %2288 = vmatprep.subr.mxu0 0.0
        %2289 = vmatpush1.msra.mxu0 0.0
        %2290 = vmatprep.subr.mxu0 0.0
        %2291 = vmatpush1.msra.mxu0 0.0
        %2292 = vmatprep.subr.mxu0 0.0
        %2293 = vmatpush1.msra.mxu0 0.0
        %2294 = vmatprep.subr.mxu0 0.0
        %2295 = vmatpush1.msra.mxu0 0.0
        %2296 = vmatprep.subr.mxu0 0.0
        %2297 = vmatpush1.msra.mxu0 0.0
        %2298 = vmatprep.subr.mxu0 0.0
        %2299 = vmatpush1.msra.mxu0 0.0
        %2300 = vmatprep.subr.mxu0 0.0
        %2301 = vmatpush1.msra.mxu0 0.0
        %2302 = vmatprep.subr.mxu0 0.0
        %2303 = vmatpush1.msra.mxu0 0.0
        %2304 = vmatprep.subr.mxu0 0.0
        %2305 = vmatpush1.msra.mxu0 0.0
        %2306 = vmatprep.subr.mxu0 0.0
        %2307 = vmatpush1.msra.mxu0 0.0
        %2308 = vmatprep.subr.mxu0 0.0
        %2309 = vmatpush1.msra.mxu0 0.0
        %2310 = vmatprep.subr.mxu0 0.0
        %2311 = vmatpush1.msra.mxu0 0.0
        %2312 = vmatprep.subr.mxu0 0.0
        %2313 = vmatpush1.msra.mxu0 0.0
        %2314 = vmatprep.subr.mxu0 0.0
        %2315 = vmatpush1.msra.mxu0 0.0
        %2316 = vmatprep.subr.mxu0 0.0
        %2317 = vmatpush1.msra.mxu0 0.0
        %2318 = vmatprep.mubr.f32.mxu0 0.0
        %2319 = vmatmul.mubr.f32.gmra.mrb[0].mxu0 %v2250
        %v2320 = vpop.f32.mrb[0].mxu0
        %v2321 = vadd.f32 0.0, %v2320
        %v2322 = vpop.f32.mrb[0].mxu0
        %2323 = vdwg.mxu0
        %2325 = vrot.lane.b32.xlu0 %v2321, 16
        %v2326 = vpop.permute.xlu0 %2325
        %vm2328 = vcmask 158848
        %2329 = vst.msk [vmem:[#allocation5] sm:$0xf] %vm2328, %v2326
        %2330 = vrot.lane.b32.xlu0 %v1305, 108
        %v2331 = vpop.permute.xlu0 %2330
        %2332 = vrot.lane.b32.xlu0 %v1386, 108
        %v2333 = vpop.permute.xlu0 %2332
        %v2334 = vsel %vm1470, %v2331, 0
        %v2336 = vsel %vm1470, %v2333, 0
        %2338 = vmatprep.subr.mxu0 0.0
        %2339 = vmatpush1.xpose.msra.mxu0 %v2336
        %2340 = vmatprep.subr.mxu0 0.0
        %2341 = vmatpush1.xpose.msra.mxu0 0.0
        %2342 = vmatprep.subr.mxu0 0.0
        %2343 = vmatpush1.xpose.msra.mxu0 0.0
        %2344 = vmatprep.subr.mxu0 0.0
        %2345 = vmatpush1.xpose.msra.mxu0 0.0
        %2346 = vmatprep.subr.mxu0 0.0
        %2347 = vmatpush1.xpose.msra.mxu0 0.0
        %2348 = vmatprep.subr.mxu0 0.0
        %2349 = vmatpush1.xpose.msra.mxu0 0.0
        %2350 = vmatprep.subr.mxu0 0.0
        %2351 = vmatpush1.xpose.msra.mxu0 0.0
        %2352 = vmatprep.subr.mxu0 0.0
        %2353 = vmatpush1.xpose.msra.mxu0 0.0
        %2354 = vmatprep.subr.mxu0 0.0
        %2355 = vmatpush1.xpose.msra.mxu0 0.0
        %2356 = vmatprep.subr.mxu0 0.0
        %2357 = vmatpush1.xpose.msra.mxu0 0.0
        %2358 = vmatprep.subr.mxu0 0.0
        %2359 = vmatpush1.xpose.msra.mxu0 0.0
        %2360 = vmatprep.subr.mxu0 0.0
        %2361 = vmatpush1.xpose.msra.mxu0 0.0
        %2362 = vmatprep.subr.mxu0 0.0
        %2363 = vmatpush1.xpose.msra.mxu0 0.0
        %2364 = vmatprep.subr.mxu0 0.0
        %2365 = vmatpush1.xpose.msra.mxu0 0.0
        %2366 = vmatprep.subr.mxu0 0.0
        %2367 = vmatpush1.xpose.msra.mxu0 0.0
        %2368 = vmatprep.subr.mxu0 0.0
        %2369 = vmatpush1.xpose.msra.mxu0 0.0
        %2370 = vmatprep.subr.mxu0 0.0
        %2371 = vmatpush1.xpose.msra.mxu0 0.0
        %2372 = vmatprep.subr.mxu0 0.0
        %2373 = vmatpush1.xpose.msra.mxu0 0.0
        %2374 = vmatprep.subr.mxu0 0.0
        %2375 = vmatpush1.xpose.msra.mxu0 0.0
        %2376 = vmatprep.subr.mxu0 0.0
        %2377 = vmatpush1.xpose.msra.mxu0 0.0
        %2378 = vmatprep.subr.mxu0 0.0
        %2379 = vmatpush1.xpose.msra.mxu0 0.0
        %2380 = vmatprep.subr.mxu0 0.0
        %2381 = vmatpush1.xpose.msra.mxu0 0.0
        %2382 = vmatprep.subr.mxu0 0.0
        %2383 = vmatpush1.xpose.msra.mxu0 0.0
        %2384 = vmatprep.subr.mxu0 0.0
        %2385 = vmatpush1.xpose.msra.mxu0 0.0
        %2386 = vmatprep.subr.mxu0 0.0
        %2387 = vmatpush1.xpose.msra.mxu0 0.0
        %2388 = vmatprep.subr.mxu0 0.0
        %2389 = vmatpush1.xpose.msra.mxu0 0.0
        %2390 = vmatprep.subr.mxu0 0.0
        %2391 = vmatpush1.xpose.msra.mxu0 0.0
        %2392 = vmatprep.subr.mxu0 0.0
        %2393 = vmatpush1.xpose.msra.mxu0 0.0
        %2394 = vmatprep.subr.mxu0 0.0
        %2395 = vmatpush1.xpose.msra.mxu0 0.0
        %2396 = vmatprep.subr.mxu0 0.0
        %2397 = vmatpush1.xpose.msra.mxu0 0.0
        %2398 = vmatprep.subr.mxu0 0.0
        %2399 = vmatpush1.xpose.msra.mxu0 0.0
        %2400 = vmatprep.subr.mxu0 0.0
        %2401 = vmatpush1.xpose.msra.mxu0 0.0
        %2402 = vmatprep.mubr.f32.mxu0 0.0
        %2403 = vmatmul.mubr.f32.gmra.mrb[0].mxu0 %v2334
        %v2404 = vpop.f32.mrb[0].mxu0
        %v2405 = vadd.f32 0.0, %v2404
        %v2406 = vpop.f32.mrb[0].mxu0
        %2407 = vdwg.mxu0
        %v2408 = vmul.f32 %v2405, 0.5
        %v2409 = vsel %vm1548, %v2408, -inf
        %2410 = vmax.xlane.f32.xlu0 %v2409
        %v2411 = vpop.xlane.xlu0 %2410
        %v2412 = vsub.f32 %v2408, %v2411
        %v2413 = vmul.f32 %v2412, 1.442695
        %v2414 = vpow.pop %v2413
        %v2415 = vsel %vm1548, %v2414, 0.0
        %2416 = vadd.xlane.f32.xlu0 %v2415
        %v2417 = vpop.xlane.xlu0 %2416
        %v2418 = vrcp.pop %v2417
        %v2419 = vmul.f32 %v2414, %v2418
        %2420 = vrot.lane.b32.xlu0 %v1467, 108
        %v2421 = vpop.permute.xlu0 %2420
        %v2423 = vsel %vm1470, %v2419, 0
        %v2425 = vsel %vm1563, %v2421, 0
        %2427 = vmatprep.subr.mxu0 0.0
        %2428 = vmatpush1.msra.mxu0 %v2425
        %2429 = vmatprep.subr.mxu0 0.0
        %2430 = vmatpush1.msra.mxu0 0.0
        %2431 = vmatprep.subr.mxu0 0.0
        %2432 = vmatpush1.msra.mxu0 0.0
        %2433 = vmatprep.subr.mxu0 0.0
        %2434 = vmatpush1.msra.mxu0 0.0
        %2435 = vmatprep.subr.mxu0 0.0
        %2436 = vmatpush1.msra.mxu0 0.0
        %2437 = vmatprep.subr.mxu0 0.0
        %2438 = vmatpush1.msra.mxu0 0.0
        %2439 = vmatprep.subr.mxu0 0.0
        %2440 = vmatpush1.msra.mxu0 0.0
        %2441 = vmatprep.subr.mxu0 0.0
        %2442 = vmatpush1.msra.mxu0 0.0
        %2443 = vmatprep.subr.mxu0 0.0
        %2444 = vmatpush1.msra.mxu0 0.0
        %2445 = vmatprep.subr.mxu0 0.0
        %2446 = vmatpush1.msra.mxu0 0.0
        %2447 = vmatprep.subr.mxu0 0.0
        %2448 = vmatpush1.msra.mxu0 0.0
        %2449 = vmatprep.subr.mxu0 0.0
        %2450 = vmatpush1.msra.mxu0 0.0
        %2451 = vmatprep.subr.mxu0 0.0
        %2452 = vmatpush1.msra.mxu0 0.0
        %2453 = vmatprep.subr.mxu0 0.0
        %2454 = vmatpush1.msra.mxu0 0.0
        %2455 = vmatprep.subr.mxu0 0.0
        %2456 = vmatpush1.msra.mxu0 0.0
        %2457 = vmatprep.subr.mxu0 0.0
        %2458 = vmatpush1.msra.mxu0 0.0
        %2459 = vmatprep.subr.mxu0 0.0
        %2460 = vmatpush1.msra.mxu0 0.0
        %2461 = vmatprep.subr.mxu0 0.0
        %2462 = vmatpush1.msra.mxu0 0.0
        %2463 = vmatprep.subr.mxu0 0.0
        %2464 = vmatpush1.msra.mxu0 0.0
        %2465 = vmatprep.subr.mxu0 0.0
        %2466 = vmatpush1.msra.mxu0 0.0
        %2467 = vmatprep.subr.mxu0 0.0
        %2468 = vmatpush1.msra.mxu0 0.0
        %2469 = vmatprep.subr.mxu0 0.0
        %2470 = vmatpush1.msra.mxu0 0.0
        %2471 = vmatprep.subr.mxu0 0.0
        %2472 = vmatpush1.msra.mxu0 0.0
        %2473 = vmatprep.subr.mxu0 0.0
        %2474 = vmatpush1.msra.mxu0 0.0
        %2475 = vmatprep.subr.mxu0 0.0
        %2476 = vmatpush1.msra.mxu0 0.0
        %2477 = vmatprep.subr.mxu0 0.0
        %2478 = vmatpush1.msra.mxu0 0.0
        %2479 = vmatprep.subr.mxu0 0.0
        %2480 = vmatpush1.msra.mxu0 0.0
        %2481 = vmatprep.subr.mxu0 0.0
        %2482 = vmatpush1.msra.mxu0 0.0
        %2483 = vmatprep.subr.mxu0 0.0
        %2484 = vmatpush1.msra.mxu0 0.0
        %2485 = vmatprep.subr.mxu0 0.0
        %2486 = vmatpush1.msra.mxu0 0.0
        %2487 = vmatprep.subr.mxu0 0.0
        %2488 = vmatpush1.msra.mxu0 0.0
        %2489 = vmatprep.subr.mxu0 0.0
        %2490 = vmatpush1.msra.mxu0 0.0
        %2491 = vmatprep.mubr.f32.mxu0 0.0
        %2492 = vmatmul.mubr.f32.gmra.mrb[0].mxu0 %v2423
        %v2493 = vpop.f32.mrb[0].mxu0
        %v2494 = vadd.f32 0.0, %v2493
        %v2495 = vpop.f32.mrb[0].mxu0
        %2496 = vdwg.mxu0
        %2498 = vrot.lane.b32.xlu0 %v2494, 20
        %v2499 = vpop.permute.xlu0 %2498
        %vm2501 = vcmask 191648
        %2502 = vst.msk [vmem:[#allocation5] sm:$0xf] %vm2501, %v2499
        %2503 = vrot.lane.b32.xlu0 %v1305, 104
        %v2504 = vpop.permute.xlu0 %2503
        %2505 = vrot.lane.b32.xlu0 %v1386, 104
        %v2506 = vpop.permute.xlu0 %2505
        %v2507 = vsel %vm1470, %v2504, 0
        %v2509 = vsel %vm1470, %v2506, 0
        %2511 = vmatprep.subr.mxu0 0.0
        %2512 = vmatpush1.xpose.msra.mxu0 %v2509
        %2513 = vmatprep.subr.mxu0 0.0
        %2514 = vmatpush1.xpose.msra.mxu0 0.0
        %2515 = vmatprep.subr.mxu0 0.0
        %2516 = vmatpush1.xpose.msra.mxu0 0.0
        %2517 = vmatprep.subr.mxu0 0.0
        %2518 = vmatpush1.xpose.msra.mxu0 0.0
        %2519 = vmatprep.subr.mxu0 0.0
        %2520 = vmatpush1.xpose.msra.mxu0 0.0
        %2521 = vmatprep.subr.mxu0 0.0
        %2522 = vmatpush1.xpose.msra.mxu0 0.0
        %2523 = vmatprep.subr.mxu0 0.0
        %2524 = vmatpush1.xpose.msra.mxu0 0.0
        %2525 = vmatprep.subr.mxu0 0.0
        %2526 = vmatpush1.xpose.msra.mxu0 0.0
        %2527 = vmatprep.subr.mxu0 0.0
        %2528 = vmatpush1.xpose.msra.mxu0 0.0
        %2529 = vmatprep.subr.mxu0 0.0
        %2530 = vmatpush1.xpose.msra.mxu0 0.0
        %2531 = vmatprep.subr.mxu0 0.0
        %2532 = vmatpush1.xpose.msra.mxu0 0.0
        %2533 = vmatprep.subr.mxu0 0.0
        %2534 = vmatpush1.xpose.msra.mxu0 0.0
        %2535 = vmatprep.subr.mxu0 0.0
        %2536 = vmatpush1.xpose.msra.mxu0 0.0
        %2537 = vmatprep.subr.mxu0 0.0
        %2538 = vmatpush1.xpose.msra.mxu0 0.0
        %2539 = vmatprep.subr.mxu0 0.0
        %2540 = vmatpush1.xpose.msra.mxu0 0.0
        %2541 = vmatprep.subr.mxu0 0.0
        %2542 = vmatpush1.xpose.msra.mxu0 0.0
        %2543 = vmatprep.subr.mxu0 0.0
        %2544 = vmatpush1.xpose.msra.mxu0 0.0
        %2545 = vmatprep.subr.mxu0 0.0
        %2546 = vmatpush1.xpose.msra.mxu0 0.0
        %2547 = vmatprep.subr.mxu0 0.0
        %2548 = vmatpush1.xpose.msra.mxu0 0.0
        %2549 = vmatprep.subr.mxu0 0.0
        %2550 = vmatpush1.xpose.msra.mxu0 0.0
        %2551 = vmatprep.subr.mxu0 0.0
        %2552 = vmatpush1.xpose.msra.mxu0 0.0
        %2553 = vmatprep.subr.mxu0 0.0
        %2554 = vmatpush1.xpose.msra.mxu0 0.0
        %2555 = vmatprep.subr.mxu0 0.0
        %2556 = vmatpush1.xpose.msra.mxu0 0.0
        %2557 = vmatprep.subr.mxu0 0.0
        %2558 = vmatpush1.xpose.msra.mxu0 0.0
        %2559 = vmatprep.subr.mxu0 0.0
        %2560 = vmatpush1.xpose.msra.mxu0 0.0
        %2561 = vmatprep.subr.mxu0 0.0
        %2562 = vmatpush1.xpose.msra.mxu0 0.0
        %2563 = vmatprep.subr.mxu0 0.0
        %2564 = vmatpush1.xpose.msra.mxu0 0.0
        %2565 = vmatprep.subr.mxu0 0.0
        %2566 = vmatpush1.xpose.msra.mxu0 0.0
        %2567 = vmatprep.subr.mxu0 0.0
        %2568 = vmatpush1.xpose.msra.mxu0 0.0
        %2569 = vmatprep.subr.mxu0 0.0
        %2570 = vmatpush1.xpose.msra.mxu0 0.0
        %2571 = vmatprep.subr.mxu0 0.0
        %2572 = vmatpush1.xpose.msra.mxu0 0.0
        %2573 = vmatprep.subr.mxu0 0.0
        %2574 = vmatpush1.xpose.msra.mxu0 0.0
        %2575 = vmatprep.mubr.f32.mxu0 0.0
        %2576 = vmatmul.mubr.f32.gmra.mrb[0].mxu0 %v2507
        %v2577 = vpop.f32.mrb[0].mxu0
        %v2578 = vadd.f32 0.0, %v2577
        %v2579 = vpop.f32.mrb[0].mxu0
        %2580 = vdwg.mxu0
        %v2581 = vmul.f32 %v2578, 0.5
        %v2582 = vsel %vm1548, %v2581, -inf
        %2583 = vmax.xlane.f32.xlu0 %v2582
        %v2584 = vpop.xlane.xlu0 %2583
        %v2585 = vsub.f32 %v2581, %v2584
        %v2586 = vmul.f32 %v2585, 1.442695
        %v2587 = vpow.pop %v2586
        %v2588 = vsel %vm1548, %v2587, 0.0
        %2589 = vadd.xlane.f32.xlu0 %v2588
        %v2590 = vpop.xlane.xlu0 %2589
        %v2591 = vrcp.pop %v2590
        %v2592 = vmul.f32 %v2587, %v2591
        %2593 = vrot.lane.b32.xlu0 %v1467, 104
        %v2594 = vpop.permute.xlu0 %2593
        %v2596 = vsel %vm1470, %v2592, 0
        %v2598 = vsel %vm1563, %v2594, 0
        %2600 = vmatprep.subr.mxu0 0.0
        %2601 = vmatpush1.msra.mxu0 %v2598
        %2602 = vmatprep.subr.mxu0 0.0
        %2603 = vmatpush1.msra.mxu0 0.0
        %2604 = vmatprep.subr.mxu0 0.0
        %2605 = vmatpush1.msra.mxu0 0.0
        %2606 = vmatprep.subr.mxu0 0.0
        %2607 = vmatpush1.msra.mxu0 0.0
        %2608 = vmatprep.subr.mxu0 0.0
        %2609 = vmatpush1.msra.mxu0 0.0
        %2610 = vmatprep.subr.mxu0 0.0
        %2611 = vmatpush1.msra.mxu0 0.0
        %2612 = vmatprep.subr.mxu0 0.0
        %2613 = vmatpush1.msra.mxu0 0.0
        %2614 = vmatprep.subr.mxu0 0.0
        %2615 = vmatpush1.msra.mxu0 0.0
        %2616 = vmatprep.subr.mxu0 0.0
        %2617 = vmatpush1.msra.mxu0 0.0
        %2618 = vmatprep.subr.mxu0 0.0
        %2619 = vmatpush1.msra.mxu0 0.0
        %2620 = vmatprep.subr.mxu0 0.0
        %2621 = vmatpush1.msra.mxu0 0.0
        %2622 = vmatprep.subr.mxu0 0.0
        %2623 = vmatpush1.msra.mxu0 0.0
        %2624 = vmatprep.subr.mxu0 0.0
        %2625 = vmatpush1.msra.mxu0 0.0
        %2626 = vmatprep.subr.mxu0 0.0
        %2627 = vmatpush1.msra.mxu0 0.0
        %2628 = vmatprep.subr.mxu0 0.0
        %2629 = vmatpush1.msra.mxu0 0.0
        %2630 = vmatprep.subr.mxu0 0.0
        %2631 = vmatpush1.msra.mxu0 0.0
        %2632 = vmatprep.subr.mxu0 0.0
        %2633 = vmatpush1.msra.mxu0 0.0
        %2634 = vmatprep.subr.mxu0 0.0
        %2635 = vmatpush1.msra.mxu0 0.0
        %2636 = vmatprep.subr.mxu0 0.0
        %2637 = vmatpush1.msra.mxu0 0.0
        %2638 = vmatprep.subr.mxu0 0.0
        %2639 = vmatpush1.msra.mxu0 0.0
        %2640 = vmatprep.subr.mxu0 0.0
        %2641 = vmatpush1.msra.mxu0 0.0
        %2642 = vmatprep.subr.mxu0 0.0
        %2643 = vmatpush1.msra.mxu0 0.0
        %2644 = vmatprep.subr.mxu0 0.0
        %2645 = vmatpush1.msra.mxu0 0.0
        %2646 = vmatprep.subr.mxu0 0.0
        %2647 = vmatpush1.msra.mxu0 0.0
        %2648 = vmatprep.subr.mxu0 0.0
        %2649 = vmatpush1.msra.mxu0 0.0
        %2650 = vmatprep.subr.mxu0 0.0
        %2651 = vmatpush1.msra.mxu0 0.0
        %2652 = vmatprep.subr.mxu0 0.0
        %2653 = vmatpush1.msra.mxu0 0.0
        %2654 = vmatprep.subr.mxu0 0.0
        %2655 = vmatpush1.msra.mxu0 0.0
        %2656 = vmatprep.subr.mxu0 0.0
        %2657 = vmatpush1.msra.mxu0 0.0
        %2658 = vmatprep.subr.mxu0 0.0
        %2659 = vmatpush1.msra.mxu0 0.0
        %2660 = vmatprep.subr.mxu0 0.0
        %2661 = vmatpush1.msra.mxu0 0.0
        %2662 = vmatprep.subr.mxu0 0.0
        %2663 = vmatpush1.msra.mxu0 0.0
        %2664 = vmatprep.mubr.f32.mxu0 0.0
        %2665 = vmatmul.mubr.f32.gmra.mrb[0].mxu0 %v2596
        %v2666 = vpop.f32.mrb[0].mxu0
        %v2667 = vadd.f32 0.0, %v2666
        %v2668 = vpop.f32.mrb[0].mxu0
        %2669 = vdwg.mxu0
        %2671 = vrot.lane.b32.xlu0 %v2667, 24
        %v2672 = vpop.permute.xlu0 %2671
        %vm2674 = vcmask 224448
        %2675 = vst.msk [vmem:[#allocation5] sm:$0xf] %vm2674, %v2672
        %2676 = vrot.lane.b32.xlu0 %v1305, 100
        %v2677 = vpop.permute.xlu0 %2676
        %2678 = vrot.lane.b32.xlu0 %v1386, 100
        %v2679 = vpop.permute.xlu0 %2678
        %v2680 = vsel %vm1470, %v2677, 0
        %v2682 = vsel %vm1470, %v2679, 0
        %2684 = vmatprep.subr.mxu0 0.0
        %2685 = vmatpush1.xpose.msra.mxu0 %v2682
        %2686 = vmatprep.subr.mxu0 0.0
        %2687 = vmatpush1.xpose.msra.mxu0 0.0
        %2688 = vmatprep.subr.mxu0 0.0
        %2689 = vmatpush1.xpose.msra.mxu0 0.0
        %2690 = vmatprep.subr.mxu0 0.0
        %2691 = vmatpush1.xpose.msra.mxu0 0.0
        %2692 = vmatprep.subr.mxu0 0.0
        %2693 = vmatpush1.xpose.msra.mxu0 0.0
        %2694 = vmatprep.subr.mxu0 0.0
        %2695 = vmatpush1.xpose.msra.mxu0 0.0
        %2696 = vmatprep.subr.mxu0 0.0
        %2697 = vmatpush1.xpose.msra.mxu0 0.0
        %2698 = vmatprep.subr.mxu0 0.0
        %2699 = vmatpush1.xpose.msra.mxu0 0.0
        %2700 = vmatprep.subr.mxu0 0.0
        %2701 = vmatpush1.xpose.msra.mxu0 0.0
        %2702 = vmatprep.subr.mxu0 0.0
        %2703 = vmatpush1.xpose.msra.mxu0 0.0
        %2704 = vmatprep.subr.mxu0 0.0
        %2705 = vmatpush1.xpose.msra.mxu0 0.0
        %2706 = vmatprep.subr.mxu0 0.0
        %2707 = vmatpush1.xpose.msra.mxu0 0.0
        %2708 = vmatprep.subr.mxu0 0.0
        %2709 = vmatpush1.xpose.msra.mxu0 0.0
        %2710 = vmatprep.subr.mxu0 0.0
        %2711 = vmatpush1.xpose.msra.mxu0 0.0
        %2712 = vmatprep.subr.mxu0 0.0
        %2713 = vmatpush1.xpose.msra.mxu0 0.0
        %2714 = vmatprep.subr.mxu0 0.0
        %2715 = vmatpush1.xpose.msra.mxu0 0.0
        %2716 = vmatprep.subr.mxu0 0.0
        %2717 = vmatpush1.xpose.msra.mxu0 0.0
        %2718 = vmatprep.subr.mxu0 0.0
        %2719 = vmatpush1.xpose.msra.mxu0 0.0
        %2720 = vmatprep.subr.mxu0 0.0
        %2721 = vmatpush1.xpose.msra.mxu0 0.0
        %2722 = vmatprep.subr.mxu0 0.0
        %2723 = vmatpush1.xpose.msra.mxu0 0.0
        %2724 = vmatprep.subr.mxu0 0.0
        %2725 = vmatpush1.xpose.msra.mxu0 0.0
        %2726 = vmatprep.subr.mxu0 0.0
        %2727 = vmatpush1.xpose.msra.mxu0 0.0
        %2728 = vmatprep.subr.mxu0 0.0
        %2729 = vmatpush1.xpose.msra.mxu0 0.0
        %2730 = vmatprep.subr.mxu0 0.0
        %2731 = vmatpush1.xpose.msra.mxu0 0.0
        %2732 = vmatprep.subr.mxu0 0.0
        %2733 = vmatpush1.xpose.msra.mxu0 0.0
        %2734 = vmatprep.subr.mxu0 0.0
        %2735 = vmatpush1.xpose.msra.mxu0 0.0
        %2736 = vmatprep.subr.mxu0 0.0
        %2737 = vmatpush1.xpose.msra.mxu0 0.0
        %2738 = vmatprep.subr.mxu0 0.0
        %2739 = vmatpush1.xpose.msra.mxu0 0.0
        %2740 = vmatprep.subr.mxu0 0.0
        %2741 = vmatpush1.xpose.msra.mxu0 0.0
        %2742 = vmatprep.subr.mxu0 0.0
        %2743 = vmatpush1.xpose.msra.mxu0 0.0
        %2744 = vmatprep.subr.mxu0 0.0
        %2745 = vmatpush1.xpose.msra.mxu0 0.0
        %2746 = vmatprep.subr.mxu0 0.0
        %2747 = vmatpush1.xpose.msra.mxu0 0.0
        %2748 = vmatprep.mubr.f32.mxu0 0.0
        %2749 = vmatmul.mubr.f32.gmra.mrb[0].mxu0 %v2680
        %v2750 = vpop.f32.mrb[0].mxu0
        %v2751 = vadd.f32 0.0, %v2750
        %v2752 = vpop.f32.mrb[0].mxu0
        %2753 = vdwg.mxu0
        %v2754 = vmul.f32 %v2751, 0.5
        %v2755 = vsel %vm1548, %v2754, -inf
        %2756 = vmax.xlane.f32.xlu0 %v2755
        %v2757 = vpop.xlane.xlu0 %2756
        %v2758 = vsub.f32 %v2754, %v2757
        %v2759 = vmul.f32 %v2758, 1.442695
        %v2760 = vpow.pop %v2759
        %v2761 = vsel %vm1548, %v2760, 0.0
        %2762 = vadd.xlane.f32.xlu0 %v2761
        %v2763 = vpop.xlane.xlu0 %2762
        %v2764 = vrcp.pop %v2763
        %v2765 = vmul.f32 %v2760, %v2764
        %2766 = vrot.lane.b32.xlu0 %v1467, 100
        %v2767 = vpop.permute.xlu0 %2766
        %v2769 = vsel %vm1470, %v2765, 0
        %v2771 = vsel %vm1563, %v2767, 0
        %2773 = vmatprep.subr.mxu0 0.0
        %2774 = vmatpush1.msra.mxu0 %v2771
        %2775 = vmatprep.subr.mxu0 0.0
        %2776 = vmatpush1.msra.mxu0 0.0
        %2777 = vmatprep.subr.mxu0 0.0
        %2778 = vmatpush1.msra.mxu0 0.0
        %2779 = vmatprep.subr.mxu0 0.0
        %2780 = vmatpush1.msra.mxu0 0.0
        %2781 = vmatprep.subr.mxu0 0.0
        %2782 = vmatpush1.msra.mxu0 0.0
        %2783 = vmatprep.subr.mxu0 0.0
        %2784 = vmatpush1.msra.mxu0 0.0
        %2785 = vmatprep.subr.mxu0 0.0
        %2786 = vmatpush1.msra.mxu0 0.0
        %2787 = vmatprep.subr.mxu0 0.0
        %2788 = vmatpush1.msra.mxu0 0.0
        %2789 = vmatprep.subr.mxu0 0.0
        %2790 = vmatpush1.msra.mxu0 0.0
        %2791 = vmatprep.subr.mxu0 0.0
        %2792 = vmatpush1.msra.mxu0 0.0
        %2793 = vmatprep.subr.mxu0 0.0
        %2794 = vmatpush1.msra.mxu0 0.0
        %2795 = vmatprep.subr.mxu0 0.0
        %2796 = vmatpush1.msra.mxu0 0.0
        %2797 = vmatprep.subr.mxu0 0.0
        %2798 = vmatpush1.msra.mxu0 0.0
        %2799 = vmatprep.subr.mxu0 0.0
        %2800 = vmatpush1.msra.mxu0 0.0
        %2801 = vmatprep.subr.mxu0 0.0
        %2802 = vmatpush1.msra.mxu0 0.0
        %2803 = vmatprep.subr.mxu0 0.0
        %2804 = vmatpush1.msra.mxu0 0.0
        %2805 = vmatprep.subr.mxu0 0.0
        %2806 = vmatpush1.msra.mxu0 0.0
        %2807 = vmatprep.subr.mxu0 0.0
        %2808 = vmatpush1.msra.mxu0 0.0
        %2809 = vmatprep.subr.mxu0 0.0
        %2810 = vmatpush1.msra.mxu0 0.0
        %2811 = vmatprep.subr.mxu0 0.0
        %2812 = vmatpush1.msra.mxu0 0.0
        %2813 = vmatprep.subr.mxu0 0.0
        %2814 = vmatpush1.msra.mxu0 0.0
        %2815 = vmatprep.subr.mxu0 0.0
        %2816 = vmatpush1.msra.mxu0 0.0
        %2817 = vmatprep.subr.mxu0 0.0
        %2818 = vmatpush1.msra.mxu0 0.0
        %2819 = vmatprep.subr.mxu0 0.0
        %2820 = vmatpush1.msra.mxu0 0.0
        %2821 = vmatprep.subr.mxu0 0.0
        %2822 = vmatpush1.msra.mxu0 0.0
        %2823 = vmatprep.subr.mxu0 0.0
        %2824 = vmatpush1.msra.mxu0 0.0
        %2825 = vmatprep.subr.mxu0 0.0
        %2826 = vmatpush1.msra.mxu0 0.0
        %2827 = vmatprep.subr.mxu0 0.0
        %2828 = vmatpush1.msra.mxu0 0.0
        %2829 = vmatprep.subr.mxu0 0.0
        %2830 = vmatpush1.msra.mxu0 0.0
        %2831 = vmatprep.subr.mxu0 0.0
        %2832 = vmatpush1.msra.mxu0 0.0
        %2833 = vmatprep.subr.mxu0 0.0
        %2834 = vmatpush1.msra.mxu0 0.0
        %2835 = vmatprep.subr.mxu0 0.0
        %2836 = vmatpush1.msra.mxu0 0.0
        %2837 = vmatprep.mubr.f32.mxu0 0.0
        %2838 = vmatmul.mubr.f32.gmra.mrb[0].mxu0 %v2769
        %v2839 = vpop.f32.mrb[0].mxu0
        %v2840 = vadd.f32 0.0, %v2839
        %v2841 = vpop.f32.mrb[0].mxu0
        %2842 = vdwg.mxu0
        %2844 = vrot.lane.b32.xlu0 %v2840, 28
        %v2845 = vpop.permute.xlu0 %2844
        %vm2847 = vcmask 257248
        %2848 = vst.msk [vmem:[#allocation5] sm:$0xf] %vm2847, %v2845
        %v2849 = vrot.slane %v1305, 4
        %v2850 = vrot.slane %v1386, 4
        %v2851 = vsel %vm1470, %v2849, 0
        %v2853 = vsel %vm1470, %v2850, 0
        %2855 = vmatprep.subr.mxu0 0.0
        %2856 = vmatpush1.xpose.msra.mxu0 %v2853
        %2857 = vmatprep.subr.mxu0 0.0
        %2858 = vmatpush1.xpose.msra.mxu0 0.0
        %2859 = vmatprep.subr.mxu0 0.0
        %2860 = vmatpush1.xpose.msra.mxu0 0.0
        %2861 = vmatprep.subr.mxu0 0.0
        %2862 = vmatpush1.xpose.msra.mxu0 0.0
        %2863 = vmatprep.subr.mxu0 0.0
        %2864 = vmatpush1.xpose.msra.mxu0 0.0
        %2865 = vmatprep.subr.mxu0 0.0
        %2866 = vmatpush1.xpose.msra.mxu0 0.0
        %2867 = vmatprep.subr.mxu0 0.0
        %2868 = vmatpush1.xpose.msra.mxu0 0.0
        %2869 = vmatprep.subr.mxu0 0.0
        %2870 = vmatpush1.xpose.msra.mxu0 0.0
        %2871 = vmatprep.subr.mxu0 0.0
        %2872 = vmatpush1.xpose.msra.mxu0 0.0
        %2873 = vmatprep.subr.mxu0 0.0
        %2874 = vmatpush1.xpose.msra.mxu0 0.0
        %2875 = vmatprep.subr.mxu0 0.0
        %2876 = vmatpush1.xpose.msra.mxu0 0.0
        %2877 = vmatprep.subr.mxu0 0.0
        %2878 = vmatpush1.xpose.msra.mxu0 0.0
        %2879 = vmatprep.subr.mxu0 0.0
        %2880 = vmatpush1.xpose.msra.mxu0 0.0
        %2881 = vmatprep.subr.mxu0 0.0
        %2882 = vmatpush1.xpose.msra.mxu0 0.0
        %2883 = vmatprep.subr.mxu0 0.0
        %2884 = vmatpush1.xpose.msra.mxu0 0.0
        %2885 = vmatprep.subr.mxu0 0.0
        %2886 = vmatpush1.xpose.msra.mxu0 0.0
        %2887 = vmatprep.subr.mxu0 0.0
        %2888 = vmatpush1.xpose.msra.mxu0 0.0
        %2889 = vmatprep.subr.mxu0 0.0
        %2890 = vmatpush1.xpose.msra.mxu0 0.0
        %2891 = vmatprep.subr.mxu0 0.0
        %2892 = vmatpush1.xpose.msra.mxu0 0.0
        %2893 = vmatprep.subr.mxu0 0.0
        %2894 = vmatpush1.xpose.msra.mxu0 0.0
        %2895 = vmatprep.subr.mxu0 0.0
        %2896 = vmatpush1.xpose.msra.mxu0 0.0
        %2897 = vmatprep.subr.mxu0 0.0
        %2898 = vmatpush1.xpose.msra.mxu0 0.0
        %2899 = vmatprep.subr.mxu0 0.0
        %2900 = vmatpush1.xpose.msra.mxu0 0.0
        %2901 = vmatprep.subr.mxu0 0.0
        %2902 = vmatpush1.xpose.msra.mxu0 0.0
        %2903 = vmatprep.subr.mxu0 0.0
        %2904 = vmatpush1.xpose.msra.mxu0 0.0
        %2905 = vmatprep.subr.mxu0 0.0
        %2906 = vmatpush1.xpose.msra.mxu0 0.0
        %2907 = vmatprep.subr.mxu0 0.0
        %2908 = vmatpush1.xpose.msra.mxu0 0.0
        %2909 = vmatprep.subr.mxu0 0.0
        %2910 = vmatpush1.xpose.msra.mxu0 0.0
        %2911 = vmatprep.subr.mxu0 0.0
        %2912 = vmatpush1.xpose.msra.mxu0 0.0
        %2913 = vmatprep.subr.mxu0 0.0
        %2914 = vmatpush1.xpose.msra.mxu0 0.0
        %2915 = vmatprep.subr.mxu0 0.0
        %2916 = vmatpush1.xpose.msra.mxu0 0.0
        %2917 = vmatprep.subr.mxu0 0.0
        %2918 = vmatpush1.xpose.msra.mxu0 0.0
        %2919 = vmatprep.mubr.f32.mxu0 0.0
        %2920 = vmatmul.mubr.f32.gmra.mrb[0].mxu0 %v2851
        %v2921 = vpop.f32.mrb[0].mxu0
        %v2922 = vadd.f32 0.0, %v2921
        %v2923 = vpop.f32.mrb[0].mxu0
        %2924 = vdwg.mxu0
        %v2925 = vmul.f32 %v2922, 0.5
        %v2926 = vsel %vm1548, %v2925, -inf
        %2927 = vmax.xlane.f32.xlu0 %v2926
        %v2928 = vpop.xlane.xlu0 %2927
        %v2929 = vsub.f32 %v2925, %v2928
        %v2930 = vmul.f32 %v2929, 1.442695
        %v2931 = vpow.pop %v2930
        %v2932 = vsel %vm1548, %v2931, 0.0
        %2933 = vadd.xlane.f32.xlu0 %v2932
        %v2934 = vpop.xlane.xlu0 %2933
        %v2935 = vrcp.pop %v2934
        %v2936 = vmul.f32 %v2931, %v2935
        %v2937 = vrot.slane %v1467, 4
        %v2939 = vsel %vm1470, %v2936, 0
        %v2941 = vsel %vm1563, %v2937, 0
        %2943 = vmatprep.subr.mxu0 0.0
        %2944 = vmatpush1.msra.mxu0 %v2941
        %2945 = vmatprep.subr.mxu0 0.0
        %2946 = vmatpush1.msra.mxu0 0.0
        %2947 = vmatprep.subr.mxu0 0.0
        %2948 = vmatpush1.msra.mxu0 0.0
        %2949 = vmatprep.subr.mxu0 0.0
        %2950 = vmatpush1.msra.mxu0 0.0
        %2951 = vmatprep.subr.mxu0 0.0
        %2952 = vmatpush1.msra.mxu0 0.0
        %2953 = vmatprep.subr.mxu0 0.0
        %2954 = vmatpush1.msra.mxu0 0.0
        %2955 = vmatprep.subr.mxu0 0.0
        %2956 = vmatpush1.msra.mxu0 0.0
        %2957 = vmatprep.subr.mxu0 0.0
        %2958 = vmatpush1.msra.mxu0 0.0
        %2959 = vmatprep.subr.mxu0 0.0
        %2960 = vmatpush1.msra.mxu0 0.0
        %2961 = vmatprep.subr.mxu0 0.0
        %2962 = vmatpush1.msra.mxu0 0.0
        %2963 = vmatprep.subr.mxu0 0.0
        %2964 = vmatpush1.msra.mxu0 0.0
        %2965 = vmatprep.subr.mxu0 0.0
        %2966 = vmatpush1.msra.mxu0 0.0
        %2967 = vmatprep.subr.mxu0 0.0
        %2968 = vmatpush1.msra.mxu0 0.0
        %2969 = vmatprep.subr.mxu0 0.0
        %2970 = vmatpush1.msra.mxu0 0.0
        %2971 = vmatprep.subr.mxu0 0.0
        %2972 = vmatpush1.msra.mxu0 0.0
        %2973 = vmatprep.subr.mxu0 0.0
        %2974 = vmatpush1.msra.mxu0 0.0
        %2975 = vmatprep.subr.mxu0 0.0
        %2976 = vmatpush1.msra.mxu0 0.0
        %2977 = vmatprep.subr.mxu0 0.0
        %2978 = vmatpush1.msra.mxu0 0.0
        %2979 = vmatprep.subr.mxu0 0.0
        %2980 = vmatpush1.msra.mxu0 0.0
        %2981 = vmatprep.subr.mxu0 0.0
        %2982 = vmatpush1.msra.mxu0 0.0
        %2983 = vmatprep.subr.mxu0 0.0
        %2984 = vmatpush1.msra.mxu0 0.0
        %2985 = vmatprep.subr.mxu0 0.0
        %2986 = vmatpush1.msra.mxu0 0.0
        %2987 = vmatprep.subr.mxu0 0.0
        %2988 = vmatpush1.msra.mxu0 0.0
        %2989 = vmatprep.subr.mxu0 0.0
        %2990 = vmatpush1.msra.mxu0 0.0
        %2991 = vmatprep.subr.mxu0 0.0
        %2992 = vmatpush1.msra.mxu0 0.0
        %2993 = vmatprep.subr.mxu0 0.0
        %2994 = vmatpush1.msra.mxu0 0.0
        %2995 = vmatprep.subr.mxu0 0.0
        %2996 = vmatpush1.msra.mxu0 0.0
        %2997 = vmatprep.subr.mxu0 0.0
        %2998 = vmatpush1.msra.mxu0 0.0
        %2999 = vmatprep.subr.mxu0 0.0
        %3000 = vmatpush1.msra.mxu0 0.0
        %3001 = vmatprep.subr.mxu0 0.0
        %3002 = vmatpush1.msra.mxu0 0.0
        %3003 = vmatprep.subr.mxu0 0.0
        %3004 = vmatpush1.msra.mxu0 0.0
        %3005 = vmatprep.subr.mxu0 0.0
        %3006 = vmatpush1.msra.mxu0 0.0
        %3007 = vmatprep.mubr.f32.mxu0 0.0
        %3008 = vmatmul.mubr.f32.gmra.mrb[0].mxu0 %v2939
        %v3009 = vpop.f32.mrb[0].mxu0
        %v3010 = vadd.f32 0.0, %v3009
        %v3011 = vpop.f32.mrb[0].mxu0
        %3012 = vdwg.mxu0
        %3013 = vst.msk [vmem:[#allocation5 + $0x4] sm:$0xf] %vm1548, %v3010
        %3014 = vrot.lane.b32.xlu0 %v2849, 124
        %v3015 = vpop.permute.xlu0 %3014
        %3016 = vrot.lane.b32.xlu0 %v2850, 124
        %v3017 = vpop.permute.xlu0 %3016
        %v3018 = vsel %vm1470, %v3015, 0
        %v3020 = vsel %vm1470, %v3017, 0
        %3022 = vmatprep.subr.mxu0 0.0
        %3023 = vmatpush1.xpose.msra.mxu0 %v3020
        %3024 = vmatprep.subr.mxu0 0.0
        %3025 = vmatpush1.xpose.msra.mxu0 0.0
        %3026 = vmatprep.subr.mxu0 0.0
        %3027 = vmatpush1.xpose.msra.mxu0 0.0
        %3028 = vmatprep.subr.mxu0 0.0
        %3029 = vmatpush1.xpose.msra.mxu0 0.0
        %3030 = vmatprep.subr.mxu0 0.0
        %3031 = vmatpush1.xpose.msra.mxu0 0.0
        %3032 = vmatprep.subr.mxu0 0.0
        %3033 = vmatpush1.xpose.msra.mxu0 0.0
        %3034 = vmatprep.subr.mxu0 0.0
        %3035 = vmatpush1.xpose.msra.mxu0 0.0
        %3036 = vmatprep.subr.mxu0 0.0
        %3037 = vmatpush1.xpose.msra.mxu0 0.0
        %3038 = vmatprep.subr.mxu0 0.0
        %3039 = vmatpush1.xpose.msra.mxu0 0.0
        %3040 = vmatprep.subr.mxu0 0.0
        %3041 = vmatpush1.xpose.msra.mxu0 0.0
        %3042 = vmatprep.subr.mxu0 0.0
        %3043 = vmatpush1.xpose.msra.mxu0 0.0
        %3044 = vmatprep.subr.mxu0 0.0
        %3045 = vmatpush1.xpose.msra.mxu0 0.0
        %3046 = vmatprep.subr.mxu0 0.0
        %3047 = vmatpush1.xpose.msra.mxu0 0.0
        %3048 = vmatprep.subr.mxu0 0.0
        %3049 = vmatpush1.xpose.msra.mxu0 0.0
        %3050 = vmatprep.subr.mxu0 0.0
        %3051 = vmatpush1.xpose.msra.mxu0 0.0
        %3052 = vmatprep.subr.mxu0 0.0
        %3053 = vmatpush1.xpose.msra.mxu0 0.0
        %3054 = vmatprep.subr.mxu0 0.0
        %3055 = vmatpush1.xpose.msra.mxu0 0.0
        %3056 = vmatprep.subr.mxu0 0.0
        %3057 = vmatpush1.xpose.msra.mxu0 0.0
        %3058 = vmatprep.subr.mxu0 0.0
        %3059 = vmatpush1.xpose.msra.mxu0 0.0
        %3060 = vmatprep.subr.mxu0 0.0
        %3061 = vmatpush1.xpose.msra.mxu0 0.0
        %3062 = vmatprep.subr.mxu0 0.0
        %3063 = vmatpush1.xpose.msra.mxu0 0.0
        %3064 = vmatprep.subr.mxu0 0.0
        %3065 = vmatpush1.xpose.msra.mxu0 0.0
        %3066 = vmatprep.subr.mxu0 0.0
        %3067 = vmatpush1.xpose.msra.mxu0 0.0
        %3068 = vmatprep.subr.mxu0 0.0
        %3069 = vmatpush1.xpose.msra.mxu0 0.0
        %3070 = vmatprep.subr.mxu0 0.0
        %3071 = vmatpush1.xpose.msra.mxu0 0.0
        %3072 = vmatprep.subr.mxu0 0.0
        %3073 = vmatpush1.xpose.msra.mxu0 0.0
        %3074 = vmatprep.subr.mxu0 0.0
        %3075 = vmatpush1.xpose.msra.mxu0 0.0
        %3076 = vmatprep.subr.mxu0 0.0
        %3077 = vmatpush1.xpose.msra.mxu0 0.0
        %3078 = vmatprep.subr.mxu0 0.0
        %3079 = vmatpush1.xpose.msra.mxu0 0.0
        %3080 = vmatprep.subr.mxu0 0.0
        %3081 = vmatpush1.xpose.msra.mxu0 0.0
        %3082 = vmatprep.subr.mxu0 0.0
        %3083 = vmatpush1.xpose.msra.mxu0 0.0
        %3084 = vmatprep.subr.mxu0 0.0
        %3085 = vmatpush1.xpose.msra.mxu0 0.0
        %3086 = vmatprep.mubr.f32.mxu0 0.0
        %3087 = vmatmul.mubr.f32.gmra.mrb[0].mxu0 %v3018
        %v3088 = vpop.f32.mrb[0].mxu0
        %v3089 = vadd.f32 0.0, %v3088
        %v3090 = vpop.f32.mrb[0].mxu0
        %3091 = vdwg.mxu0
        %v3092 = vmul.f32 %v3089, 0.5
        %v3093 = vsel %vm1548, %v3092, -inf
        %3094 = vmax.xlane.f32.xlu0 %v3093
        %v3095 = vpop.xlane.xlu0 %3094
        %v3096 = vsub.f32 %v3092, %v3095
        %v3097 = vmul.f32 %v3096, 1.442695
        %v3098 = vpow.pop %v3097
        %v3099 = vsel %vm1548, %v3098, 0.0
        %3100 = vadd.xlane.f32.xlu0 %v3099
        %v3101 = vpop.xlane.xlu0 %3100
        %v3102 = vrcp.pop %v3101
        %v3103 = vmul.f32 %v3098, %v3102
        %3104 = vrot.lane.b32.xlu0 %v2937, 124
        %v3105 = vpop.permute.xlu0 %3104
        %v3107 = vsel %vm1470, %v3103, 0
        %v3109 = vsel %vm1563, %v3105, 0
        %3111 = vmatprep.subr.mxu0 0.0
        %3112 = vmatpush1.msra.mxu0 %v3109
        %3113 = vmatprep.subr.mxu0 0.0
        %3114 = vmatpush1.msra.mxu0 0.0
        %3115 = vmatprep.subr.mxu0 0.0
        %3116 = vmatpush1.msra.mxu0 0.0
        %3117 = vmatprep.subr.mxu0 0.0
        %3118 = vmatpush1.msra.mxu0 0.0
        %3119 = vmatprep.subr.mxu0 0.0
        %3120 = vmatpush1.msra.mxu0 0.0
        %3121 = vmatprep.subr.mxu0 0.0
        %3122 = vmatpush1.msra.mxu0 0.0
        %3123 = vmatprep.subr.mxu0 0.0
        %3124 = vmatpush1.msra.mxu0 0.0
        %3125 = vmatprep.subr.mxu0 0.0
        %3126 = vmatpush1.msra.mxu0 0.0
        %3127 = vmatprep.subr.mxu0 0.0
        %3128 = vmatpush1.msra.mxu0 0.0
        %3129 = vmatprep.subr.mxu0 0.0
        %3130 = vmatpush1.msra.mxu0 0.0
        %3131 = vmatprep.subr.mxu0 0.0
        %3132 = vmatpush1.msra.mxu0 0.0
        %3133 = vmatprep.subr.mxu0 0.0
        %3134 = vmatpush1.msra.mxu0 0.0
        %3135 = vmatprep.subr.mxu0 0.0
        %3136 = vmatpush1.msra.mxu0 0.0
        %3137 = vmatprep.subr.mxu0 0.0
        %3138 = vmatpush1.msra.mxu0 0.0
        %3139 = vmatprep.subr.mxu0 0.0
        %3140 = vmatpush1.msra.mxu0 0.0
        %3141 = vmatprep.subr.mxu0 0.0
        %3142 = vmatpush1.msra.mxu0 0.0
        %3143 = vmatprep.subr.mxu0 0.0
        %3144 = vmatpush1.msra.mxu0 0.0
        %3145 = vmatprep.subr.mxu0 0.0
        %3146 = vmatpush1.msra.mxu0 0.0
        %3147 = vmatprep.subr.mxu0 0.0
        %3148 = vmatpush1.msra.mxu0 0.0
        %3149 = vmatprep.subr.mxu0 0.0
        %3150 = vmatpush1.msra.mxu0 0.0
        %3151 = vmatprep.subr.mxu0 0.0
        %3152 = vmatpush1.msra.mxu0 0.0
        %3153 = vmatprep.subr.mxu0 0.0
        %3154 = vmatpush1.msra.mxu0 0.0
        %3155 = vmatprep.subr.mxu0 0.0
        %3156 = vmatpush1.msra.mxu0 0.0
        %3157 = vmatprep.subr.mxu0 0.0
        %3158 = vmatpush1.msra.mxu0 0.0
        %3159 = vmatprep.subr.mxu0 0.0
        %3160 = vmatpush1.msra.mxu0 0.0
        %3161 = vmatprep.subr.mxu0 0.0
        %3162 = vmatpush1.msra.mxu0 0.0
        %3163 = vmatprep.subr.mxu0 0.0
        %3164 = vmatpush1.msra.mxu0 0.0
        %3165 = vmatprep.subr.mxu0 0.0
        %3166 = vmatpush1.msra.mxu0 0.0
        %3167 = vmatprep.subr.mxu0 0.0
        %3168 = vmatpush1.msra.mxu0 0.0
        %3169 = vmatprep.subr.mxu0 0.0
        %3170 = vmatpush1.msra.mxu0 0.0
        %3171 = vmatprep.subr.mxu0 0.0
        %3172 = vmatpush1.msra.mxu0 0.0
        %3173 = vmatprep.subr.mxu0 0.0
        %3174 = vmatpush1.msra.mxu0 0.0
        %3175 = vmatprep.mubr.f32.mxu0 0.0
        %3176 = vmatmul.mubr.f32.gmra.mrb[0].mxu0 %v3107
        %v3177 = vpop.f32.mrb[0].mxu0
        %v3178 = vadd.f32 0.0, %v3177
        %v3179 = vpop.f32.mrb[0].mxu0
        %3180 = vdwg.mxu0
        %3182 = vrot.lane.b32.xlu0 %v3178, 4
        %v3183 = vpop.permute.xlu0 %3182
        %3185 = vst.msk [vmem:[#allocation5 + $0x4] sm:$0xf] %vm1809, %v3183
        %3186 = vrot.lane.b32.xlu0 %v2849, 120
        %v3187 = vpop.permute.xlu0 %3186
        %3188 = vrot.lane.b32.xlu0 %v2850, 120
        %v3189 = vpop.permute.xlu0 %3188
        %v3190 = vsel %vm1470, %v3187, 0
        %v3192 = vsel %vm1470, %v3189, 0
        %3194 = vmatprep.subr.mxu0 0.0
        %3195 = vmatpush1.xpose.msra.mxu0 %v3192
        %3196 = vmatprep.subr.mxu0 0.0
        %3197 = vmatpush1.xpose.msra.mxu0 0.0
        %3198 = vmatprep.subr.mxu0 0.0
        %3199 = vmatpush1.xpose.msra.mxu0 0.0
        %3200 = vmatprep.subr.mxu0 0.0
        %3201 = vmatpush1.xpose.msra.mxu0 0.0
        %3202 = vmatprep.subr.mxu0 0.0
        %3203 = vmatpush1.xpose.msra.mxu0 0.0
        %3204 = vmatprep.subr.mxu0 0.0
        %3205 = vmatpush1.xpose.msra.mxu0 0.0
        %3206 = vmatprep.subr.mxu0 0.0
        %3207 = vmatpush1.xpose.msra.mxu0 0.0
        %3208 = vmatprep.subr.mxu0 0.0
        %3209 = vmatpush1.xpose.msra.mxu0 0.0
        %3210 = vmatprep.subr.mxu0 0.0
        %3211 = vmatpush1.xpose.msra.mxu0 0.0
        %3212 = vmatprep.subr.mxu0 0.0
        %3213 = vmatpush1.xpose.msra.mxu0 0.0
        %3214 = vmatprep.subr.mxu0 0.0
        %3215 = vmatpush1.xpose.msra.mxu0 0.0
        %3216 = vmatprep.subr.mxu0 0.0
        %3217 = vmatpush1.xpose.msra.mxu0 0.0
        %3218 = vmatprep.subr.mxu0 0.0
        %3219 = vmatpush1.xpose.msra.mxu0 0.0
        %3220 = vmatprep.subr.mxu0 0.0
        %3221 = vmatpush1.xpose.msra.mxu0 0.0
        %3222 = vmatprep.subr.mxu0 0.0
        %3223 = vmatpush1.xpose.msra.mxu0 0.0
        %3224 = vmatprep.subr.mxu0 0.0
        %3225 = vmatpush1.xpose.msra.mxu0 0.0
        %3226 = vmatprep.subr.mxu0 0.0
        %3227 = vmatpush1.xpose.msra.mxu0 0.0
        %3228 = vmatprep.subr.mxu0 0.0
        %3229 = vmatpush1.xpose.msra.mxu0 0.0
        %3230 = vmatprep.subr.mxu0 0.0
        %3231 = vmatpush1.xpose.msra.mxu0 0.0
        %3232 = vmatprep.subr.mxu0 0.0
        %3233 = vmatpush1.xpose.msra.mxu0 0.0
        %3234 = vmatprep.subr.mxu0 0.0
        %3235 = vmatpush1.xpose.msra.mxu0 0.0
        %3236 = vmatprep.subr.mxu0 0.0
        %3237 = vmatpush1.xpose.msra.mxu0 0.0
        %3238 = vmatprep.subr.mxu0 0.0
        %3239 = vmatpush1.xpose.msra.mxu0 0.0
        %3240 = vmatprep.subr.mxu0 0.0
        %3241 = vmatpush1.xpose.msra.mxu0 0.0
        %3242 = vmatprep.subr.mxu0 0.0
        %3243 = vmatpush1.xpose.msra.mxu0 0.0
        %3244 = vmatprep.subr.mxu0 0.0
        %3245 = vmatpush1.xpose.msra.mxu0 0.0
        %3246 = vmatprep.subr.mxu0 0.0
        %3247 = vmatpush1.xpose.msra.mxu0 0.0
        %3248 = vmatprep.subr.mxu0 0.0
        %3249 = vmatpush1.xpose.msra.mxu0 0.0
        %3250 = vmatprep.subr.mxu0 0.0
        %3251 = vmatpush1.xpose.msra.mxu0 0.0
        %3252 = vmatprep.subr.mxu0 0.0
        %3253 = vmatpush1.xpose.msra.mxu0 0.0
        %3254 = vmatprep.subr.mxu0 0.0
        %3255 = vmatpush1.xpose.msra.mxu0 0.0
        %3256 = vmatprep.subr.mxu0 0.0
        %3257 = vmatpush1.xpose.msra.mxu0 0.0
        %3258 = vmatprep.mubr.f32.mxu0 0.0
        %3259 = vmatmul.mubr.f32.gmra.mrb[0].mxu0 %v3190
        %v3260 = vpop.f32.mrb[0].mxu0
        %v3261 = vadd.f32 0.0, %v3260
        %v3262 = vpop.f32.mrb[0].mxu0
        %3263 = vdwg.mxu0
        %v3264 = vmul.f32 %v3261, 0.5
        %v3265 = vsel %vm1548, %v3264, -inf
        %3266 = vmax.xlane.f32.xlu0 %v3265
        %v3267 = vpop.xlane.xlu0 %3266
        %v3268 = vsub.f32 %v3264, %v3267
        %v3269 = vmul.f32 %v3268, 1.442695
        %v3270 = vpow.pop %v3269
        %v3271 = vsel %vm1548, %v3270, 0.0
        %3272 = vadd.xlane.f32.xlu0 %v3271
        %v3273 = vpop.xlane.xlu0 %3272
        %v3274 = vrcp.pop %v3273
        %v3275 = vmul.f32 %v3270, %v3274
        %3276 = vrot.lane.b32.xlu0 %v2937, 120
        %v3277 = vpop.permute.xlu0 %3276
        %v3279 = vsel %vm1470, %v3275, 0
        %v3281 = vsel %vm1563, %v3277, 0
        %3283 = vmatprep.subr.mxu0 0.0
        %3284 = vmatpush1.msra.mxu0 %v3281
        %3285 = vmatprep.subr.mxu0 0.0
        %3286 = vmatpush1.msra.mxu0 0.0
        %3287 = vmatprep.subr.mxu0 0.0
        %3288 = vmatpush1.msra.mxu0 0.0
        %3289 = vmatprep.subr.mxu0 0.0
        %3290 = vmatpush1.msra.mxu0 0.0
        %3291 = vmatprep.subr.mxu0 0.0
        %3292 = vmatpush1.msra.mxu0 0.0
        %3293 = vmatprep.subr.mxu0 0.0
        %3294 = vmatpush1.msra.mxu0 0.0
        %3295 = vmatprep.subr.mxu0 0.0
        %3296 = vmatpush1.msra.mxu0 0.0
        %3297 = vmatprep.subr.mxu0 0.0
        %3298 = vmatpush1.msra.mxu0 0.0
        %3299 = vmatprep.subr.mxu0 0.0
        %3300 = vmatpush1.msra.mxu0 0.0
        %3301 = vmatprep.subr.mxu0 0.0
        %3302 = vmatpush1.msra.mxu0 0.0
        %3303 = vmatprep.subr.mxu0 0.0
        %3304 = vmatpush1.msra.mxu0 0.0
        %3305 = vmatprep.subr.mxu0 0.0
        %3306 = vmatpush1.msra.mxu0 0.0
        %3307 = vmatprep.subr.mxu0 0.0
        %3308 = vmatpush1.msra.mxu0 0.0
        %3309 = vmatprep.subr.mxu0 0.0
        %3310 = vmatpush1.msra.mxu0 0.0
        %3311 = vmatprep.subr.mxu0 0.0
        %3312 = vmatpush1.msra.mxu0 0.0
        %3313 = vmatprep.subr.mxu0 0.0
        %3314 = vmatpush1.msra.mxu0 0.0
        %3315 = vmatprep.subr.mxu0 0.0
        %3316 = vmatpush1.msra.mxu0 0.0
        %3317 = vmatprep.subr.mxu0 0.0
        %3318 = vmatpush1.msra.mxu0 0.0
        %3319 = vmatprep.subr.mxu0 0.0
        %3320 = vmatpush1.msra.mxu0 0.0
        %3321 = vmatprep.subr.mxu0 0.0
        %3322 = vmatpush1.msra.mxu0 0.0
        %3323 = vmatprep.subr.mxu0 0.0
        %3324 = vmatpush1.msra.mxu0 0.0
        %3325 = vmatprep.subr.mxu0 0.0
        %3326 = vmatpush1.msra.mxu0 0.0
        %3327 = vmatprep.subr.mxu0 0.0
        %3328 = vmatpush1.msra.mxu0 0.0
        %3329 = vmatprep.subr.mxu0 0.0
        %3330 = vmatpush1.msra.mxu0 0.0
        %3331 = vmatprep.subr.mxu0 0.0
        %3332 = vmatpush1.msra.mxu0 0.0
        %3333 = vmatprep.subr.mxu0 0.0
        %3334 = vmatpush1.msra.mxu0 0.0
        %3335 = vmatprep.subr.mxu0 0.0
        %3336 = vmatpush1.msra.mxu0 0.0
        %3337 = vmatprep.subr.mxu0 0.0
        %3338 = vmatpush1.msra.mxu0 0.0
        %3339 = vmatprep.subr.mxu0 0.0
        %3340 = vmatpush1.msra.mxu0 0.0
        %3341 = vmatprep.subr.mxu0 0.0
        %3342 = vmatpush1.msra.mxu0 0.0
        %3343 = vmatprep.subr.mxu0 0.0
        %3344 = vmatpush1.msra.mxu0 0.0
        %3345 = vmatprep.subr.mxu0 0.0
        %3346 = vmatpush1.msra.mxu0 0.0
        %3347 = vmatprep.mubr.f32.mxu0 0.0
        %3348 = vmatmul.mubr.f32.gmra.mrb[0].mxu0 %v3279
        %v3349 = vpop.f32.mrb[0].mxu0
        %v3350 = vadd.f32 0.0, %v3349
        %v3351 = vpop.f32.mrb[0].mxu0
        %3352 = vdwg.mxu0
        %3354 = vrot.lane.b32.xlu0 %v3350, 8
        %v3355 = vpop.permute.xlu0 %3354
        %3357 = vst.msk [vmem:[#allocation5 + $0x4] sm:$0xf] %vm1982, %v3355
        %3358 = vrot.lane.b32.xlu0 %v2849, 116
        %v3359 = vpop.permute.xlu0 %3358
        %3360 = vrot.lane.b32.xlu0 %v2850, 116
        %v3361 = vpop.permute.xlu0 %3360
        %v3362 = vsel %vm1470, %v3359, 0
        %v3364 = vsel %vm1470, %v3361, 0
        %3366 = vmatprep.subr.mxu0 0.0
        %3367 = vmatpush1.xpose.msra.mxu0 %v3364
        %3368 = vmatprep.subr.mxu0 0.0
        %3369 = vmatpush1.xpose.msra.mxu0 0.0
        %3370 = vmatprep.subr.mxu0 0.0
        %3371 = vmatpush1.xpose.msra.mxu0 0.0
        %3372 = vmatprep.subr.mxu0 0.0
        %3373 = vmatpush1.xpose.msra.mxu0 0.0
        %3374 = vmatprep.subr.mxu0 0.0
        %3375 = vmatpush1.xpose.msra.mxu0 0.0
        %3376 = vmatprep.subr.mxu0 0.0
        %3377 = vmatpush1.xpose.msra.mxu0 0.0
        %3378 = vmatprep.subr.mxu0 0.0
        %3379 = vmatpush1.xpose.msra.mxu0 0.0
        %3380 = vmatprep.subr.mxu0 0.0
        %3381 = vmatpush1.xpose.msra.mxu0 0.0
        %3382 = vmatprep.subr.mxu0 0.0
        %3383 = vmatpush1.xpose.msra.mxu0 0.0
        %3384 = vmatprep.subr.mxu0 0.0
        %3385 = vmatpush1.xpose.msra.mxu0 0.0
        %3386 = vmatprep.subr.mxu0 0.0
        %3387 = vmatpush1.xpose.msra.mxu0 0.0
        %3388 = vmatprep.subr.mxu0 0.0
        %3389 = vmatpush1.xpose.msra.mxu0 0.0
        %3390 = vmatprep.subr.mxu0 0.0
        %3391 = vmatpush1.xpose.msra.mxu0 0.0
        %3392 = vmatprep.subr.mxu0 0.0
        %3393 = vmatpush1.xpose.msra.mxu0 0.0
        %3394 = vmatprep.subr.mxu0 0.0
        %3395 = vmatpush1.xpose.msra.mxu0 0.0
        %3396 = vmatprep.subr.mxu0 0.0
        %3397 = vmatpush1.xpose.msra.mxu0 0.0
        %3398 = vmatprep.subr.mxu0 0.0
        %3399 = vmatpush1.xpose.msra.mxu0 0.0
        %3400 = vmatprep.subr.mxu0 0.0
        %3401 = vmatpush1.xpose.msra.mxu0 0.0
        %3402 = vmatprep.subr.mxu0 0.0
        %3403 = vmatpush1.xpose.msra.mxu0 0.0
        %3404 = vmatprep.subr.mxu0 0.0
        %3405 = vmatpush1.xpose.msra.mxu0 0.0
        %3406 = vmatprep.subr.mxu0 0.0
        %3407 = vmatpush1.xpose.msra.mxu0 0.0
        %3408 = vmatprep.subr.mxu0 0.0
        %3409 = vmatpush1.xpose.msra.mxu0 0.0
        %3410 = vmatprep.subr.mxu0 0.0
        %3411 = vmatpush1.xpose.msra.mxu0 0.0
        %3412 = vmatprep.subr.mxu0 0.0
        %3413 = vmatpush1.xpose.msra.mxu0 0.0
        %3414 = vmatprep.subr.mxu0 0.0
        %3415 = vmatpush1.xpose.msra.mxu0 0.0
        %3416 = vmatprep.subr.mxu0 0.0
        %3417 = vmatpush1.xpose.msra.mxu0 0.0
        %3418 = vmatprep.subr.mxu0 0.0
        %3419 = vmatpush1.xpose.msra.mxu0 0.0
        %3420 = vmatprep.subr.mxu0 0.0
        %3421 = vmatpush1.xpose.msra.mxu0 0.0
        %3422 = vmatprep.subr.mxu0 0.0
        %3423 = vmatpush1.xpose.msra.mxu0 0.0
        %3424 = vmatprep.subr.mxu0 0.0
        %3425 = vmatpush1.xpose.msra.mxu0 0.0
        %3426 = vmatprep.subr.mxu0 0.0
        %3427 = vmatpush1.xpose.msra.mxu0 0.0
        %3428 = vmatprep.subr.mxu0 0.0
        %3429 = vmatpush1.xpose.msra.mxu0 0.0
        %3430 = vmatprep.mubr.f32.mxu0 0.0
        %3431 = vmatmul.mubr.f32.gmra.mrb[0].mxu0 %v3362
        %v3432 = vpop.f32.mrb[0].mxu0
        %v3433 = vadd.f32 0.0, %v3432
        %v3434 = vpop.f32.mrb[0].mxu0
        %3435 = vdwg.mxu0
        %v3436 = vmul.f32 %v3433, 0.5
        %v3437 = vsel %vm1548, %v3436, -inf
        %3438 = vmax.xlane.f32.xlu0 %v3437
        %v3439 = vpop.xlane.xlu0 %3438
        %v3440 = vsub.f32 %v3436, %v3439
        %v3441 = vmul.f32 %v3440, 1.442695
        %v3442 = vpow.pop %v3441
        %v3443 = vsel %vm1548, %v3442, 0.0
        %3444 = vadd.xlane.f32.xlu0 %v3443
        %v3445 = vpop.xlane.xlu0 %3444
        %v3446 = vrcp.pop %v3445
        %v3447 = vmul.f32 %v3442, %v3446
        %3448 = vrot.lane.b32.xlu0 %v2937, 116
        %v3449 = vpop.permute.xlu0 %3448
        %v3451 = vsel %vm1470, %v3447, 0
        %v3453 = vsel %vm1563, %v3449, 0
        %3455 = vmatprep.subr.mxu0 0.0
        %3456 = vmatpush1.msra.mxu0 %v3453
        %3457 = vmatprep.subr.mxu0 0.0
        %3458 = vmatpush1.msra.mxu0 0.0
        %3459 = vmatprep.subr.mxu0 0.0
        %3460 = vmatpush1.msra.mxu0 0.0
        %3461 = vmatprep.subr.mxu0 0.0
        %3462 = vmatpush1.msra.mxu0 0.0
        %3463 = vmatprep.subr.mxu0 0.0
        %3464 = vmatpush1.msra.mxu0 0.0
        %3465 = vmatprep.subr.mxu0 0.0
        %3466 = vmatpush1.msra.mxu0 0.0
        %3467 = vmatprep.subr.mxu0 0.0
        %3468 = vmatpush1.msra.mxu0 0.0
        %3469 = vmatprep.subr.mxu0 0.0
        %3470 = vmatpush1.msra.mxu0 0.0
        %3471 = vmatprep.subr.mxu0 0.0
        %3472 = vmatpush1.msra.mxu0 0.0
        %3473 = vmatprep.subr.mxu0 0.0
        %3474 = vmatpush1.msra.mxu0 0.0
        %3475 = vmatprep.subr.mxu0 0.0
        %3476 = vmatpush1.msra.mxu0 0.0
        %3477 = vmatprep.subr.mxu0 0.0
        %3478 = vmatpush1.msra.mxu0 0.0
        %3479 = vmatprep.subr.mxu0 0.0
        %3480 = vmatpush1.msra.mxu0 0.0
        %3481 = vmatprep.subr.mxu0 0.0
        %3482 = vmatpush1.msra.mxu0 0.0
        %3483 = vmatprep.subr.mxu0 0.0
        %3484 = vmatpush1.msra.mxu0 0.0
        %3485 = vmatprep.subr.mxu0 0.0
        %3486 = vmatpush1.msra.mxu0 0.0
        %3487 = vmatprep.subr.mxu0 0.0
        %3488 = vmatpush1.msra.mxu0 0.0
        %3489 = vmatprep.subr.mxu0 0.0
        %3490 = vmatpush1.msra.mxu0 0.0
        %3491 = vmatprep.subr.mxu0 0.0
        %3492 = vmatpush1.msra.mxu0 0.0
        %3493 = vmatprep.subr.mxu0 0.0
        %3494 = vmatpush1.msra.mxu0 0.0
        %3495 = vmatprep.subr.mxu0 0.0
        %3496 = vmatpush1.msra.mxu0 0.0
        %3497 = vmatprep.subr.mxu0 0.0
        %3498 = vmatpush1.msra.mxu0 0.0
        %3499 = vmatprep.subr.mxu0 0.0
        %3500 = vmatpush1.msra.mxu0 0.0
        %3501 = vmatprep.subr.mxu0 0.0
        %3502 = vmatpush1.msra.mxu0 0.0
        %3503 = vmatprep.subr.mxu0 0.0
        %3504 = vmatpush1.msra.mxu0 0.0
        %3505 = vmatprep.subr.mxu0 0.0
        %3506 = vmatpush1.msra.mxu0 0.0
        %3507 = vmatprep.subr.mxu0 0.0
        %3508 = vmatpush1.msra.mxu0 0.0
        %3509 = vmatprep.subr.mxu0 0.0
        %3510 = vmatpush1.msra.mxu0 0.0
        %3511 = vmatprep.subr.mxu0 0.0
        %3512 = vmatpush1.msra.mxu0 0.0
        %3513 = vmatprep.subr.mxu0 0.0
        %3514 = vmatpush1.msra.mxu0 0.0
        %3515 = vmatprep.subr.mxu0 0.0
        %3516 = vmatpush1.msra.mxu0 0.0
        %3517 = vmatprep.subr.mxu0 0.0
        %3518 = vmatpush1.msra.mxu0 0.0
        %3519 = vmatprep.mubr.f32.mxu0 0.0
        %3520 = vmatmul.mubr.f32.gmra.mrb[0].mxu0 %v3451
        %v3521 = vpop.f32.mrb[0].mxu0
        %v3522 = vadd.f32 0.0, %v3521
        %v3523 = vpop.f32.mrb[0].mxu0
        %3524 = vdwg.mxu0
        %3526 = vrot.lane.b32.xlu0 %v3522, 12
        %v3527 = vpop.permute.xlu0 %3526
        %3529 = vst.msk [vmem:[#allocation5 + $0x4] sm:$0xf] %vm2155, %v3527
        %3530 = vrot.lane.b32.xlu0 %v2849, 112
        %v3531 = vpop.permute.xlu0 %3530
        %3532 = vrot.lane.b32.xlu0 %v2850, 112
        %v3533 = vpop.permute.xlu0 %3532
        %v3534 = vsel %vm1470, %v3531, 0
        %v3536 = vsel %vm1470, %v3533, 0
        %3538 = vmatprep.subr.mxu0 0.0
        %3539 = vmatpush1.xpose.msra.mxu0 %v3536
        %3540 = vmatprep.subr.mxu0 0.0
        %3541 = vmatpush1.xpose.msra.mxu0 0.0
        %3542 = vmatprep.subr.mxu0 0.0
        %3543 = vmatpush1.xpose.msra.mxu0 0.0
        %3544 = vmatprep.subr.mxu0 0.0
        %3545 = vmatpush1.xpose.msra.mxu0 0.0
        %3546 = vmatprep.subr.mxu0 0.0
        %3547 = vmatpush1.xpose.msra.mxu0 0.0
        %3548 = vmatprep.subr.mxu0 0.0
        %3549 = vmatpush1.xpose.msra.mxu0 0.0
        %3550 = vmatprep.subr.mxu0 0.0
        %3551 = vmatpush1.xpose.msra.mxu0 0.0
        %3552 = vmatprep.subr.mxu0 0.0
        %3553 = vmatpush1.xpose.msra.mxu0 0.0
        %3554 = vmatprep.subr.mxu0 0.0
        %3555 = vmatpush1.xpose.msra.mxu0 0.0
        %3556 = vmatprep.subr.mxu0 0.0
        %3557 = vmatpush1.xpose.msra.mxu0 0.0
        %3558 = vmatprep.subr.mxu0 0.0
        %3559 = vmatpush1.xpose.msra.mxu0 0.0
        %3560 = vmatprep.subr.mxu0 0.0
        %3561 = vmatpush1.xpose.msra.mxu0 0.0
        %3562 = vmatprep.subr.mxu0 0.0
        %3563 = vmatpush1.xpose.msra.mxu0 0.0
        %3564 = vmatprep.subr.mxu0 0.0
        %3565 = vmatpush1.xpose.msra.mxu0 0.0
        %3566 = vmatprep.subr.mxu0 0.0
        %3567 = vmatpush1.xpose.msra.mxu0 0.0
        %3568 = vmatprep.subr.mxu0 0.0
        %3569 = vmatpush1.xpose.msra.mxu0 0.0
        %3570 = vmatprep.subr.mxu0 0.0
        %3571 = vmatpush1.xpose.msra.mxu0 0.0
        %3572 = vmatprep.subr.mxu0 0.0
        %3573 = vmatpush1.xpose.msra.mxu0 0.0
        %3574 = vmatprep.subr.mxu0 0.0
        %3575 = vmatpush1.xpose.msra.mxu0 0.0
        %3576 = vmatprep.subr.mxu0 0.0
        %3577 = vmatpush1.xpose.msra.mxu0 0.0
        %3578 = vmatprep.subr.mxu0 0.0
        %3579 = vmatpush1.xpose.msra.mxu0 0.0
        %3580 = vmatprep.subr.mxu0 0.0
        %3581 = vmatpush1.xpose.msra.mxu0 0.0
        %3582 = vmatprep.subr.mxu0 0.0
        %3583 = vmatpush1.xpose.msra.mxu0 0.0
        %3584 = vmatprep.subr.mxu0 0.0
        %3585 = vmatpush1.xpose.msra.mxu0 0.0
        %3586 = vmatprep.subr.mxu0 0.0
        %3587 = vmatpush1.xpose.msra.mxu0 0.0
        %3588 = vmatprep.subr.mxu0 0.0
        %3589 = vmatpush1.xpose.msra.mxu0 0.0
        %3590 = vmatprep.subr.mxu0 0.0
        %3591 = vmatpush1.xpose.msra.mxu0 0.0
        %3592 = vmatprep.subr.mxu0 0.0
        %3593 = vmatpush1.xpose.msra.mxu0 0.0
        %3594 = vmatprep.subr.mxu0 0.0
        %3595 = vmatpush1.xpose.msra.mxu0 0.0
        %3596 = vmatprep.subr.mxu0 0.0
        %3597 = vmatpush1.xpose.msra.mxu0 0.0
        %3598 = vmatprep.subr.mxu0 0.0
        %3599 = vmatpush1.xpose.msra.mxu0 0.0
        %3600 = vmatprep.subr.mxu0 0.0
        %3601 = vmatpush1.xpose.msra.mxu0 0.0
        %3602 = vmatprep.mubr.f32.mxu0 0.0
        %3603 = vmatmul.mubr.f32.gmra.mrb[0].mxu0 %v3534
        %v3604 = vpop.f32.mrb[0].mxu0
        %v3605 = vadd.f32 0.0, %v3604
        %v3606 = vpop.f32.mrb[0].mxu0
        %3607 = vdwg.mxu0
        %v3608 = vmul.f32 %v3605, 0.5
        %v3609 = vsel %vm1548, %v3608, -inf
        %3610 = vmax.xlane.f32.xlu0 %v3609
        %v3611 = vpop.xlane.xlu0 %3610
        %v3612 = vsub.f32 %v3608, %v3611
        %v3613 = vmul.f32 %v3612, 1.442695
        %v3614 = vpow.pop %v3613
        %v3615 = vsel %vm1548, %v3614, 0.0
        %3616 = vadd.xlane.f32.xlu0 %v3615
        %v3617 = vpop.xlane.xlu0 %3616
        %v3618 = vrcp.pop %v3617
        %v3619 = vmul.f32 %v3614, %v3618
        %3620 = vrot.lane.b32.xlu0 %v2937, 112
        %v3621 = vpop.permute.xlu0 %3620
        %v3623 = vsel %vm1470, %v3619, 0
        %v3625 = vsel %vm1563, %v3621, 0
        %3627 = vmatprep.subr.mxu0 0.0
        %3628 = vmatpush1.msra.mxu0 %v3625
        %3629 = vmatprep.subr.mxu0 0.0
        %3630 = vmatpush1.msra.mxu0 0.0
        %3631 = vmatprep.subr.mxu0 0.0
        %3632 = vmatpush1.msra.mxu0 0.0
        %3633 = vmatprep.subr.mxu0 0.0
        %3634 = vmatpush1.msra.mxu0 0.0
        %3635 = vmatprep.subr.mxu0 0.0
        %3636 = vmatpush1.msra.mxu0 0.0
        %3637 = vmatprep.subr.mxu0 0.0
        %3638 = vmatpush1.msra.mxu0 0.0
        %3639 = vmatprep.subr.mxu0 0.0
        %3640 = vmatpush1.msra.mxu0 0.0
        %3641 = vmatprep.subr.mxu0 0.0
        %3642 = vmatpush1.msra.mxu0 0.0
        %3643 = vmatprep.subr.mxu0 0.0
        %3644 = vmatpush1.msra.mxu0 0.0
        %3645 = vmatprep.subr.mxu0 0.0
        %3646 = vmatpush1.msra.mxu0 0.0
        %3647 = vmatprep.subr.mxu0 0.0
        %3648 = vmatpush1.msra.mxu0 0.0
        %3649 = vmatprep.subr.mxu0 0.0
        %3650 = vmatpush1.msra.mxu0 0.0
        %3651 = vmatprep.subr.mxu0 0.0
        %3652 = vmatpush1.msra.mxu0 0.0
        %3653 = vmatprep.subr.mxu0 0.0
        %3654 = vmatpush1.msra.mxu0 0.0
        %3655 = vmatprep.subr.mxu0 0.0
        %3656 = vmatpush1.msra.mxu0 0.0
        %3657 = vmatprep.subr.mxu0 0.0
        %3658 = vmatpush1.msra.mxu0 0.0
        %3659 = vmatprep.subr.mxu0 0.0
        %3660 = vmatpush1.msra.mxu0 0.0
        %3661 = vmatprep.subr.mxu0 0.0
        %3662 = vmatpush1.msra.mxu0 0.0
        %3663 = vmatprep.subr.mxu0 0.0
        %3664 = vmatpush1.msra.mxu0 0.0
        %3665 = vmatprep.subr.mxu0 0.0
        %3666 = vmatpush1.msra.mxu0 0.0
        %3667 = vmatprep.subr.mxu0 0.0
        %3668 = vmatpush1.msra.mxu0 0.0
        %3669 = vmatprep.subr.mxu0 0.0
        %3670 = vmatpush1.msra.mxu0 0.0
        %3671 = vmatprep.subr.mxu0 0.0
        %3672 = vmatpush1.msra.mxu0 0.0
        %3673 = vmatprep.subr.mxu0 0.0
        %3674 = vmatpush1.msra.mxu0 0.0
        %3675 = vmatprep.subr.mxu0 0.0
        %3676 = vmatpush1.msra.mxu0 0.0
        %3677 = vmatprep.subr.mxu0 0.0
        %3678 = vmatpush1.msra.mxu0 0.0
        %3679 = vmatprep.subr.mxu0 0.0
        %3680 = vmatpush1.msra.mxu0 0.0
        %3681 = vmatprep.subr.mxu0 0.0
        %3682 = vmatpush1.msra.mxu0 0.0
        %3683 = vmatprep.subr.mxu0 0.0
        %3684 = vmatpush1.msra.mxu0 0.0
        %3685 = vmatprep.subr.mxu0 0.0
        %3686 = vmatpush1.msra.mxu0 0.0
        %3687 = vmatprep.subr.mxu0 0.0
        %3688 = vmatpush1.msra.mxu0 0.0
        %3689 = vmatprep.subr.mxu0 0.0
        %3690 = vmatpush1.msra.mxu0 0.0
        %3691 = vmatprep.mubr.f32.mxu0 0.0
        %3692 = vmatmul.mubr.f32.gmra.mrb[0].mxu0 %v3623
        %v3693 = vpop.f32.mrb[0].mxu0
        %v3694 = vadd.f32 0.0, %v3693
        %v3695 = vpop.f32.mrb[0].mxu0
        %3696 = vdwg.mxu0
        %3698 = vrot.lane.b32.xlu0 %v3694, 16
        %v3699 = vpop.permute.xlu0 %3698
        %3701 = vst.msk [vmem:[#allocation5 + $0x4] sm:$0xf] %vm2328, %v3699
        %3702 = vrot.lane.b32.xlu0 %v2849, 108
        %v3703 = vpop.permute.xlu0 %3702
        %3704 = vrot.lane.b32.xlu0 %v2850, 108
        %v3705 = vpop.permute.xlu0 %3704
        %v3706 = vsel %vm1470, %v3703, 0
        %v3708 = vsel %vm1470, %v3705, 0
        %3710 = vmatprep.subr.mxu0 0.0
        %3711 = vmatpush1.xpose.msra.mxu0 %v3708
        %3712 = vmatprep.subr.mxu0 0.0
        %3713 = vmatpush1.xpose.msra.mxu0 0.0
        %3714 = vmatprep.subr.mxu0 0.0
        %3715 = vmatpush1.xpose.msra.mxu0 0.0
        %3716 = vmatprep.subr.mxu0 0.0
        %3717 = vmatpush1.xpose.msra.mxu0 0.0
        %3718 = vmatprep.subr.mxu0 0.0
        %3719 = vmatpush1.xpose.msra.mxu0 0.0
        %3720 = vmatprep.subr.mxu0 0.0
        %3721 = vmatpush1.xpose.msra.mxu0 0.0
        %3722 = vmatprep.subr.mxu0 0.0
        %3723 = vmatpush1.xpose.msra.mxu0 0.0
        %3724 = vmatprep.subr.mxu0 0.0
        %3725 = vmatpush1.xpose.msra.mxu0 0.0
        %3726 = vmatprep.subr.mxu0 0.0
        %3727 = vmatpush1.xpose.msra.mxu0 0.0
        %3728 = vmatprep.subr.mxu0 0.0
        %3729 = vmatpush1.xpose.msra.mxu0 0.0
        %3730 = vmatprep.subr.mxu0 0.0
        %3731 = vmatpush1.xpose.msra.mxu0 0.0
        %3732 = vmatprep.subr.mxu0 0.0
        %3733 = vmatpush1.xpose.msra.mxu0 0.0
        %3734 = vmatprep.subr.mxu0 0.0
        %3735 = vmatpush1.xpose.msra.mxu0 0.0
        %3736 = vmatprep.subr.mxu0 0.0
        %3737 = vmatpush1.xpose.msra.mxu0 0.0
        %3738 = vmatprep.subr.mxu0 0.0
        %3739 = vmatpush1.xpose.msra.mxu0 0.0
        %3740 = vmatprep.subr.mxu0 0.0
        %3741 = vmatpush1.xpose.msra.mxu0 0.0
        %3742 = vmatprep.subr.mxu0 0.0
        %3743 = vmatpush1.xpose.msra.mxu0 0.0
        %3744 = vmatprep.subr.mxu0 0.0
        %3745 = vmatpush1.xpose.msra.mxu0 0.0
        %3746 = vmatprep.subr.mxu0 0.0
        %3747 = vmatpush1.xpose.msra.mxu0 0.0
        %3748 = vmatprep.subr.mxu0 0.0
        %3749 = vmatpush1.xpose.msra.mxu0 0.0
        %3750 = vmatprep.subr.mxu0 0.0
        %3751 = vmatpush1.xpose.msra.mxu0 0.0
        %3752 = vmatprep.subr.mxu0 0.0
        %3753 = vmatpush1.xpose.msra.mxu0 0.0
        %3754 = vmatprep.subr.mxu0 0.0
        %3755 = vmatpush1.xpose.msra.mxu0 0.0
        %3756 = vmatprep.subr.mxu0 0.0
        %3757 = vmatpush1.xpose.msra.mxu0 0.0
        %3758 = vmatprep.subr.mxu0 0.0
        %3759 = vmatpush1.xpose.msra.mxu0 0.0
        %3760 = vmatprep.subr.mxu0 0.0
        %3761 = vmatpush1.xpose.msra.mxu0 0.0
        %3762 = vmatprep.subr.mxu0 0.0
        %3763 = vmatpush1.xpose.msra.mxu0 0.0
        %3764 = vmatprep.subr.mxu0 0.0
        %3765 = vmatpush1.xpose.msra.mxu0 0.0
        %3766 = vmatprep.subr.mxu0 0.0
        %3767 = vmatpush1.xpose.msra.mxu0 0.0
        %3768 = vmatprep.subr.mxu0 0.0
        %3769 = vmatpush1.xpose.msra.mxu0 0.0
        %3770 = vmatprep.subr.mxu0 0.0
        %3771 = vmatpush1.xpose.msra.mxu0 0.0
        %3772 = vmatprep.subr.mxu0 0.0
        %3773 = vmatpush1.xpose.msra.mxu0 0.0
        %3774 = vmatprep.mubr.f32.mxu0 0.0
        %3775 = vmatmul.mubr.f32.gmra.mrb[0].mxu0 %v3706
        %v3776 = vpop.f32.mrb[0].mxu0
        %v3777 = vadd.f32 0.0, %v3776
        %v3778 = vpop.f32.mrb[0].mxu0
        %3779 = vdwg.mxu0
        %v3780 = vmul.f32 %v3777, 0.5
        %v3781 = vsel %vm1548, %v3780, -inf
        %3782 = vmax.xlane.f32.xlu0 %v3781
        %v3783 = vpop.xlane.xlu0 %3782
        %v3784 = vsub.f32 %v3780, %v3783
        %v3785 = vmul.f32 %v3784, 1.442695
        %v3786 = vpow.pop %v3785
        %v3787 = vsel %vm1548, %v3786, 0.0
        %3788 = vadd.xlane.f32.xlu0 %v3787
        %v3789 = vpop.xlane.xlu0 %3788
        %v3790 = vrcp.pop %v3789
        %v3791 = vmul.f32 %v3786, %v3790
        %3792 = vrot.lane.b32.xlu0 %v2937, 108
        %v3793 = vpop.permute.xlu0 %3792
        %v3795 = vsel %vm1470, %v3791, 0
        %v3797 = vsel %vm1563, %v3793, 0
        %3799 = vmatprep.subr.mxu0 0.0
        %3800 = vmatpush1.msra.mxu0 %v3797
        %3801 = vmatprep.subr.mxu0 0.0
        %3802 = vmatpush1.msra.mxu0 0.0
        %3803 = vmatprep.subr.mxu0 0.0
        %3804 = vmatpush1.msra.mxu0 0.0
        %3805 = vmatprep.subr.mxu0 0.0
        %3806 = vmatpush1.msra.mxu0 0.0
        %3807 = vmatprep.subr.mxu0 0.0
        %3808 = vmatpush1.msra.mxu0 0.0
        %3809 = vmatprep.subr.mxu0 0.0
        %3810 = vmatpush1.msra.mxu0 0.0
        %3811 = vmatprep.subr.mxu0 0.0
        %3812 = vmatpush1.msra.mxu0 0.0
        %3813 = vmatprep.subr.mxu0 0.0
        %3814 = vmatpush1.msra.mxu0 0.0
        %3815 = vmatprep.subr.mxu0 0.0
        %3816 = vmatpush1.msra.mxu0 0.0
        %3817 = vmatprep.subr.mxu0 0.0
        %3818 = vmatpush1.msra.mxu0 0.0
        %3819 = vmatprep.subr.mxu0 0.0
        %3820 = vmatpush1.msra.mxu0 0.0
        %3821 = vmatprep.subr.mxu0 0.0
        %3822 = vmatpush1.msra.mxu0 0.0
        %3823 = vmatprep.subr.mxu0 0.0
        %3824 = vmatpush1.msra.mxu0 0.0
        %3825 = vmatprep.subr.mxu0 0.0
        %3826 = vmatpush1.msra.mxu0 0.0
        %3827 = vmatprep.subr.mxu0 0.0
        %3828 = vmatpush1.msra.mxu0 0.0
        %3829 = vmatprep.subr.mxu0 0.0
        %3830 = vmatpush1.msra.mxu0 0.0
        %3831 = vmatprep.subr.mxu0 0.0
        %3832 = vmatpush1.msra.mxu0 0.0
        %3833 = vmatprep.subr.mxu0 0.0
        %3834 = vmatpush1.msra.mxu0 0.0
        %3835 = vmatprep.subr.mxu0 0.0
        %3836 = vmatpush1.msra.mxu0 0.0
        %3837 = vmatprep.subr.mxu0 0.0
        %3838 = vmatpush1.msra.mxu0 0.0
        %3839 = vmatprep.subr.mxu0 0.0
        %3840 = vmatpush1.msra.mxu0 0.0
        %3841 = vmatprep.subr.mxu0 0.0
        %3842 = vmatpush1.msra.mxu0 0.0
        %3843 = vmatprep.subr.mxu0 0.0
        %3844 = vmatpush1.msra.mxu0 0.0
        %3845 = vmatprep.subr.mxu0 0.0
        %3846 = vmatpush1.msra.mxu0 0.0
        %3847 = vmatprep.subr.mxu0 0.0
        %3848 = vmatpush1.msra.mxu0 0.0
        %3849 = vmatprep.subr.mxu0 0.0
        %3850 = vmatpush1.msra.mxu0 0.0
        %3851 = vmatprep.subr.mxu0 0.0
        %3852 = vmatpush1.msra.mxu0 0.0
        %3853 = vmatprep.subr.mxu0 0.0
        %3854 = vmatpush1.msra.mxu0 0.0
        %3855 = vmatprep.subr.mxu0 0.0
        %3856 = vmatpush1.msra.mxu0 0.0
        %3857 = vmatprep.subr.mxu0 0.0
        %3858 = vmatpush1.msra.mxu0 0.0
        %3859 = vmatprep.subr.mxu0 0.0
        %3860 = vmatpush1.msra.mxu0 0.0
        %3861 = vmatprep.subr.mxu0 0.0
        %3862 = vmatpush1.msra.mxu0 0.0
        %3863 = vmatprep.mubr.f32.mxu0 0.0
        %3864 = vmatmul.mubr.f32.gmra.mrb[0].mxu0 %v3795
        %v3865 = vpop.f32.mrb[0].mxu0
        %v3866 = vadd.f32 0.0, %v3865
        %v3867 = vpop.f32.mrb[0].mxu0
        %3868 = vdwg.mxu0
        %3870 = vrot.lane.b32.xlu0 %v3866, 20
        %v3871 = vpop.permute.xlu0 %3870
        %3873 = vst.msk [vmem:[#allocation5 + $0x4] sm:$0xf] %vm2501, %v3871
        %3874 = vrot.lane.b32.xlu0 %v2849, 104
        %v3875 = vpop.permute.xlu0 %3874
        %3876 = vrot.lane.b32.xlu0 %v2850, 104
        %v3877 = vpop.permute.xlu0 %3876
        %v3878 = vsel %vm1470, %v3875, 0
        %v3880 = vsel %vm1470, %v3877, 0
        %3882 = vmatprep.subr.mxu0 0.0
        %3883 = vmatpush1.xpose.msra.mxu0 %v3880
        %3884 = vmatprep.subr.mxu0 0.0
        %3885 = vmatpush1.xpose.msra.mxu0 0.0
        %3886 = vmatprep.subr.mxu0 0.0
        %3887 = vmatpush1.xpose.msra.mxu0 0.0
        %3888 = vmatprep.subr.mxu0 0.0
        %3889 = vmatpush1.xpose.msra.mxu0 0.0
        %3890 = vmatprep.subr.mxu0 0.0
        %3891 = vmatpush1.xpose.msra.mxu0 0.0
        %3892 = vmatprep.subr.mxu0 0.0
        %3893 = vmatpush1.xpose.msra.mxu0 0.0
        %3894 = vmatprep.subr.mxu0 0.0
        %3895 = vmatpush1.xpose.msra.mxu0 0.0
        %3896 = vmatprep.subr.mxu0 0.0
        %3897 = vmatpush1.xpose.msra.mxu0 0.0
        %3898 = vmatprep.subr.mxu0 0.0
        %3899 = vmatpush1.xpose.msra.mxu0 0.0
        %3900 = vmatprep.subr.mxu0 0.0
        %3901 = vmatpush1.xpose.msra.mxu0 0.0
        %3902 = vmatprep.subr.mxu0 0.0
        %3903 = vmatpush1.xpose.msra.mxu0 0.0
        %3904 = vmatprep.subr.mxu0 0.0
        %3905 = vmatpush1.xpose.msra.mxu0 0.0
        %3906 = vmatprep.subr.mxu0 0.0
        %3907 = vmatpush1.xpose.msra.mxu0 0.0
        %3908 = vmatprep.subr.mxu0 0.0
        %3909 = vmatpush1.xpose.msra.mxu0 0.0
        %3910 = vmatprep.subr.mxu0 0.0
        %3911 = vmatpush1.xpose.msra.mxu0 0.0
        %3912 = vmatprep.subr.mxu0 0.0
        %3913 = vmatpush1.xpose.msra.mxu0 0.0
        %3914 = vmatprep.subr.mxu0 0.0
        %3915 = vmatpush1.xpose.msra.mxu0 0.0
        %3916 = vmatprep.subr.mxu0 0.0
        %3917 = vmatpush1.xpose.msra.mxu0 0.0
        %3918 = vmatprep.subr.mxu0 0.0
        %3919 = vmatpush1.xpose.msra.mxu0 0.0
        %3920 = vmatprep.subr.mxu0 0.0
        %3921 = vmatpush1.xpose.msra.mxu0 0.0
        %3922 = vmatprep.subr.mxu0 0.0
        %3923 = vmatpush1.xpose.msra.mxu0 0.0
        %3924 = vmatprep.subr.mxu0 0.0
        %3925 = vmatpush1.xpose.msra.mxu0 0.0
        %3926 = vmatprep.subr.mxu0 0.0
        %3927 = vmatpush1.xpose.msra.mxu0 0.0
        %3928 = vmatprep.subr.mxu0 0.0
        %3929 = vmatpush1.xpose.msra.mxu0 0.0
        %3930 = vmatprep.subr.mxu0 0.0
        %3931 = vmatpush1.xpose.msra.mxu0 0.0
        %3932 = vmatprep.subr.mxu0 0.0
        %3933 = vmatpush1.xpose.msra.mxu0 0.0
        %3934 = vmatprep.subr.mxu0 0.0
        %3935 = vmatpush1.xpose.msra.mxu0 0.0
        %3936 = vmatprep.subr.mxu0 0.0
        %3937 = vmatpush1.xpose.msra.mxu0 0.0
        %3938 = vmatprep.subr.mxu0 0.0
        %3939 = vmatpush1.xpose.msra.mxu0 0.0
        %3940 = vmatprep.subr.mxu0 0.0
        %3941 = vmatpush1.xpose.msra.mxu0 0.0
        %3942 = vmatprep.subr.mxu0 0.0
        %3943 = vmatpush1.xpose.msra.mxu0 0.0
        %3944 = vmatprep.subr.mxu0 0.0
        %3945 = vmatpush1.xpose.msra.mxu0 0.0
        %3946 = vmatprep.mubr.f32.mxu0 0.0
        %3947 = vmatmul.mubr.f32.gmra.mrb[0].mxu0 %v3878
        %v3948 = vpop.f32.mrb[0].mxu0
        %v3949 = vadd.f32 0.0, %v3948
        %v3950 = vpop.f32.mrb[0].mxu0
        %3951 = vdwg.mxu0
        %v3952 = vmul.f32 %v3949, 0.5
        %v3953 = vsel %vm1548, %v3952, -inf
        %3954 = vmax.xlane.f32.xlu0 %v3953
        %v3955 = vpop.xlane.xlu0 %3954
        %v3956 = vsub.f32 %v3952, %v3955
        %v3957 = vmul.f32 %v3956, 1.442695
        %v3958 = vpow.pop %v3957
        %v3959 = vsel %vm1548, %v3958, 0.0
        %3960 = vadd.xlane.f32.xlu0 %v3959
        %v3961 = vpop.xlane.xlu0 %3960
        %v3962 = vrcp.pop %v3961
        %v3963 = vmul.f32 %v3958, %v3962
        %3964 = vrot.lane.b32.xlu0 %v2937, 104
        %v3965 = vpop.permute.xlu0 %3964
        %v3967 = vsel %vm1470, %v3963, 0
        %v3969 = vsel %vm1563, %v3965, 0
        %3971 = vmatprep.subr.mxu0 0.0
        %3972 = vmatpush1.msra.mxu0 %v3969
        %3973 = vmatprep.subr.mxu0 0.0
        %3974 = vmatpush1.msra.mxu0 0.0
        %3975 = vmatprep.subr.mxu0 0.0
        %3976 = vmatpush1.msra.mxu0 0.0
        %3977 = vmatprep.subr.mxu0 0.0
        %3978 = vmatpush1.msra.mxu0 0.0
        %3979 = vmatprep.subr.mxu0 0.0
        %3980 = vmatpush1.msra.mxu0 0.0
        %3981 = vmatprep.subr.mxu0 0.0
        %3982 = vmatpush1.msra.mxu0 0.0
        %3983 = vmatprep.subr.mxu0 0.0
        %3984 = vmatpush1.msra.mxu0 0.0
        %3985 = vmatprep.subr.mxu0 0.0
        %3986 = vmatpush1.msra.mxu0 0.0
        %3987 = vmatprep.subr.mxu0 0.0
        %3988 = vmatpush1.msra.mxu0 0.0
        %3989 = vmatprep.subr.mxu0 0.0
        %3990 = vmatpush1.msra.mxu0 0.0
        %3991 = vmatprep.subr.mxu0 0.0
        %3992 = vmatpush1.msra.mxu0 0.0
        %3993 = vmatprep.subr.mxu0 0.0
        %3994 = vmatpush1.msra.mxu0 0.0
        %3995 = vmatprep.subr.mxu0 0.0
        %3996 = vmatpush1.msra.mxu0 0.0
        %3997 = vmatprep.subr.mxu0 0.0
        %3998 = vmatpush1.msra.mxu0 0.0
        %3999 = vmatprep.subr.mxu0 0.0
        %4000 = vmatpush1.msra.mxu0 0.0
        %4001 = vmatprep.subr.mxu0 0.0
        %4002 = vmatpush1.msra.mxu0 0.0
        %4003 = vmatprep.subr.mxu0 0.0
        %4004 = vmatpush1.msra.mxu0 0.0
        %4005 = vmatprep.subr.mxu0 0.0
        %4006 = vmatpush1.msra.mxu0 0.0
        %4007 = vmatprep.subr.mxu0 0.0
        %4008 = vmatpush1.msra.mxu0 0.0
        %4009 = vmatprep.subr.mxu0 0.0
        %4010 = vmatpush1.msra.mxu0 0.0
        %4011 = vmatprep.subr.mxu0 0.0
        %4012 = vmatpush1.msra.mxu0 0.0
        %4013 = vmatprep.subr.mxu0 0.0
        %4014 = vmatpush1.msra.mxu0 0.0
        %4015 = vmatprep.subr.mxu0 0.0
        %4016 = vmatpush1.msra.mxu0 0.0
        %4017 = vmatprep.subr.mxu0 0.0
        %4018 = vmatpush1.msra.mxu0 0.0
        %4019 = vmatprep.subr.mxu0 0.0
        %4020 = vmatpush1.msra.mxu0 0.0
        %4021 = vmatprep.subr.mxu0 0.0
        %4022 = vmatpush1.msra.mxu0 0.0
        %4023 = vmatprep.subr.mxu0 0.0
        %4024 = vmatpush1.msra.mxu0 0.0
        %4025 = vmatprep.subr.mxu0 0.0
        %4026 = vmatpush1.msra.mxu0 0.0
        %4027 = vmatprep.subr.mxu0 0.0
        %4028 = vmatpush1.msra.mxu0 0.0
        %4029 = vmatprep.subr.mxu0 0.0
        %4030 = vmatpush1.msra.mxu0 0.0
        %4031 = vmatprep.subr.mxu0 0.0
        %4032 = vmatpush1.msra.mxu0 0.0
        %4033 = vmatprep.subr.mxu0 0.0
        %4034 = vmatpush1.msra.mxu0 0.0
        %4035 = vmatprep.mubr.f32.mxu0 0.0
        %4036 = vmatmul.mubr.f32.gmra.mrb[0].mxu0 %v3967
        %v4037 = vpop.f32.mrb[0].mxu0
        %v4038 = vadd.f32 0.0, %v4037
        %v4039 = vpop.f32.mrb[0].mxu0
        %4040 = vdwg.mxu0
        %4042 = vrot.lane.b32.xlu0 %v4038, 24
        %v4043 = vpop.permute.xlu0 %4042
        %4045 = vst.msk [vmem:[#allocation5 + $0x4] sm:$0xf] %vm2674, %v4043
        %4046 = vrot.lane.b32.xlu0 %v2849, 100
        %v4047 = vpop.permute.xlu0 %4046
        %4048 = vrot.lane.b32.xlu0 %v2850, 100
        %v4049 = vpop.permute.xlu0 %4048
        %v4050 = vsel %vm1470, %v4047, 0
        %v4052 = vsel %vm1470, %v4049, 0
        %4054 = vmatprep.subr.mxu0 0.0
        %4055 = vmatpush1.xpose.msra.mxu0 %v4052
        %4056 = vmatprep.subr.mxu0 0.0
        %4057 = vmatpush1.xpose.msra.mxu0 0.0
        %4058 = vmatprep.subr.mxu0 0.0
        %4059 = vmatpush1.xpose.msra.mxu0 0.0
        %4060 = vmatprep.subr.mxu0 0.0
        %4061 = vmatpush1.xpose.msra.mxu0 0.0
        %4062 = vmatprep.subr.mxu0 0.0
        %4063 = vmatpush1.xpose.msra.mxu0 0.0
        %4064 = vmatprep.subr.mxu0 0.0
        %4065 = vmatpush1.xpose.msra.mxu0 0.0
        %4066 = vmatprep.subr.mxu0 0.0
        %4067 = vmatpush1.xpose.msra.mxu0 0.0
        %4068 = vmatprep.subr.mxu0 0.0
        %4069 = vmatpush1.xpose.msra.mxu0 0.0
        %4070 = vmatprep.subr.mxu0 0.0
        %4071 = vmatpush1.xpose.msra.mxu0 0.0
        %4072 = vmatprep.subr.mxu0 0.0
        %4073 = vmatpush1.xpose.msra.mxu0 0.0
        %4074 = vmatprep.subr.mxu0 0.0
        %4075 = vmatpush1.xpose.msra.mxu0 0.0
        %4076 = vmatprep.subr.mxu0 0.0
        %4077 = vmatpush1.xpose.msra.mxu0 0.0
        %4078 = vmatprep.subr.mxu0 0.0
        %4079 = vmatpush1.xpose.msra.mxu0 0.0
        %4080 = vmatprep.subr.mxu0 0.0
        %4081 = vmatpush1.xpose.msra.mxu0 0.0
        %4082 = vmatprep.subr.mxu0 0.0
        %4083 = vmatpush1.xpose.msra.mxu0 0.0
        %4084 = vmatprep.subr.mxu0 0.0
        %4085 = vmatpush1.xpose.msra.mxu0 0.0
        %4086 = vmatprep.subr.mxu0 0.0
        %4087 = vmatpush1.xpose.msra.mxu0 0.0
        %4088 = vmatprep.subr.mxu0 0.0
        %4089 = vmatpush1.xpose.msra.mxu0 0.0
        %4090 = vmatprep.subr.mxu0 0.0
        %4091 = vmatpush1.xpose.msra.mxu0 0.0
        %4092 = vmatprep.subr.mxu0 0.0
        %4093 = vmatpush1.xpose.msra.mxu0 0.0
        %4094 = vmatprep.subr.mxu0 0.0
        %4095 = vmatpush1.xpose.msra.mxu0 0.0
        %4096 = vmatprep.subr.mxu0 0.0
        %4097 = vmatpush1.xpose.msra.mxu0 0.0
        %4098 = vmatprep.subr.mxu0 0.0
        %4099 = vmatpush1.xpose.msra.mxu0 0.0
        %4100 = vmatprep.subr.mxu0 0.0
        %4101 = vmatpush1.xpose.msra.mxu0 0.0
        %4102 = vmatprep.subr.mxu0 0.0
        %4103 = vmatpush1.xpose.msra.mxu0 0.0
        %4104 = vmatprep.subr.mxu0 0.0
        %4105 = vmatpush1.xpose.msra.mxu0 0.0
        %4106 = vmatprep.subr.mxu0 0.0
        %4107 = vmatpush1.xpose.msra.mxu0 0.0
        %4108 = vmatprep.subr.mxu0 0.0
        %4109 = vmatpush1.xpose.msra.mxu0 0.0
        %4110 = vmatprep.subr.mxu0 0.0
        %4111 = vmatpush1.xpose.msra.mxu0 0.0
        %4112 = vmatprep.subr.mxu0 0.0
        %4113 = vmatpush1.xpose.msra.mxu0 0.0
        %4114 = vmatprep.subr.mxu0 0.0
        %4115 = vmatpush1.xpose.msra.mxu0 0.0
        %4116 = vmatprep.subr.mxu0 0.0
        %4117 = vmatpush1.xpose.msra.mxu0 0.0
        %4118 = vmatprep.mubr.f32.mxu0 0.0
        %4119 = vmatmul.mubr.f32.gmra.mrb[0].mxu0 %v4050
        %v4120 = vpop.f32.mrb[0].mxu0
        %v4121 = vadd.f32 0.0, %v4120
        %v4122 = vpop.f32.mrb[0].mxu0
        %4123 = vdwg.mxu0
        %v4124 = vmul.f32 %v4121, 0.5
        %v4125 = vsel %vm1548, %v4124, -inf
        %4126 = vmax.xlane.f32.xlu0 %v4125
        %v4127 = vpop.xlane.xlu0 %4126
        %v4128 = vsub.f32 %v4124, %v4127
        %v4129 = vmul.f32 %v4128, 1.442695
        %v4130 = vpow.pop %v4129
        %v4131 = vsel %vm1548, %v4130, 0.0
        %4132 = vadd.xlane.f32.xlu0 %v4131
        %v4133 = vpop.xlane.xlu0 %4132
        %v4134 = vrcp.pop %v4133
        %v4135 = vmul.f32 %v4130, %v4134
        %4136 = vrot.lane.b32.xlu0 %v2937, 100
        %v4137 = vpop.permute.xlu0 %4136
        %v4139 = vsel %vm1470, %v4135, 0
        %v4141 = vsel %vm1563, %v4137, 0
        %4143 = vmatprep.subr.mxu0 0.0
        %4144 = vmatpush1.msra.mxu0 %v4141
        %4145 = vmatprep.subr.mxu0 0.0
        %4146 = vmatpush1.msra.mxu0 0.0
        %4147 = vmatprep.subr.mxu0 0.0
        %4148 = vmatpush1.msra.mxu0 0.0
        %4149 = vmatprep.subr.mxu0 0.0
        %4150 = vmatpush1.msra.mxu0 0.0
        %4151 = vmatprep.subr.mxu0 0.0
        %4152 = vmatpush1.msra.mxu0 0.0
        %4153 = vmatprep.subr.mxu0 0.0
        %4154 = vmatpush1.msra.mxu0 0.0
        %4155 = vmatprep.subr.mxu0 0.0
        %4156 = vmatpush1.msra.mxu0 0.0
        %4157 = vmatprep.subr.mxu0 0.0
        %4158 = vmatpush1.msra.mxu0 0.0
        %4159 = vmatprep.subr.mxu0 0.0
        %4160 = vmatpush1.msra.mxu0 0.0
        %4161 = vmatprep.subr.mxu0 0.0
        %4162 = vmatpush1.msra.mxu0 0.0
        %4163 = vmatprep.subr.mxu0 0.0
        %4164 = vmatpush1.msra.mxu0 0.0
        %4165 = vmatprep.subr.mxu0 0.0
        %4166 = vmatpush1.msra.mxu0 0.0
        %4167 = vmatprep.subr.mxu0 0.0
        %4168 = vmatpush1.msra.mxu0 0.0
        %4169 = vmatprep.subr.mxu0 0.0
        %4170 = vmatpush1.msra.mxu0 0.0
        %4171 = vmatprep.subr.mxu0 0.0
        %4172 = vmatpush1.msra.mxu0 0.0
        %4173 = vmatprep.subr.mxu0 0.0
        %4174 = vmatpush1.msra.mxu0 0.0
        %4175 = vmatprep.subr.mxu0 0.0
        %4176 = vmatpush1.msra.mxu0 0.0
        %4177 = vmatprep.subr.mxu0 0.0
        %4178 = vmatpush1.msra.mxu0 0.0
        %4179 = vmatprep.subr.mxu0 0.0
        %4180 = vmatpush1.msra.mxu0 0.0
        %4181 = vmatprep.subr.mxu0 0.0
        %4182 = vmatpush1.msra.mxu0 0.0
        %4183 = vmatprep.subr.mxu0 0.0
        %4184 = vmatpush1.msra.mxu0 0.0
        %4185 = vmatprep.subr.mxu0 0.0
        %4186 = vmatpush1.msra.mxu0 0.0
        %4187 = vmatprep.subr.mxu0 0.0
        %4188 = vmatpush1.msra.mxu0 0.0
        %4189 = vmatprep.subr.mxu0 0.0
        %4190 = vmatpush1.msra.mxu0 0.0
        %4191 = vmatprep.subr.mxu0 0.0
        %4192 = vmatpush1.msra.mxu0 0.0
        %4193 = vmatprep.subr.mxu0 0.0
        %4194 = vmatpush1.msra.mxu0 0.0
        %4195 = vmatprep.subr.mxu0 0.0
        %4196 = vmatpush1.msra.mxu0 0.0
        %4197 = vmatprep.subr.mxu0 0.0
        %4198 = vmatpush1.msra.mxu0 0.0
        %4199 = vmatprep.subr.mxu0 0.0
        %4200 = vmatpush1.msra.mxu0 0.0
        %4201 = vmatprep.subr.mxu0 0.0
        %4202 = vmatpush1.msra.mxu0 0.0
        %4203 = vmatprep.subr.mxu0 0.0
        %4204 = vmatpush1.msra.mxu0 0.0
        %4205 = vmatprep.subr.mxu0 0.0
        %4206 = vmatpush1.msra.mxu0 0.0
        %4207 = vmatprep.mubr.f32.mxu0 0.0
        %4208 = vmatmul.mubr.f32.gmra.mrb[0].mxu0 %v4139
        %v4209 = vpop.f32.mrb[0].mxu0
        %v4210 = vadd.f32 0.0, %v4209
        %v4211 = vpop.f32.mrb[0].mxu0
        %4212 = vdwg.mxu0
        %4214 = vrot.lane.b32.xlu0 %v4210, 28
        %v4215 = vpop.permute.xlu0 %4214
        %4217 = vst.msk [vmem:[#allocation5 + $0x4] sm:$0xf] %vm2847, %v4215
        %v4218 = vld [vmem:[#allocation5] sm:$0xff]
        %v4219 = vld [vmem:[%s929] sm:$0xff]
        %v4220 = vld [vmem:[%s929 + $0x8] sm:$0xff]
        %v4221 = vld [vmem:[%s929 + $0x10] sm:$0xff]
        %v4222 = vld [vmem:[%s929 + $0x18] sm:$0xff]
        %v4223 = vld [vmem:[%s937] sm:$0x1]
        %v4225 = vlaneseq
        %v4226 = vshrl.u32 %v4225, 7
        %v4227 = vsub.s32 0, %v4226
        %v4228 = vrot.slane %v4223, %v4227
        %v4231 = vsel %vm1234, %v4218, 0
        %4233 = vmatprep.subr.mxu0 0.0
        %4234 = vmatpush1.msra.mxu0 %v4219
        %4235 = vmatprep.subr.mxu0 0.0
        %4236 = vmatpush1.msra.mxu0 %v4220
        %4237 = vmatprep.subr.mxu0 0.0
        %4238 = vmatpush1.msra.mxu0 %v4221
        %4239 = vmatprep.subr.mxu0 0.0
        %4240 = vmatpush1.msra.mxu0 %v4222
        %4241 = vmatprep.subr.mxu0 0.0
        %4242 = vmatpush1.msra.mxu0 0.0
        %4243 = vmatprep.subr.mxu0 0.0
        %4244 = vmatpush1.msra.mxu0 0.0
        %4245 = vmatprep.subr.mxu0 0.0
        %4246 = vmatpush1.msra.mxu0 0.0
        %4247 = vmatprep.subr.mxu0 0.0
        %4248 = vmatpush1.msra.mxu0 0.0
        %4249 = vmatprep.subr.mxu0 0.0
        %4250 = vmatpush1.msra.mxu0 0.0
        %4251 = vmatprep.subr.mxu0 0.0
        %4252 = vmatpush1.msra.mxu0 0.0
        %4253 = vmatprep.subr.mxu0 0.0
        %4254 = vmatpush1.msra.mxu0 0.0
        %4255 = vmatprep.subr.mxu0 0.0
        %4256 = vmatpush1.msra.mxu0 0.0
        %4257 = vmatprep.subr.mxu0 0.0
        %4258 = vmatpush1.msra.mxu0 0.0
        %4259 = vmatprep.subr.mxu0 0.0
        %4260 = vmatpush1.msra.mxu0 0.0
        %4261 = vmatprep.subr.mxu0 0.0
        %4262 = vmatpush1.msra.mxu0 0.0
        %4263 = vmatprep.subr.mxu0 0.0
        %4264 = vmatpush1.msra.mxu0 0.0
        %4265 = vmatprep.subr.mxu0 0.0
        %4266 = vmatpush1.msra.mxu0 0.0
        %4267 = vmatprep.subr.mxu0 0.0
        %4268 = vmatpush1.msra.mxu0 0.0
        %4269 = vmatprep.subr.mxu0 0.0
        %4270 = vmatpush1.msra.mxu0 0.0
        %4271 = vmatprep.subr.mxu0 0.0
        %4272 = vmatpush1.msra.mxu0 0.0
        %4273 = vmatprep.subr.mxu0 0.0
        %4274 = vmatpush1.msra.mxu0 0.0
        %4275 = vmatprep.subr.mxu0 0.0
        %4276 = vmatpush1.msra.mxu0 0.0
        %4277 = vmatprep.subr.mxu0 0.0
        %4278 = vmatpush1.msra.mxu0 0.0
        %4279 = vmatprep.subr.mxu0 0.0
        %4280 = vmatpush1.msra.mxu0 0.0
        %4281 = vmatprep.subr.mxu0 0.0
        %4282 = vmatpush1.msra.mxu0 0.0
        %4283 = vmatprep.subr.mxu0 0.0
        %4284 = vmatpush1.msra.mxu0 0.0
        %4285 = vmatprep.subr.mxu0 0.0
        %4286 = vmatpush1.msra.mxu0 0.0
        %4287 = vmatprep.subr.mxu0 0.0
        %4288 = vmatpush1.msra.mxu0 0.0
        %4289 = vmatprep.subr.mxu0 0.0
        %4290 = vmatpush1.msra.mxu0 0.0
        %4291 = vmatprep.subr.mxu0 0.0
        %4292 = vmatpush1.msra.mxu0 0.0
        %4293 = vmatprep.subr.mxu0 0.0
        %4294 = vmatpush1.msra.mxu0 0.0
        %4295 = vmatprep.subr.mxu0 0.0
        %4296 = vmatpush1.msra.mxu0 0.0
        %4297 = vmatprep.mubr.f32.mxu0 0.0
        %4298 = vmatmul.mubr.f32.gmra.mrb[0].mxu0 %v4231
        %v4299 = vpop.f32.mrb[0].mxu0
        %v4300 = vadd.f32 %v4228, %v4299
        %v4301 = vpop.f32.mrb[0].mxu0
        %4302 = vdwg.mxu0
        %v4303 = vadd.f32 %v1222, %v4300
        %v4304 = vld [vmem:[%s1088] sm:$0x1]
        %v4305 = vld [vmem:[%s1091] sm:$0x1]
        %v4306 = vsel %vm1234, %v4303, 0.0
        %4307 = vadd.xlane.f32.xlu0 %v4306
        %v4308 = vpop.xlane.xlu0 %4307
        %v4309 = vrcp.pop 32.0
        %v4310 = vmul.f32 %v4308, %v4309
        %v4311 = vsub.f32 %v4303, %v4310
        %v4312 = vmul.f32 %v4311, %v4311
        %v4313 = vsel %vm1234, %v4312, 0.0
        %4314 = vadd.xlane.f32.xlu0 %v4313
        %v4315 = vpop.xlane.xlu0 %4314
        %v4316 = vmul.f32 %v4315, %v4309
        %v4317 = vadd.f32 %v4316, 1e-05
        %v4318 = vrsqrt.pop %v4317
        %v4319 = vmul.f32 %v4311, %v4318
        %v4321 = vlaneseq
        %v4322 = vshrl.u32 %v4321, 7
        %v4323 = vsub.s32 0, %v4322
        %v4324 = vrot.slane %v4304, %v4323
        %v4326 = vmul.f32 %v4319, %v4324
        %v4328 = vlaneseq
        %v4329 = vshrl.u32 %v4328, 7
        %v4330 = vsub.s32 0, %v4329
        %v4331 = vrot.slane %v4305, %v4330
        %v4333 = vadd.f32 %v4326, %v4331
        %v4334 = vld [vmem:[%s946] sm:$0xff]
        %v4335 = vld [vmem:[%s946 + $0x8] sm:$0xff]
        %v4336 = vld [vmem:[%s946 + $0x10] sm:$0xff]
        %v4337 = vld [vmem:[%s946 + $0x18] sm:$0xff]
        %v4338 = vld [vmem:[%s1094] sm:$0x1]
        %v4340 = vlaneseq
        %v4341 = vshrl.u32 %v4340, 7
        %v4342 = vsub.s32 0, %v4341
        %v4343 = vrot.slane %v4338, %v4342
        %v4346 = vsel %vm1234, %v4333, 0
        %4348 = vmatprep.subr.mxu0 0.0
        %4349 = vmatpush1.msra.mxu0 %v4334
        %4350 = vmatprep.subr.mxu0 0.0
        %4351 = vmatpush1.msra.mxu0 %v4335
        %4352 = vmatprep.subr.mxu0 0.0
        %4353 = vmatpush1.msra.mxu0 %v4336
        %4354 = vmatprep.subr.mxu0 0.0
        %4355 = vmatpush1.msra.mxu0 %v4337
        %4356 = vmatprep.subr.mxu0 0.0
        %4357 = vmatpush1.msra.mxu0 0.0
        %4358 = vmatprep.subr.mxu0 0.0
        %4359 = vmatpush1.msra.mxu0 0.0
        %4360 = vmatprep.subr.mxu0 0.0
        %4361 = vmatpush1.msra.mxu0 0.0
        %4362 = vmatprep.subr.mxu0 0.0
        %4363 = vmatpush1.msra.mxu0 0.0
        %4364 = vmatprep.subr.mxu0 0.0
        %4365 = vmatpush1.msra.mxu0 0.0
        %4366 = vmatprep.subr.mxu0 0.0
        %4367 = vmatpush1.msra.mxu0 0.0
        %4368 = vmatprep.subr.mxu0 0.0
        %4369 = vmatpush1.msra.mxu0 0.0
        %4370 = vmatprep.subr.mxu0 0.0
        %4371 = vmatpush1.msra.mxu0 0.0
        %4372 = vmatprep.subr.mxu0 0.0
        %4373 = vmatpush1.msra.mxu0 0.0
        %4374 = vmatprep.subr.mxu0 0.0
        %4375 = vmatpush1.msra.mxu0 0.0
        %4376 = vmatprep.subr.mxu0 0.0
        %4377 = vmatpush1.msra.mxu0 0.0
        %4378 = vmatprep.subr.mxu0 0.0
        %4379 = vmatpush1.msra.mxu0 0.0
        %4380 = vmatprep.subr.mxu0 0.0
        %4381 = vmatpush1.msra.mxu0 0.0
        %4382 = vmatprep.subr.mxu0 0.0
        %4383 = vmatpush1.msra.mxu0 0.0
        %4384 = vmatprep.subr.mxu0 0.0
        %4385 = vmatpush1.msra.mxu0 0.0
        %4386 = vmatprep.subr.mxu0 0.0
        %4387 = vmatpush1.msra.mxu0 0.0
        %4388 = vmatprep.subr.mxu0 0.0
        %4389 = vmatpush1.msra.mxu0 0.0
        %4390 = vmatprep.subr.mxu0 0.0
        %4391 = vmatpush1.msra.mxu0 0.0
        %4392 = vmatprep.subr.mxu0 0.0
        %4393 = vmatpush1.msra.mxu0 0.0
        %4394 = vmatprep.subr.mxu0 0.0
        %4395 = vmatpush1.msra.mxu0 0.0
        %4396 = vmatprep.subr.mxu0 0.0
        %4397 = vmatpush1.msra.mxu0 0.0
        %4398 = vmatprep.subr.mxu0 0.0
        %4399 = vmatpush1.msra.mxu0 0.0
        %4400 = vmatprep.subr.mxu0 0.0
        %4401 = vmatpush1.msra.mxu0 0.0
        %4402 = vmatprep.subr.mxu0 0.0
        %4403 = vmatpush1.msra.mxu0 0.0
        %4404 = vmatprep.subr.mxu0 0.0
        %4405 = vmatpush1.msra.mxu0 0.0
        %4406 = vmatprep.subr.mxu0 0.0
        %4407 = vmatpush1.msra.mxu0 0.0
        %4408 = vmatprep.subr.mxu0 0.0
        %4409 = vmatpush1.msra.mxu0 0.0
        %4410 = vmatprep.subr.mxu0 0.0
        %4411 = vmatpush1.msra.mxu0 0.0
        %4412 = vmatprep.mubr.f32.mxu0 0.0
        %4413 = vmatmul.mubr.f32.gmra.mrb[0].mxu0 %v4346
        %v4414 = vpop.f32.mrb[0].mxu0
        %v4415 = vadd.f32 %v4343, %v4414
        %v4416 = vpop.f32.mrb[0].mxu0
        %4417 = vdwg.mxu0
        %v4418 = vmul.f32 %v4415, 0.5
        %v4419 = vmul.f32 %v4415, 0.70710677
        %v4420 = vand.u32 2147483647, %v4419
        %v4421 = vmul.f32 %v4420, 0.3275911
        %v4422 = vadd.f32 %v4421, 1.0
        %v4423 = vrcp.pop %v4422
        %v4424 = vmul.f32 1.0, %v4423
        %v4425 = vmul.f32 %v4424, 1.0614054
        %v4426 = vadd.f32 %v4425, -1.4531521
        %v4427 = vmul.f32 %v4426, %v4424
        %v4428 = vadd.f32 %v4427, 1.4214138
        %v4429 = vmul.f32 %v4428, %v4424
        %v4430 = vadd.f32 %v4429, -0.28449672
        %v4431 = vmul.f32 %v4430, %v4424
        %v4432 = vadd.f32 %v4431, 0.2548296
        %v4433 = vmul.f32 %v4432, %v4424
        %v4434 = vsub.f32 0.0, %v4420
        %v4435 = vmul.f32 %v4434, %v4420
        %v4436 = vmul.f32 %v4435, 1.442695
        %v4437 = vpow.pop %v4436
        %v4438 = vmul.f32 %v4433, %v4437
        %v4439 = vsub.f32 1.0, %v4438
        %vm4440 = vcmp.ge.f32.partialorder %v4419, 0.0
        %v4441 = vsub.f32 0.0, %v4439
        %v4442 = vsel %vm4440, %v4439, %v4441
        %v4443 = vadd.f32 %v4442, 1.0
        %v4444 = vmul.f32 %v4418, %v4443
        %v4445 = vld [vmem:[%s1099] sm:$0xff]
        %v4446 = vld [vmem:[%s1099 + $0x8] sm:$0xff]
        %v4447 = vld [vmem:[%s1099 + $0x10] sm:$0xff]
        %v4448 = vld [vmem:[%s1099 + $0x18] sm:$0xff]
        %v4449 = vld [vmem:[%s1099 + $0x20] sm:$0xff]
        %v4450 = vld [vmem:[%s1099 + $0x28] sm:$0xff]
        %v4451 = vld [vmem:[%s1099 + $0x30] sm:$0xff]
        %v4452 = vld [vmem:[%s1099 + $0x38] sm:$0xff]
        %v4453 = vld [vmem:[%s1099 + $0x40] sm:$0xff]
        %v4454 = vld [vmem:[%s1099 + $0x48] sm:$0xff]
        %v4455 = vld [vmem:[%s1099 + $0x50] sm:$0xff]
        %v4456 = vld [vmem:[%s1099 + $0x58] sm:$0xff]
        %v4457 = vld [vmem:[%s1099 + $0x60] sm:$0xff]
        %v4458 = vld [vmem:[%s1099 + $0x68] sm:$0xff]
        %v4459 = vld [vmem:[%s1099 + $0x70] sm:$0xff]
        %v4460 = vld [vmem:[%s1099 + $0x78] sm:$0xff]
        %v4461 = vld [vmem:[%s1102] sm:$0x1]
        %v4463 = vlaneseq
        %v4464 = vshrl.u32 %v4463, 7
        %v4465 = vsub.s32 0, %v4464
        %v4466 = vrot.slane %v4461, %v4465
        %4468 = vmatprep.subr.mxu0 0.0
        %4469 = vmatpush1.msra.mxu0 %v4445
        %4470 = vmatprep.subr.mxu0 0.0
        %4471 = vmatpush1.msra.mxu0 %v4446
        %4472 = vmatprep.subr.mxu0 0.0
        %4473 = vmatpush1.msra.mxu0 %v4447
        %4474 = vmatprep.subr.mxu0 0.0
        %4475 = vmatpush1.msra.mxu0 %v4448
        %4476 = vmatprep.subr.mxu0 0.0
        %4477 = vmatpush1.msra.mxu0 %v4449
        %4478 = vmatprep.subr.mxu0 0.0
        %4479 = vmatpush1.msra.mxu0 %v4450
        %4480 = vmatprep.subr.mxu0 0.0
        %4481 = vmatpush1.msra.mxu0 %v4451
        %4482 = vmatprep.subr.mxu0 0.0
        %4483 = vmatpush1.msra.mxu0 %v4452
        %4484 = vmatprep.subr.mxu0 0.0
        %4485 = vmatpush1.msra.mxu0 %v4453
        %4486 = vmatprep.subr.mxu0 0.0
        %4487 = vmatpush1.msra.mxu0 %v4454
        %4488 = vmatprep.subr.mxu0 0.0
        %4489 = vmatpush1.msra.mxu0 %v4455
        %4490 = vmatprep.subr.mxu0 0.0
        %4491 = vmatpush1.msra.mxu0 %v4456
        %4492 = vmatprep.subr.mxu0 0.0
        %4493 = vmatpush1.msra.mxu0 %v4457
        %4494 = vmatprep.subr.mxu0 0.0
        %4495 = vmatpush1.msra.mxu0 %v4458
        %4496 = vmatprep.subr.mxu0 0.0
        %4497 = vmatpush1.msra.mxu0 %v4459
        %4498 = vmatprep.subr.mxu0 0.0
        %4499 = vmatpush1.msra.mxu0 %v4460
        %4500 = vmatprep.subr.mxu0 0.0
        %4501 = vmatpush1.msra.mxu0 0.0
        %4502 = vmatprep.subr.mxu0 0.0
        %4503 = vmatpush1.msra.mxu0 0.0
        %4504 = vmatprep.subr.mxu0 0.0
        %4505 = vmatpush1.msra.mxu0 0.0
        %4506 = vmatprep.subr.mxu0 0.0
        %4507 = vmatpush1.msra.mxu0 0.0
        %4508 = vmatprep.subr.mxu0 0.0
        %4509 = vmatpush1.msra.mxu0 0.0
        %4510 = vmatprep.subr.mxu0 0.0
        %4511 = vmatpush1.msra.mxu0 0.0
        %4512 = vmatprep.subr.mxu0 0.0
        %4513 = vmatpush1.msra.mxu0 0.0
        %4514 = vmatprep.subr.mxu0 0.0
        %4515 = vmatpush1.msra.mxu0 0.0
        %4516 = vmatprep.subr.mxu0 0.0
        %4517 = vmatpush1.msra.mxu0 0.0
        %4518 = vmatprep.subr.mxu0 0.0
        %4519 = vmatpush1.msra.mxu0 0.0
        %4520 = vmatprep.subr.mxu0 0.0
        %4521 = vmatpush1.msra.mxu0 0.0
        %4522 = vmatprep.subr.mxu0 0.0
        %4523 = vmatpush1.msra.mxu0 0.0
        %4524 = vmatprep.subr.mxu0 0.0
        %4525 = vmatpush1.msra.mxu0 0.0
        %4526 = vmatprep.subr.mxu0 0.0
        %4527 = vmatpush1.msra.mxu0 0.0
        %4528 = vmatprep.subr.mxu0 0.0
        %4529 = vmatpush1.msra.mxu0 0.0
        %4530 = vmatprep.subr.mxu0 0.0
        %4531 = vmatpush1.msra.mxu0 0.0
        %4532 = vmatprep.mubr.f32.mxu0 0.0
        %4533 = vmatmul.mubr.f32.gmra.mrb[0].mxu0 %v4444
        %v4534 = vpop.f32.mrb[0].mxu0
        %v4535 = vadd.f32 %v4466, %v4534
        %v4536 = vpop.f32.mrb[0].mxu0
        %4537 = vdwg.mxu0
        %v4538 = vadd.f32 %v4333, %v4535
        %v4539 = vld [vmem:[%s1105] sm:$0x1]
        %v4540 = vld [vmem:[%s1108] sm:$0x1]
        %v4541 = vsel %vm1234, %v4538, 0.0
        %4542 = vadd.xlane.f32.xlu0 %v4541
        %v4543 = vpop.xlane.xlu0 %4542
        %v4544 = vmul.f32 %v4543, %v4309
        %v4545 = vsub.f32 %v4538, %v4544
        %v4546 = vmul.f32 %v4545, %v4545
        %v4547 = vsel %vm1234, %v4546, 0.0
        %4548 = vadd.xlane.f32.xlu0 %v4547
        %v4549 = vpop.xlane.xlu0 %4548
        %v4550 = vmul.f32 %v4549, %v4309
        %v4551 = vadd.f32 %v4550, 1e-05
        %v4552 = vrsqrt.pop %v4551
        %v4553 = vmul.f32 %v4545, %v4552
        %v4555 = vlaneseq
        %v4556 = vshrl.u32 %v4555, 7
        %v4557 = vsub.s32 0, %v4556
        %v4558 = vrot.slane %v4539, %v4557
        %v4560 = vmul.f32 %v4553, %v4558
        %v4562 = vlaneseq
        %v4563 = vshrl.u32 %v4562, 7
        %v4564 = vsub.s32 0, %v4563
        %v4565 = vrot.slane %v4540, %v4564
        %v4567 = vadd.f32 %v4560, %v4565
        %4568 = vst.msk [vmem:[#allocation4] sm:$0xff] %vm1234, %v4567
        %p4569 = scmp.eq.s32.totalorder %s44, 1
        // Predicated region
        $region149: #{tpu_custom_call.1} parent=119 // pred_check
          %p4570 = pneg %p4569
        $region150: #{tpu_custom_call.1} parent=119 // pred_check_branch
          %4572 = sbr.rel (%p4570) target = $region152
        $region151: #{tpu_custom_call.1} parent=119 // pred_region
          %v4573 = vld [vmem:[%s19] sm:$0x1]
          %v4574 = vld [vmem:[%s20] sm:$0x1]
          %v4575 = vsel %vm1234, %v4567, 0.0
          %4576 = vadd.xlane.f32.xlu0 %v4575
          %v4577 = vpop.xlane.xlu0 %4576
          %v4578 = vmul.f32 %v4577, %v4309
          %v4579 = vsub.f32 %v4567, %v4578
          %v4580 = vmul.f32 %v4579, %v4579
          %v4581 = vsel %vm1234, %v4580, 0.0
          %4582 = vadd.xlane.f32.xlu0 %v4581
          %v4583 = vpop.xlane.xlu0 %4582
          %v4584 = vmul.f32 %v4583, %v4309
          %v4585 = vadd.f32 %v4584, 1e-05
          %v4586 = vrsqrt.pop %v4585
          %v4587 = vmul.f32 %v4579, %v4586
          %v4589 = vlaneseq
          %v4590 = vshrl.u32 %v4589, 7
          %v4591 = vsub.s32 0, %v4590
          %v4592 = vrot.slane %v4573, %v4591
          %v4594 = vmul.f32 %v4587, %v4592
          %v4596 = vlaneseq
          %v4597 = vshrl.u32 %v4596, 7
          %v4598 = vsub.s32 0, %v4597
          %v4599 = vrot.slane %v4574, %v4598
          %v4601 = vadd.f32 %v4594, %v4599
          %v4602 = vld [vmem:[%s21] sm:$0xff]
          %v4603 = vld [vmem:[%s21 + $0x8] sm:$0xff]
          %v4604 = vld [vmem:[%s21 + $0x10] sm:$0xff]
          %v4605 = vld [vmem:[%s21 + $0x18] sm:$0xff]
          %v4606 = vld [vmem:[%s22] sm:$0x1]
          %v4608 = vlaneseq
          %v4609 = vshrl.u32 %v4608, 7
          %v4610 = vsub.s32 0, %v4609
          %v4611 = vrot.slane %v4606, %v4610
          %v4614 = vsel %vm1234, %v4601, 0
          %4616 = vmatprep.subr.mxu0 0.0
          %4617 = vmatpush1.msra.mxu0 %v4602
          %4618 = vmatprep.subr.mxu0 0.0
          %4619 = vmatpush1.msra.mxu0 %v4603
          %4620 = vmatprep.subr.mxu0 0.0
          %4621 = vmatpush1.msra.mxu0 %v4604
          %4622 = vmatprep.subr.mxu0 0.0
          %4623 = vmatpush1.msra.mxu0 %v4605
          %4624 = vmatprep.subr.mxu0 0.0
          %4625 = vmatpush1.msra.mxu0 0.0
          %4626 = vmatprep.subr.mxu0 0.0
          %4627 = vmatpush1.msra.mxu0 0.0
          %4628 = vmatprep.subr.mxu0 0.0
          %4629 = vmatpush1.msra.mxu0 0.0
          %4630 = vmatprep.subr.mxu0 0.0
          %4631 = vmatpush1.msra.mxu0 0.0
          %4632 = vmatprep.subr.mxu0 0.0
          %4633 = vmatpush1.msra.mxu0 0.0
          %4634 = vmatprep.subr.mxu0 0.0
          %4635 = vmatpush1.msra.mxu0 0.0
          %4636 = vmatprep.subr.mxu0 0.0
          %4637 = vmatpush1.msra.mxu0 0.0
          %4638 = vmatprep.subr.mxu0 0.0
          %4639 = vmatpush1.msra.mxu0 0.0
          %4640 = vmatprep.subr.mxu0 0.0
          %4641 = vmatpush1.msra.mxu0 0.0
          %4642 = vmatprep.subr.mxu0 0.0
          %4643 = vmatpush1.msra.mxu0 0.0
          %4644 = vmatprep.subr.mxu0 0.0
          %4645 = vmatpush1.msra.mxu0 0.0
          %4646 = vmatprep.subr.mxu0 0.0
          %4647 = vmatpush1.msra.mxu0 0.0
          %4648 = vmatprep.subr.mxu0 0.0
          %4649 = vmatpush1.msra.mxu0 0.0
          %4650 = vmatprep.subr.mxu0 0.0
          %4651 = vmatpush1.msra.mxu0 0.0
          %4652 = vmatprep.subr.mxu0 0.0
          %4653 = vmatpush1.msra.mxu0 0.0
          %4654 = vmatprep.subr.mxu0 0.0
          %4655 = vmatpush1.msra.mxu0 0.0
          %4656 = vmatprep.subr.mxu0 0.0
          %4657 = vmatpush1.msra.mxu0 0.0
          %4658 = vmatprep.subr.mxu0 0.0
          %4659 = vmatpush1.msra.mxu0 0.0
          %4660 = vmatprep.subr.mxu0 0.0
          %4661 = vmatpush1.msra.mxu0 0.0
          %4662 = vmatprep.subr.mxu0 0.0
          %4663 = vmatpush1.msra.mxu0 0.0
          %4664 = vmatprep.subr.mxu0 0.0
          %4665 = vmatpush1.msra.mxu0 0.0
          %4666 = vmatprep.subr.mxu0 0.0
          %4667 = vmatpush1.msra.mxu0 0.0
          %4668 = vmatprep.subr.mxu0 0.0
          %4669 = vmatpush1.msra.mxu0 0.0
          %4670 = vmatprep.subr.mxu0 0.0
          %4671 = vmatpush1.msra.mxu0 0.0
          %4672 = vmatprep.subr.mxu0 0.0
          %4673 = vmatpush1.msra.mxu0 0.0
          %4674 = vmatprep.subr.mxu0 0.0
          %4675 = vmatpush1.msra.mxu0 0.0
          %4676 = vmatprep.subr.mxu0 0.0
          %4677 = vmatpush1.msra.mxu0 0.0
          %4678 = vmatprep.subr.mxu0 0.0
          %4679 = vmatpush1.msra.mxu0 0.0
          %4680 = vmatprep.mubr.f32.mxu0 0.0
          %4681 = vmatmul.mubr.f32.gmra.mrb[0].mxu0 %v4614
          %v4682 = vpop.f32.mrb[0].mxu0
          %v4683 = vadd.f32 %v4611, %v4682
          %v4684 = vpop.f32.mrb[0].mxu0
          %4685 = vdwg.mxu0
          %v4686 = vmul.f32 %v4683, 0.5
          %v4687 = vmul.f32 %v4683, 0.70710677
          %v4688 = vand.u32 2147483647, %v4687
          %v4689 = vmul.f32 %v4688, 0.3275911
          %v4690 = vadd.f32 %v4689, 1.0
          %v4691 = vrcp.pop %v4690
          %v4692 = vmul.f32 1.0, %v4691
          %v4693 = vmul.f32 %v4692, 1.0614054
          %v4694 = vadd.f32 %v4693, -1.4531521
          %v4695 = vmul.f32 %v4694, %v4692
          %v4696 = vadd.f32 %v4695, 1.4214138
          %v4697 = vmul.f32 %v4696, %v4692
          %v4698 = vadd.f32 %v4697, -0.28449672
          %v4699 = vmul.f32 %v4698, %v4692
          %v4700 = vadd.f32 %v4699, 0.2548296
          %v4701 = vmul.f32 %v4700, %v4692
          %v4702 = vsub.f32 0.0, %v4688
          %v4703 = vmul.f32 %v4702, %v4688
          %v4704 = vmul.f32 %v4703, 1.442695
          %v4705 = vpow.pop %v4704
          %v4706 = vmul.f32 %v4701, %v4705
          %v4707 = vsub.f32 1.0, %v4706
          %vm4708 = vcmp.ge.f32.partialorder %v4687, 0.0
          %v4709 = vsub.f32 0.0, %v4707
          %v4710 = vsel %vm4708, %v4707, %v4709
          %v4711 = vadd.f32 %v4710, 1.0
          %v4712 = vmul.f32 %v4686, %v4711
          %v4713 = vld [vmem:[%s23] sm:$0xff]
          %v4714 = vld [vmem:[%s23 + $0x8] sm:$0xff]
          %v4715 = vld [vmem:[%s23 + $0x10] sm:$0xff]
          %v4716 = vld [vmem:[%s23 + $0x18] sm:$0xff]
          %v4717 = vld [vmem:[%s23 + $0x20] sm:$0xff]
          %v4718 = vld [vmem:[%s23 + $0x28] sm:$0xff]
          %v4719 = vld [vmem:[%s23 + $0x30] sm:$0xff]
          %v4720 = vld [vmem:[%s23 + $0x38] sm:$0xff]
          %v4721 = vld [vmem:[%s23 + $0x40] sm:$0xff]
          %v4722 = vld [vmem:[%s23 + $0x48] sm:$0xff]
          %v4723 = vld [vmem:[%s23 + $0x50] sm:$0xff]
          %v4724 = vld [vmem:[%s23 + $0x58] sm:$0xff]
          %v4725 = vld [vmem:[%s23 + $0x60] sm:$0xff]
          %v4726 = vld [vmem:[%s23 + $0x68] sm:$0xff]
          %v4727 = vld [vmem:[%s23 + $0x70] sm:$0xff]
          %v4728 = vld [vmem:[%s23 + $0x78] sm:$0xff]
          %v4729 = vld [vmem:[%s24] sm:$0x1]
          %v4731 = vlaneseq
          %v4732 = vshrl.u32 %v4731, 7
          %v4733 = vsub.s32 0, %v4732
          %v4734 = vrot.slane %v4729, %v4733
          %4736 = vmatprep.subr.mxu0 0.0
          %4737 = vmatpush1.msra.mxu0 %v4713
          %4738 = vmatprep.subr.mxu0 0.0
          %4739 = vmatpush1.msra.mxu0 %v4714
          %4740 = vmatprep.subr.mxu0 0.0
          %4741 = vmatpush1.msra.mxu0 %v4715
          %4742 = vmatprep.subr.mxu0 0.0
          %4743 = vmatpush1.msra.mxu0 %v4716
          %4744 = vmatprep.subr.mxu0 0.0
          %4745 = vmatpush1.msra.mxu0 %v4717
          %4746 = vmatprep.subr.mxu0 0.0
          %4747 = vmatpush1.msra.mxu0 %v4718
          %4748 = vmatprep.subr.mxu0 0.0
          %4749 = vmatpush1.msra.mxu0 %v4719
          %4750 = vmatprep.subr.mxu0 0.0
          %4751 = vmatpush1.msra.mxu0 %v4720
          %4752 = vmatprep.subr.mxu0 0.0
          %4753 = vmatpush1.msra.mxu0 %v4721
          %4754 = vmatprep.subr.mxu0 0.0
          %4755 = vmatpush1.msra.mxu0 %v4722
          %4756 = vmatprep.subr.mxu0 0.0
          %4757 = vmatpush1.msra.mxu0 %v4723
          %4758 = vmatprep.subr.mxu0 0.0
          %4759 = vmatpush1.msra.mxu0 %v4724
          %4760 = vmatprep.subr.mxu0 0.0
          %4761 = vmatpush1.msra.mxu0 %v4725
          %4762 = vmatprep.subr.mxu0 0.0
          %4763 = vmatpush1.msra.mxu0 %v4726
          %4764 = vmatprep.subr.mxu0 0.0
          %4765 = vmatpush1.msra.mxu0 %v4727
          %4766 = vmatprep.subr.mxu0 0.0
          %4767 = vmatpush1.msra.mxu0 %v4728
          %4768 = vmatprep.subr.mxu0 0.0
          %4769 = vmatpush1.msra.mxu0 0.0
          %4770 = vmatprep.subr.mxu0 0.0
          %4771 = vmatpush1.msra.mxu0 0.0
          %4772 = vmatprep.subr.mxu0 0.0
          %4773 = vmatpush1.msra.mxu0 0.0
          %4774 = vmatprep.subr.mxu0 0.0
          %4775 = vmatpush1.msra.mxu0 0.0
          %4776 = vmatprep.subr.mxu0 0.0
          %4777 = vmatpush1.msra.mxu0 0.0
          %4778 = vmatprep.subr.mxu0 0.0
          %4779 = vmatpush1.msra.mxu0 0.0
          %4780 = vmatprep.subr.mxu0 0.0
          %4781 = vmatpush1.msra.mxu0 0.0
          %4782 = vmatprep.subr.mxu0 0.0
          %4783 = vmatpush1.msra.mxu0 0.0
          %4784 = vmatprep.subr.mxu0 0.0
          %4785 = vmatpush1.msra.mxu0 0.0
          %4786 = vmatprep.subr.mxu0 0.0
          %4787 = vmatpush1.msra.mxu0 0.0
          %4788 = vmatprep.subr.mxu0 0.0
          %4789 = vmatpush1.msra.mxu0 0.0
          %4790 = vmatprep.subr.mxu0 0.0
          %4791 = vmatpush1.msra.mxu0 0.0
          %4792 = vmatprep.subr.mxu0 0.0
          %4793 = vmatpush1.msra.mxu0 0.0
          %4794 = vmatprep.subr.mxu0 0.0
          %4795 = vmatpush1.msra.mxu0 0.0
          %4796 = vmatprep.subr.mxu0 0.0
          %4797 = vmatpush1.msra.mxu0 0.0
          %4798 = vmatprep.subr.mxu0 0.0
          %4799 = vmatpush1.msra.mxu0 0.0
          %4800 = vmatprep.mubr.f32.mxu0 0.0
          %4801 = vmatmul.mubr.f32.gmra.mrb[0].mxu0 %v4712
          %v4802 = vpop.f32.mrb[0].mxu0
          %v4803 = vadd.f32 %v4734, %v4802
          %v4804 = vpop.f32.mrb[0].mxu0
          %4805 = vdwg.mxu0
          %v4806 = vld [vmem:[#allocation3] sm:$0xff]
          %4808 = vset.pattern.permute.xlu0 0
          %4809 = vperm.xlu0 %4808, %v4806
          %v4810 = vpop.permute.xlu0 %4809
          %v4812 = vmul.f32 %v4803, %v4810
          %v4813 = vld [vmem:[#allocation2] sm:$0xff]
          %4815 = vset.pattern.permute.xlu0 0
          %4816 = vperm.xlu0 %4815, %v4813
          %v4817 = vpop.permute.xlu0 %4816
          %v4819 = vadd.f32 %v4812, %v4817
          %4820 = vst [vmem:[#allocation15] sm:$0xff] %v4819
        $region152: #{tpu_custom_call.1} parent=119 // pred_fallthru
          _
        // Predicated region
        $region153: #{tpu_custom_call.1} parent=119 // pred_check
          %p4821 = pneg %p679
        $region154: #{tpu_custom_call.1} parent=119 // pred_check_branch
          %4823 = sbr.rel (%p4821) target = $region156
        $region155: #{tpu_custom_call.1} parent=119 // pred_region
          %s4825 = ssub.s32 128, 128
          %4826 = vsyncadd [#allocation8], %s4825
          %s4827 = smul.addr %s43, 128
          %s4828 = scalar_lea.hbm %s25, %s4827
          %s4830 = sshll.u32 [#allocation15], 4
          %s4831 = int_to_ptr.vmem [resolvable:$true] %s4830
          %4833 = dma.vmem_to_hbm [thread:$0]  %s4831, 128, %s4828, [#allocation8]
        $region156: #{tpu_custom_call.1} parent=119 // pred_fallthru
          _
        // Predicated region
        $region157: #{tpu_custom_call.1} parent=119 // pred_check
          %p4834 = pneg %p679
        $region158: #{tpu_custom_call.1} parent=119 // pred_check_branch
          %4836 = sbr.rel (%p4834) target = $region160
        $region159: #{tpu_custom_call.1} parent=119 // pred_region
          %4837 = dma.done [#allocation8], 128
        $region160: #{tpu_custom_call.1} parent=119 // pred_fallthru
          _
      $region120: #{tpu_custom_call.1} parent=5 // pred_fallthru
        _
      %p4838 = scmp.le.s32.totalorder 2, %s34
      // Predicated region
      $region161: #{tpu_custom_call.1} parent=5 // pred_check
        %p4839 = pneg %p4838
      $region162: #{tpu_custom_call.1} parent=5 // pred_check_branch
        %4841 = sbr.rel (%p4839) target = $region164
      $region163: #{tpu_custom_call.1} parent=5 // pred_region
        %s4842 = ssub.s32 %s34, 2
      $region164: #{tpu_custom_call.1} parent=5 // pred_fallthru
        _
    $region6: #{tpu_custom_call.1} parent=1 // loop_footer
      %s38 = sadd.s32 1, %s34
    $region7: #{tpu_custom_call.1} parent=1 // loop_footer_branch
      %33 = sbr.rel target = $region3
    $region8: #{tpu_custom_call.1} parent=1 // loop_exit
      _
    %4843 = vsyncpa [#allocation7], 1
    %s4844 = scalar_lea.sflag [#allocation7], 1
    %4845 = vsyncpa %s4844, 1
    %4846 = vsyncpa [#allocation10], 1
    %4847 = vsyncpa [#allocation8], 1
    %s4848 = scalar_lea.sflag [#allocation8], 1
    %4849 = vsyncpa %s4848, 1

</llo_original>
